<compile_context>
chip_gen: v7x
topology: tpu7x:2x2x1
jax: 0.10.0
libtpu: 0.0.40
codegen_flags: <defaults>
</compile_context>

<pallas_src>
import jax
import jax.numpy as jnp
from jax.experimental import pallas as pl
from jax.experimental.pallas import tpu as pltpu


# ---------------------------------------------------------------------------
# Kernels
# ---------------------------------------------------------------------------

def _layer1_kernel(x_ref, w1_ref, b1_ref, h1_ref, acc_ref):
    """h1[:, j-block] = relu(x @ W1[j-block] + b1[j-block]), K-tiled."""
    k = pl.program_id(1)

    @pl.when(k == 0)
    def _():
        acc_ref[...] = jnp.zeros_like(acc_ref)

    acc_ref[...] += jnp.dot(x_ref[...], w1_ref[...],
                            preferred_element_type=jnp.float32)

    @pl.when(k == pl.num_programs(1) - 1)
    def _():
        # TODO(synk): h1 is rounded to bf16 between layers (matches the JAX
        # reference below); keep it f32 if bit-fidelity to the f32 PyTorch
        # model is required -- activation traffic is negligible at B=2.
        h1 = jnp.maximum(acc_ref[...] + b1_ref[...], 0.0)
        h1_ref[...] = h1.astype(h1_ref.dtype)


def _layer23_gate_kernel(h1_ref, w2_ref, b2_ref, w3_ref, b3_ref, c_ref,
                         o_ref, acc_ref):
    """Layer 2 K-tiled accumulation; layer 3 + (1 + y) * center epilogue."""
    k = pl.program_id(0)

    @pl.when(k == 0)
    def _():
        acc_ref[...] = jnp.zeros_like(acc_ref)

    acc_ref[...] += jnp.dot(h1_ref[...], w2_ref[...],
                            preferred_element_type=jnp.float32)

    @pl.when(k == pl.num_programs(0) - 1)
    def _():
        h2 = jnp.maximum(acc_ref[...] + b2_ref[...], 0.0).astype(jnp.bfloat16)
        y = jnp.dot(h2, w3_ref[...], preferred_element_type=jnp.float32)
        y = y + b3_ref[...]
        o_ref[...] = ((1.0 + y) * c_ref[...]).astype(o_ref.dtype)


# ---------------------------------------------------------------------------
# Tuning helpers
# ---------------------------------------------------------------------------

def _vmem_capacity_bytes():
    try:
        info = pltpu.get_tpu_info()
        cap = getattr(info, "vmem_capacity_bytes", None)
        if cap:
            return int(cap)
    except Exception:
        pass
    return 128 * 1024 * 1024


def _vmem_limit_bytes():
    # Leave headroom for compiler-internal scratch: ~48 MiB on v7x (64 MiB
    # physical per TC), ~96 MiB on v5e/v6e (128 MiB physical).
    return min((_vmem_capacity_bytes() * 3) // 4, 112 * 1024 * 1024)


def _fit_tile(dim, want):
    """Largest tile <= want that divides dim (multiple of 128 when possible)."""
    t = max(128, min(dim, want))
    while t > 128 and dim % t != 0:
        t //= 2
    if dim % t != 0:
        t = dim
    return t


# ---------------------------------------------------------------------------
# Wrapper
# ---------------------------------------------------------------------------

def shift2rg_generator_forward(conv_feature, kmean_center, prepared,
                               *, tk=None, tk2=None):
    """conv_feature: (B, D_IN) f32, kmean_center: (B, D_OUT) f32.

    `prepared` comes from prepare_params(): column-block-major bf16 W1
    (contiguous streamed tiles), pre-transposed bf16 W2/W3, 2-D f32 biases,
    layer-3 width padded to a multiple of 128.
    """
    w1b, b1, w2t, b2, w3t, b3 = prepared
    B, d_in = conv_feature.shape
    n_jb, d_in_w, tj = w1b.shape
    d_hid = n_jb * tj
    d_out = kmean_center.shape[1]
    d_out_pad = w3t.shape[1]
    assert d_in_w == d_in

    # Weight tiles target ~16 MiB bf16 so per-step DMA >> the ~0.35us step cost.
    if tk is None:
        tk = _fit_tile(d_in, max(512, (8 * 1024 * 1024) // tj))
    if tk2 is None:
        tk2 = _fit_tile(d_hid, 2048)
    # TODO(synk): handle ragged dims; the real 81920/4096 dims divide evenly.
    assert d_in % tk == 0 and d_hid % tk2 == 0
    assert tk % 128 == 0 and tj % 128 == 0 and tk2 % 128 == 0

    # Activation traffic is negligible at B=2; cast to bf16 so the MXU runs a
    # native bf16 x bf16 matmul with f32 accumulation.
    x_bf16 = conv_feature.astype(jnp.bfloat16)
    c_pad = jnp.pad(kmean_center, ((0, 0), (0, d_out_pad - d_out)))

    vmem_limit = _vmem_limit_bytes()

    # ---- layer 1: h1 = relu(x @ W1 + b1); stream W1 over K, parallel over j.
    h1 = pl.pallas_call(
        _layer1_kernel,
        out_shape=jax.ShapeDtypeStruct((B, d_hid), jnp.bfloat16),
        grid_spec=pltpu.PrefetchScalarGridSpec(
            num_scalar_prefetch=0,
            grid=(n_jb, d_in // tk),
            in_specs=[
                pl.BlockSpec((B, tk), lambda j, k: (0, k)),
                # column-block-major W1: each (tk, tj) tile is one contiguous
                # HBM slab (leading block dim squeezed away in the kernel).
                pl.BlockSpec((None, tk, tj), lambda j, k: (j, k, 0)),
                pl.BlockSpec((1, tj), lambda j, k: (0, j)),
            ],
            out_specs=pl.BlockSpec((B, tj), lambda j, k: (0, j)),
            scratch_shapes=[pltpu.VMEM((B, tj), jnp.float32)],
        ),
        compiler_params=pltpu.CompilerParams(
            dimension_semantics=("parallel", "arbitrary"),
            vmem_limit_bytes=vmem_limit,
        ),
    )(x_bf16, w1b, b1)

    # ---- layers 2+3 + gate: stream W2 over K; W3/biases/center stay resident.
    out_pad = pl.pallas_call(
        _layer23_gate_kernel,
        out_shape=jax.ShapeDtypeStruct((B, d_out_pad), jnp.float32),
        grid_spec=pltpu.PrefetchScalarGridSpec(
            num_scalar_prefetch=0,
            grid=(d_hid // tk2,),
            in_specs=[
                pl.BlockSpec((B, tk2), lambda k: (0, k)),
                # full-width row blocks of the (d_hid, d_hid) W2 are contiguous.
                pl.BlockSpec((tk2, d_hid), lambda k: (k, 0)),
                pl.BlockSpec((1, d_hid), lambda k: (0, 0)),
                pl.BlockSpec((d_hid, d_out_pad), lambda k: (0, 0)),
                pl.BlockSpec((1, d_out_pad), lambda k: (0, 0)),
                pl.BlockSpec((B, d_out_pad), lambda k: (0, 0)),
            ],
            out_specs=pl.BlockSpec((B, d_out_pad), lambda k: (0, 0)),
            scratch_shapes=[pltpu.VMEM((B, d_hid), jnp.float32)],
        ),
        compiler_params=pltpu.CompilerParams(
            dimension_semantics=("arbitrary",),
            vmem_limit_bytes=vmem_limit,
        ),
    )(h1, w2t, b2, w3t, b3, c_pad)

    return out_pad[:, :d_out]


# ---------------------------------------------------------------------------
# Parameters & reference
# ---------------------------------------------------------------------------

def init_params(key, d_in, d_hid, d_out):
    """Deterministic synthetic parameters (PyTorch Linear layout: (out, in))."""
    k1, k2, k3, k4, k5, k6 = jax.random.split(key, 6)
    s1 = 1.0 / jnp.sqrt(d_in)
    s2 = 1.0 / jnp.sqrt(d_hid)
    w1 = jax.random.uniform(k1, (d_hid, d_in), jnp.float32, -s1, s1)
    b1 = jax.random.uniform(k2, (d_hid,), jnp.float32, -s1, s1)
    w2 = jax.random.uniform(k3, (d_hid, d_hid), jnp.float32, -s2, s2)
    b2 = jax.random.uniform(k4, (d_hid,), jnp.float32, -s2, s2)
    w3 = jax.random.uniform(k5, (d_out, d_hid), jnp.float32, -s2, s2)
    b3 = jax.random.uniform(k6, (d_out,), jnp.float32, -s2, s2)
    return (w1, b1, w2, b2, w3, b3)


def prepare_params(params, *, l1_block_cols=None):
    """One-time prep: bf16 weights, column-block-major W1 so every streamed
    tile is contiguous HBM, transposed (in, out) W2/W3, layer-3 width padded
    to a multiple of 128 (lane-dense stores), 2-D f32 biases."""
    w1, b1, w2, b2, w3, b3 = params
    d_hid, d_in = w1.shape
    d_out = w3.shape[0]
    d_out_pad = ((d_out + 127) // 128) * 128
    pad = d_out_pad - d_out

    if l1_block_cols is None:
        # v7x (<=64 MiB VMEM/TC, 2 TCs): two column blocks so the 'parallel' j
        # axis keeps both TensorCores streaming W1; v5e/v6e (1 TC, 128 MiB):
        # one full-width block (fewest steps, fully contiguous slabs).
        if _vmem_capacity_bytes() <= 64 * 1024 * 1024:
            l1_block_cols = max(128, d_hid // 2)
        else:
            l1_block_cols = d_hid
    assert d_hid % l1_block_cols == 0
    n_jb = d_hid // l1_block_cols

    w1t = w1.T.astype(jnp.bfloat16)                        # (d_in, d_hid)
    w1b = w1t.reshape(d_in, n_jb, l1_block_cols).transpose(1, 0, 2)
    w2t = w2.T.astype(jnp.bfloat16)
    w3t = jnp.pad(w3.T.astype(jnp.bfloat16), ((0, 0), (0, pad)))
    b1_2d = b1.reshape(1, -1).astype(jnp.float32)
    b2_2d = b2.reshape(1, -1).astype(jnp.float32)
    b3_2d = jnp.pad(b3.reshape(1, -1).astype(jnp.float32), ((0, 0), (0, pad)))
    return (w1b, b1_2d, w2t, b2_2d, w3t, b3_2d)


def reference_forward(conv_feature, kmean_center, params):
    """Pure-JAX mirror of the kernel math (bf16 weights/activations between
    layers, f32 accumulation)."""
    w1, b1, w2, b2, w3, b3 = params
    xb = conv_feature.astype(jnp.bfloat16)
    h1 = jnp.maximum(
        jnp.dot(xb, w1.T.astype(jnp.bfloat16),
                preferred_element_type=jnp.float32) + b1, 0.0
    ).astype(jnp.bfloat16)
    h2 = jnp.maximum(
        jnp.dot(h1, w2.T.astype(jnp.bfloat16),
                preferred_element_type=jnp.float32) + b2, 0.0
    ).astype(jnp.bfloat16)
    y = jnp.dot(h2, w3.T.astype(jnp.bfloat16),
                preferred_element_type=jnp.float32) + b3
    return (1.0 + y) * kmean_center


if __name__ == "__main__":
    # Scaled-down stand-ins for the real dims (81920 -> 2048, 4096 -> 1024,
    # 514 kept as-is since it is the semantically meaningful width that gates
    # kmean_center).
    B, D_IN, D_HID, D_OUT = 2, 2048, 1024, 514

    key = jax.random.PRNGKey(0)
    kp, kx, kc = jax.random.split(key, 3)
    params = init_params(kp, D_IN, D_HID, D_OUT)

    conv_feature = jax.random.normal(kx, (B, D_IN), jnp.float32)
    kmean_center = jax.random.normal(kc, (B, D_OUT), jnp.float32)

    ref = reference_forward(conv_feature, kmean_center, params)

    # 1) production-style auto tiling (may collapse to a 1-step grid at these
    #    small demo dims; at the real dims it yields ~40-80 layer-1 steps).
    prepared_auto = prepare_params(params)
    out_auto = jax.block_until_ready(
        shift2rg_generator_forward(conv_feature, kmean_center, prepared_auto))

    # 2) small explicit tiles to exercise the multi-step / multi-column-block
    #    path (2 column blocks x 4 K steps for layer 1, 2 K steps for layer 2).
    prepared_small = prepare_params(params, l1_block_cols=512)
    out_small = jax.block_until_ready(
        shift2rg_generator_forward(conv_feature, kmean_center, prepared_small,
                                   tk=512, tk2=512))

    assert out_auto.shape == (B, D_OUT) and out_small.shape == (B, D_OUT)
    # bf16 weights -> relaxed tolerance (f32 accumulation keeps error small).
    assert jnp.allclose(out_auto, ref, atol=1e-2, rtol=1e-2), "auto-tile mismatch"
    assert jnp.allclose(out_small, ref, atol=1e-2, rtol=1e-2), "small-tile mismatch"

    print("KERNEL_OK")
</pallas_src>

<mosaic_0001>
module attributes {stable_mosaic.version = 11 : i64} {
  func.func @_layer1_kernel(%arg0: i32, %arg1: i32, %arg2: memref<2x2048xbf16, #tpu.memory_space<vmem>>, %arg3: memref<1x2048x1024xbf16, #tpu.memory_space<vmem>>, %arg4: memref<1x1024xf32, #tpu.memory_space<vmem>>, %arg5: memref<2x1024xbf16, #tpu.memory_space<vmem>>, %arg6: memref<2x1024xf32, #tpu.memory_space<vmem>>) attributes {dimension_semantics = [#tpu.dimension_semantics<parallel>, #tpu.dimension_semantics<arbitrary>], iteration_bounds = array<i64: 1, 1>, scalar_prefetch = 0 : i64, scratch_operands = 1 : i64, tpu.core_type = #tpu.core_type<tc>, window_params = [{transform_indices = @transform_0, window_bounds = array<i64: 2, 2048>}, {transform_indices = @transform_1, window_bounds = array<i64: 1, 2048, 1024>}, {transform_indices = @transform_2, window_bounds = array<i64: 1, 1024>}, {transform_indices = @transform_3, window_bounds = array<i64: 2, 1024>}]} {
    %c0_i32 = arith.constant 0 : i32
    %0 = arith.cmpi eq, %arg1, %c0_i32 : i32
    %1 = arith.extui %0 : i1 to i32
    %c0_i32_0 = arith.constant 0 : i32
    %2 = arith.cmpi ne, %1, %c0_i32_0 : i32
    scf.if %2 {
      %cst_11 = arith.constant 0.000000e+00 : f32
      %13 = vector.broadcast %cst_11 : f32 to vector<2x1024xf32>
      %c0_12 = arith.constant 0 : index
      %c0_13 = arith.constant 0 : index
      %14 = vector.load %arg6[%c0_12, %c0_13] : memref<2x1024xf32, #tpu.memory_space<vmem>>, vector<2x1024xf32>
      tpu.vector_store %arg6[%c0_12, %c0_13], %13 {strides = array<i32>} : memref<2x1024xf32, #tpu.memory_space<vmem>>, vector<2x1024xf32>,
    } else {
    }
    %c0 = arith.constant 0 : index
    %c0_1 = arith.constant 0 : index
    %3 = vector.load %arg6[%c0, %c0_1] : memref<2x1024xf32, #tpu.memory_space<vmem>>, vector<2x1024xf32>
    %c0_2 = arith.constant 0 : index
    %c0_3 = arith.constant 0 : index
    %4 = vector.load %arg2[%c0_2, %c0_3] : memref<2x2048xbf16, #tpu.memory_space<vmem>>, vector<2x2048xbf16>
    %c0_4 = arith.constant 0 : index
    %c0_5 = arith.constant 0 : index
    %c0_6 = arith.constant 0 : index
    %5 = vector.load %arg3[%c0_4, %c0_5, %c0_6] : memref<1x2048x1024xbf16, #tpu.memory_space<vmem>>, vector<1x2048x1024xbf16>
    %6 = vector.shape_cast %5 : vector<1x2048x1024xbf16> to vector<2048x1024xbf16>
    %cst = arith.constant dense<0.000000e+00> : vector<2x1024xf32>
    %7 = tpu.matmul %4, %6, %cst {dimension_numbers = #tpu.dot_dimension_numbers<[1], [0], [0], [1], [0, 0, 1, 1], [], []>} : vector<2x2048xbf16>, vector<2048x1024xbf16>, vector<2x1024xf32> -> vector<2x1024xf32>
    %8 = arith.addf %3, %7 : vector<2x1024xf32>
    %c0_7 = arith.constant 0 : index
    %c0_8 = arith.constant 0 : index
    %9 = vector.load %arg6[%c0_7, %c0_8] : memref<2x1024xf32, #tpu.memory_space<vmem>>, vector<2x1024xf32>
    tpu.vector_store %arg6[%c0_7, %c0_8], %8 {strides = array<i32>} : memref<2x1024xf32, #tpu.memory_space<vmem>>, vector<2x1024xf32>,
    %c0_i32_9 = arith.constant 0 : i32
    %10 = arith.cmpi eq, %arg1, %c0_i32_9 : i32
    %11 = arith.extui %10 : i1 to i32
    %c0_i32_10 = arith.constant 0 : i32
    %12 = arith.cmpi ne, %11, %c0_i32_10 : i32
    scf.if %12 {
      %c0_11 = arith.constant 0 : index
      %c0_12 = arith.constant 0 : index
      %13 = vector.load %arg6[%c0_11, %c0_12] : memref<2x1024xf32, #tpu.memory_space<vmem>>, vector<2x1024xf32>
      %c0_13 = arith.constant 0 : index
      %c0_14 = arith.constant 0 : index
      %14 = vector.load %arg4[%c0_13, %c0_14] : memref<1x1024xf32, #tpu.memory_space<vmem>>, vector<1x1024xf32>
      %15 = vector.broadcast %14 : vector<1x1024xf32> to vector<2x1024xf32>
      %16 = arith.addf %13, %15 : vector<2x1024xf32>
      %cst_15 = arith.constant 0.000000e+00 : f32
      %17 = vector.broadcast %cst_15 : f32 to vector<2x1024xf32>
      %18 = arith.maximumf %16, %17 : vector<2x1024xf32>
      %19 = arith.truncf %18 : vector<2x1024xf32> to vector<2x1024xbf16>
      %c0_16 = arith.constant 0 : index
      %c0_17 = arith.constant 0 : index
      %20 = vector.load %arg5[%c0_16, %c0_17] : memref<2x1024xbf16, #tpu.memory_space<vmem>>, vector<2x1024xbf16>
      tpu.vector_store %arg5[%c0_16, %c0_17], %19 {strides = array<i32>} : memref<2x1024xbf16, #tpu.memory_space<vmem>>, vector<2x1024xbf16>,
    } else {
    }
    return
  }
  func.func @transform_0(%arg0: i32, %arg1: i32) -> (i32, i32) {
    %c0_i32 = arith.constant 0 : i32
    %c0_i32_0 = arith.constant 0 : i32
    return %c0_i32, %arg1 : i32, i32
  }
  func.func @transform_1(%arg0: i32, %arg1: i32) -> (i32, i32, i32) {
    %c0_i32 = arith.constant 0 : i32
    %c0_i32_0 = arith.constant 0 : i32
    return %arg0, %arg1, %c0_i32 : i32, i32, i32
  }
  func.func @transform_2(%arg0: i32, %arg1: i32) -> (i32, i32) {
    %c0_i32 = arith.constant 0 : i32
    %c0_i32_0 = arith.constant 0 : i32
    return %c0_i32, %arg0 : i32, i32
  }
  func.func @transform_3(%arg0: i32, %arg1: i32) -> (i32, i32) {
    %c0_i32 = arith.constant 0 : i32
    %c0_i32_0 = arith.constant 0 : i32
    return %c0_i32, %arg0 : i32, i32
  }
}

</mosaic_0001>

<llo_original>
// kernel: tpu_custom_call.1
$region0: #{tpu_custom_call.1}
  #allocation0 [shape = 'u32[]', space=smem, size = 0x4, offset = 0x4, fixed_abs, tag = 'smem constant byte address 0x4 - core index']
  #allocation1 [shape = 'u32[144,128]{1,0:T(1,128)}', space=vmem, size = 0x12000, scoped, tag = 'internal scratch']
  #allocation2 [shape = 'f32[2,1024]{1,0:T(2,128)}', space=vmem, size = 0x2000, scoped, tag = 'scratch operand']
  %s0 = inlined_call_operand.hbm [shape: bf16[2,2048], index: 0, kind: input, shape index: {}]
  %s1 = inlined_call_operand.hbm [shape: bf16[1,2048,1024], index: 1, kind: input, shape index: {}]
  %s2 = inlined_call_operand.hbm [shape: f32[1,1024], index: 2, kind: input, shape index: {}]
  %s3 = inlined_call_operand.hbm [shape: bf16[2,1024], index: 3, kind: output, shape index: {}]
  %s4 = sld [smem:[#allocation0]]
  $region42: #{tpu_custom_call.1} parent=0
    _
  %s6 = ssub.s32 1, %s4
  %s7 = scalar_select 0, %s6, %s4
  $region1: #{tpu_custom_call.1} parent=0
    #allocation3 [shape = 'u8[8192]{0}', space=vmem, size = 0x2000, scoped, tag = 'input window, operand 0, single buffered']
    #allocation4 [shape = 's32[1]{0}', space=sflag, size = 0x4, scoped, tag = 'scoped memory for tpu_custom_call.1']
    #allocation5 [shape = 's32[1]{0}', space=sflag, size = 0x4, scoped, tag = 'scoped memory for tpu_custom_call.1']
    #allocation6 [shape = 'u8[4194304]{0}', space=vmem, size = 0x400000, scoped, tag = 'input window, operand 1, single buffered']
    #allocation7 [shape = 's32[1]{0}', space=sflag, size = 0x4, scoped, tag = 'scoped memory for tpu_custom_call.1']
    #allocation8 [shape = 'u8[4096]{0}', space=vmem, size = 0x1000, scoped, tag = 'input window, operand 2, single buffered']
    #allocation9 [shape = 'u8[4096]{0}', space=vmem, size = 0x1000, scoped, tag = 'output window, operand 0, single buffered']
    %8 = vsyncpa [#allocation4], 0
    %9 = vsyncpa [#allocation7], 0
    %10 = vsyncpa [#allocation5], 0
    // Predicated region
    $region2: #{tpu_custom_call.1} parent=1 // pred_check
      _
    $region3: #{tpu_custom_call.1} parent=1 // pred_check_branch
      %12 = sbr.rel (0) target = $region5
    $region4: #{tpu_custom_call.1} parent=1 // pred_region
      %s14 = ssub.s32 256, 256
      %15 = vsyncadd [#allocation4], %s14
      %s17 = sshll.u32 [#allocation3], 4
      %s18 = int_to_ptr.vmem [resolvable:$true] %s17
      %20 = dma.hbm_to_vmem [thread:$0]  %s0, 256, %s18, [#allocation4]
    $region5: #{tpu_custom_call.1} parent=1 // pred_fallthru
      _
    // Predicated region
    $region6: #{tpu_custom_call.1} parent=1 // pred_check
      _
    $region7: #{tpu_custom_call.1} parent=1 // pred_check_branch
      %22 = sbr.rel (0) target = $region9
    $region8: #{tpu_custom_call.1} parent=1 // pred_region
      %s24 = ssub.s32 131072, 131072
      %25 = vsyncadd [#allocation7], %s24
      %s26 = sshll.u32 [#allocation6], 4
      %s27 = int_to_ptr.vmem [resolvable:$true] %s26
      %32 = dma.hbm_to_vmem [thread:$0]  %s1, 131072, %s27, [#allocation7], 512, 512, 32
    $region9: #{tpu_custom_call.1} parent=1 // pred_fallthru
      _
    // Predicated region
    $region10: #{tpu_custom_call.1} parent=1 // pred_check
      _
    $region11: #{tpu_custom_call.1} parent=1 // pred_check_branch
      %34 = sbr.rel (0) target = $region13
    $region12: #{tpu_custom_call.1} parent=1 // pred_region
      %s36 = ssub.s32 128, 128
      %37 = vsyncadd [#allocation7], %s36
      %s39 = sshll.u32 [#allocation8], 4
      %s40 = int_to_ptr.vmem [resolvable:$true] %s39
      %42 = dma.hbm_to_vmem [thread:$0]  %s2, 128, %s40, [#allocation7]
    $region13: #{tpu_custom_call.1} parent=1 // pred_fallthru
      _
    // Predicated region
    $region14: #{tpu_custom_call.1} parent=1 // pred_check
      _
    $region15: #{tpu_custom_call.1} parent=1 // pred_check_branch
      %44 = sbr.rel (0) target = $region17
    $region16: #{tpu_custom_call.1} parent=1 // pred_region
      %45 = dma.done [#allocation4], 256
    $region17: #{tpu_custom_call.1} parent=1 // pred_fallthru
      _
    // Predicated region
    $region18: #{tpu_custom_call.1} parent=1 // pred_check
      _
    $region19: #{tpu_custom_call.1} parent=1 // pred_check_branch
      %47 = sbr.rel (0) target = $region21
    $region20: #{tpu_custom_call.1} parent=1 // pred_region
      %48 = dma.done [#allocation7], 131072
    $region21: #{tpu_custom_call.1} parent=1 // pred_fallthru
      _
    // Predicated region
    $region22: #{tpu_custom_call.1} parent=1 // pred_check
      _
    $region23: #{tpu_custom_call.1} parent=1 // pred_check_branch
      %50 = sbr.rel (0) target = $region25
    $region24: #{tpu_custom_call.1} parent=1 // pred_region
      %51 = dma.done [#allocation7], 128
    $region25: #{tpu_custom_call.1} parent=1 // pred_fallthru
      _
    %p52 = scmp.eq.s32.totalorder 0, 0
    // Predicated region
    $region26: #{tpu_custom_call.1} parent=1 // pred_check
      %p53 = pneg %p52
    $region27: #{tpu_custom_call.1} parent=1 // pred_check_branch
      %55 = sbr.rel (%p53) target = $region29
    $region28: #{tpu_custom_call.1} parent=1 // pred_region
      %56 = vst [vmem:[#allocation2] sm:$0xff] 0.0
      %57 = vst [vmem:[#allocation2 + $0x8] sm:$0xff] 0.0
    $region29: #{tpu_custom_call.1} parent=1 // pred_fallthru
      _
    %v58 = vld [vmem:[#allocation2] sm:$0xff]
    %v59 = vld [vmem:[#allocation2 + $0x8] sm:$0xff]
    %v60 = vld [vmem:[#allocation3] sm:$0xff]
    %v61 = vld [vmem:[#allocation3 + $0x8] sm:$0xff]
    %v62 = vld [vmem:[#allocation6] sm:$0xff]
    %v63 = vld [vmem:[#allocation6 + $0x8] sm:$0xff]
    %v64 = vld [vmem:[#allocation6 + $0x10] sm:$0xff]
    %v65 = vld [vmem:[#allocation6 + $0x18] sm:$0xff]
    %v66 = vld [vmem:[#allocation6 + $0x20] sm:$0xff]
    %v67 = vld [vmem:[#allocation6 + $0x28] sm:$0xff]
    %v68 = vld [vmem:[#allocation6 + $0x30] sm:$0xff]
    %v69 = vld [vmem:[#allocation6 + $0x38] sm:$0xff]
    %v70 = vld [vmem:[#allocation6 + $0x40] sm:$0xff]
    %v71 = vld [vmem:[#allocation6 + $0x48] sm:$0xff]
    %v72 = vld [vmem:[#allocation6 + $0x50] sm:$0xff]
    %v73 = vld [vmem:[#allocation6 + $0x58] sm:$0xff]
    %v74 = vld [vmem:[#allocation6 + $0x60] sm:$0xff]
    %v75 = vld [vmem:[#allocation6 + $0x68] sm:$0xff]
    %v76 = vld [vmem:[#allocation6 + $0x70] sm:$0xff]
    %v77 = vld [vmem:[#allocation6 + $0x78] sm:$0xff]
    %v78 = vld [vmem:[#allocation6 + $0x80] sm:$0xff]
    %v79 = vld [vmem:[#allocation6 + $0x88] sm:$0xff]
    %v80 = vld [vmem:[#allocation6 + $0x90] sm:$0xff]
    %v81 = vld [vmem:[#allocation6 + $0x98] sm:$0xff]
    %v82 = vld [vmem:[#allocation6 + $0xa0] sm:$0xff]
    %v83 = vld [vmem:[#allocation6 + $0xa8] sm:$0xff]
    %v84 = vld [vmem:[#allocation6 + $0xb0] sm:$0xff]
    %v85 = vld [vmem:[#allocation6 + $0xb8] sm:$0xff]
    %v86 = vld [vmem:[#allocation6 + $0xc0] sm:$0xff]
    %v87 = vld [vmem:[#allocation6 + $0xc8] sm:$0xff]
    %v88 = vld [vmem:[#allocation6 + $0xd0] sm:$0xff]
    %v89 = vld [vmem:[#allocation6 + $0xd8] sm:$0xff]
    %v90 = vld [vmem:[#allocation6 + $0xe0] sm:$0xff]
    %v91 = vld [vmem:[#allocation6 + $0xe8] sm:$0xff]
    %v92 = vld [vmem:[#allocation6 + $0xf0] sm:$0xff]
    %v93 = vld [vmem:[#allocation6 + $0xf8] sm:$0xff]
    %v94 = vld [vmem:[#allocation6 + $0x100] sm:$0xff]
    %v95 = vld [vmem:[#allocation6 + $0x108] sm:$0xff]
    %v96 = vld [vmem:[#allocation6 + $0x110] sm:$0xff]
    %v97 = vld [vmem:[#allocation6 + $0x118] sm:$0xff]
    %v98 = vld [vmem:[#allocation6 + $0x120] sm:$0xff]
    %v99 = vld [vmem:[#allocation6 + $0x128] sm:$0xff]
    %v100 = vld [vmem:[#allocation6 + $0x130] sm:$0xff]
    %v101 = vld [vmem:[#allocation6 + $0x138] sm:$0xff]
    %v102 = vld [vmem:[#allocation6 + $0x140] sm:$0xff]
    %v103 = vld [vmem:[#allocation6 + $0x148] sm:$0xff]
    %v104 = vld [vmem:[#allocation6 + $0x150] sm:$0xff]
    %v105 = vld [vmem:[#allocation6 + $0x158] sm:$0xff]
    %v106 = vld [vmem:[#allocation6 + $0x160] sm:$0xff]
    %v107 = vld [vmem:[#allocation6 + $0x168] sm:$0xff]
    %v108 = vld [vmem:[#allocation6 + $0x170] sm:$0xff]
    %v109 = vld [vmem:[#allocation6 + $0x178] sm:$0xff]
    %v110 = vld [vmem:[#allocation6 + $0x180] sm:$0xff]
    %v111 = vld [vmem:[#allocation6 + $0x188] sm:$0xff]
    %v112 = vld [vmem:[#allocation6 + $0x190] sm:$0xff]
    %v113 = vld [vmem:[#allocation6 + $0x198] sm:$0xff]
    %v114 = vld [vmem:[#allocation6 + $0x1a0] sm:$0xff]
    %v115 = vld [vmem:[#allocation6 + $0x1a8] sm:$0xff]
    %v116 = vld [vmem:[#allocation6 + $0x1b0] sm:$0xff]
    %v117 = vld [vmem:[#allocation6 + $0x1b8] sm:$0xff]
    %v118 = vld [vmem:[#allocation6 + $0x1c0] sm:$0xff]
    %v119 = vld [vmem:[#allocation6 + $0x1c8] sm:$0xff]
    %v120 = vld [vmem:[#allocation6 + $0x1d0] sm:$0xff]
    %v121 = vld [vmem:[#allocation6 + $0x1d8] sm:$0xff]
    %v122 = vld [vmem:[#allocation6 + $0x1e0] sm:$0xff]
    %v123 = vld [vmem:[#allocation6 + $0x1e8] sm:$0xff]
    %v124 = vld [vmem:[#allocation6 + $0x1f0] sm:$0xff]
    %v125 = vld [vmem:[#allocation6 + $0x1f8] sm:$0xff]
    %v126 = vld [vmem:[#allocation6 + $0x200] sm:$0xff]
    %v127 = vld [vmem:[#allocation6 + $0x208] sm:$0xff]
    %v128 = vld [vmem:[#allocation6 + $0x210] sm:$0xff]
    %v129 = vld [vmem:[#allocation6 + $0x218] sm:$0xff]
    %v130 = vld [vmem:[#allocation6 + $0x220] sm:$0xff]
    %v131 = vld [vmem:[#allocation6 + $0x228] sm:$0xff]
    %v132 = vld [vmem:[#allocation6 + $0x230] sm:$0xff]
    %v133 = vld [vmem:[#allocation6 + $0x238] sm:$0xff]
    %v134 = vld [vmem:[#allocation6 + $0x240] sm:$0xff]
    %v135 = vld [vmem:[#allocation6 + $0x248] sm:$0xff]
    %v136 = vld [vmem:[#allocation6 + $0x250] sm:$0xff]
    %v137 = vld [vmem:[#allocation6 + $0x258] sm:$0xff]
    %v138 = vld [vmem:[#allocation6 + $0x260] sm:$0xff]
    %v139 = vld [vmem:[#allocation6 + $0x268] sm:$0xff]
    %v140 = vld [vmem:[#allocation6 + $0x270] sm:$0xff]
    %v141 = vld [vmem:[#allocation6 + $0x278] sm:$0xff]
    %v142 = vld [vmem:[#allocation6 + $0x280] sm:$0xff]
    %v143 = vld [vmem:[#allocation6 + $0x288] sm:$0xff]
    %v144 = vld [vmem:[#allocation6 + $0x290] sm:$0xff]
    %v145 = vld [vmem:[#allocation6 + $0x298] sm:$0xff]
    %v146 = vld [vmem:[#allocation6 + $0x2a0] sm:$0xff]
    %v147 = vld [vmem:[#allocation6 + $0x2a8] sm:$0xff]
    %v148 = vld [vmem:[#allocation6 + $0x2b0] sm:$0xff]
    %v149 = vld [vmem:[#allocation6 + $0x2b8] sm:$0xff]
    %v150 = vld [vmem:[#allocation6 + $0x2c0] sm:$0xff]
    %v151 = vld [vmem:[#allocation6 + $0x2c8] sm:$0xff]
    %v152 = vld [vmem:[#allocation6 + $0x2d0] sm:$0xff]
    %v153 = vld [vmem:[#allocation6 + $0x2d8] sm:$0xff]
    %v154 = vld [vmem:[#allocation6 + $0x2e0] sm:$0xff]
    %v155 = vld [vmem:[#allocation6 + $0x2e8] sm:$0xff]
    %v156 = vld [vmem:[#allocation6 + $0x2f0] sm:$0xff]
    %v157 = vld [vmem:[#allocation6 + $0x2f8] sm:$0xff]
    %v158 = vld [vmem:[#allocation6 + $0x300] sm:$0xff]
    %v159 = vld [vmem:[#allocation6 + $0x308] sm:$0xff]
    %v160 = vld [vmem:[#allocation6 + $0x310] sm:$0xff]
    %v161 = vld [vmem:[#allocation6 + $0x318] sm:$0xff]
    %v162 = vld [vmem:[#allocation6 + $0x320] sm:$0xff]
    %v163 = vld [vmem:[#allocation6 + $0x328] sm:$0xff]
    %v164 = vld [vmem:[#allocation6 + $0x330] sm:$0xff]
    %v165 = vld [vmem:[#allocation6 + $0x338] sm:$0xff]
    %v166 = vld [vmem:[#allocation6 + $0x340] sm:$0xff]
    %v167 = vld [vmem:[#allocation6 + $0x348] sm:$0xff]
    %v168 = vld [vmem:[#allocation6 + $0x350] sm:$0xff]
    %v169 = vld [vmem:[#allocation6 + $0x358] sm:$0xff]
    %v170 = vld [vmem:[#allocation6 + $0x360] sm:$0xff]
    %v171 = vld [vmem:[#allocation6 + $0x368] sm:$0xff]
    %v172 = vld [vmem:[#allocation6 + $0x370] sm:$0xff]
    %v173 = vld [vmem:[#allocation6 + $0x378] sm:$0xff]
    %v174 = vld [vmem:[#allocation6 + $0x380] sm:$0xff]
    %v175 = vld [vmem:[#allocation6 + $0x388] sm:$0xff]
    %v176 = vld [vmem:[#allocation6 + $0x390] sm:$0xff]
    %v177 = vld [vmem:[#allocation6 + $0x398] sm:$0xff]
    %v178 = vld [vmem:[#allocation6 + $0x3a0] sm:$0xff]
    %v179 = vld [vmem:[#allocation6 + $0x3a8] sm:$0xff]
    %v180 = vld [vmem:[#allocation6 + $0x3b0] sm:$0xff]
    %v181 = vld [vmem:[#allocation6 + $0x3b8] sm:$0xff]
    %v182 = vld [vmem:[#allocation6 + $0x3c0] sm:$0xff]
    %v183 = vld [vmem:[#allocation6 + $0x3c8] sm:$0xff]
    %v184 = vld [vmem:[#allocation6 + $0x3d0] sm:$0xff]
    %v185 = vld [vmem:[#allocation6 + $0x3d8] sm:$0xff]
    %v186 = vld [vmem:[#allocation6 + $0x3e0] sm:$0xff]
    %v187 = vld [vmem:[#allocation6 + $0x3e8] sm:$0xff]
    %v188 = vld [vmem:[#allocation6 + $0x3f0] sm:$0xff]
    %v189 = vld [vmem:[#allocation6 + $0x3f8] sm:$0xff]
    %v190 = vld [vmem:[#allocation6 + $0x400] sm:$0xff]
    %v191 = vld [vmem:[#allocation6 + $0x408] sm:$0xff]
    %v192 = vld [vmem:[#allocation6 + $0x410] sm:$0xff]
    %v193 = vld [vmem:[#allocation6 + $0x418] sm:$0xff]
    %v194 = vld [vmem:[#allocation6 + $0x420] sm:$0xff]
    %v195 = vld [vmem:[#allocation6 + $0x428] sm:$0xff]
    %v196 = vld [vmem:[#allocation6 + $0x430] sm:$0xff]
    %v197 = vld [vmem:[#allocation6 + $0x438] sm:$0xff]
    %v198 = vld [vmem:[#allocation6 + $0x440] sm:$0xff]
    %v199 = vld [vmem:[#allocation6 + $0x448] sm:$0xff]
    %v200 = vld [vmem:[#allocation6 + $0x450] sm:$0xff]
    %v201 = vld [vmem:[#allocation6 + $0x458] sm:$0xff]
    %v202 = vld [vmem:[#allocation6 + $0x460] sm:$0xff]
    %v203 = vld [vmem:[#allocation6 + $0x468] sm:$0xff]
    %v204 = vld [vmem:[#allocation6 + $0x470] sm:$0xff]
    %v205 = vld [vmem:[#allocation6 + $0x478] sm:$0xff]
    %v206 = vld [vmem:[#allocation6 + $0x480] sm:$0xff]
    %v207 = vld [vmem:[#allocation6 + $0x488] sm:$0xff]
    %v208 = vld [vmem:[#allocation6 + $0x490] sm:$0xff]
    %v209 = vld [vmem:[#allocation6 + $0x498] sm:$0xff]
    %v210 = vld [vmem:[#allocation6 + $0x4a0] sm:$0xff]
    %v211 = vld [vmem:[#allocation6 + $0x4a8] sm:$0xff]
    %v212 = vld [vmem:[#allocation6 + $0x4b0] sm:$0xff]
    %v213 = vld [vmem:[#allocation6 + $0x4b8] sm:$0xff]
    %v214 = vld [vmem:[#allocation6 + $0x4c0] sm:$0xff]
    %v215 = vld [vmem:[#allocation6 + $0x4c8] sm:$0xff]
    %v216 = vld [vmem:[#allocation6 + $0x4d0] sm:$0xff]
    %v217 = vld [vmem:[#allocation6 + $0x4d8] sm:$0xff]
    %v218 = vld [vmem:[#allocation6 + $0x4e0] sm:$0xff]
    %v219 = vld [vmem:[#allocation6 + $0x4e8] sm:$0xff]
    %v220 = vld [vmem:[#allocation6 + $0x4f0] sm:$0xff]
    %v221 = vld [vmem:[#allocation6 + $0x4f8] sm:$0xff]
    %v222 = vld [vmem:[#allocation6 + $0x500] sm:$0xff]
    %v223 = vld [vmem:[#allocation6 + $0x508] sm:$0xff]
    %v224 = vld [vmem:[#allocation6 + $0x510] sm:$0xff]
    %v225 = vld [vmem:[#allocation6 + $0x518] sm:$0xff]
    %v226 = vld [vmem:[#allocation6 + $0x520] sm:$0xff]
    %v227 = vld [vmem:[#allocation6 + $0x528] sm:$0xff]
    %v228 = vld [vmem:[#allocation6 + $0x530] sm:$0xff]
    %v229 = vld [vmem:[#allocation6 + $0x538] sm:$0xff]
    %v230 = vld [vmem:[#allocation6 + $0x540] sm:$0xff]
    %v231 = vld [vmem:[#allocation6 + $0x548] sm:$0xff]
    %v232 = vld [vmem:[#allocation6 + $0x550] sm:$0xff]
    %v233 = vld [vmem:[#allocation6 + $0x558] sm:$0xff]
    %v234 = vld [vmem:[#allocation6 + $0x560] sm:$0xff]
    %v235 = vld [vmem:[#allocation6 + $0x568] sm:$0xff]
    %v236 = vld [vmem:[#allocation6 + $0x570] sm:$0xff]
    %v237 = vld [vmem:[#allocation6 + $0x578] sm:$0xff]
    %v238 = vld [vmem:[#allocation6 + $0x580] sm:$0xff]
    %v239 = vld [vmem:[#allocation6 + $0x588] sm:$0xff]
    %v240 = vld [vmem:[#allocation6 + $0x590] sm:$0xff]
    %v241 = vld [vmem:[#allocation6 + $0x598] sm:$0xff]
    %v242 = vld [vmem:[#allocation6 + $0x5a0] sm:$0xff]
    %v243 = vld [vmem:[#allocation6 + $0x5a8] sm:$0xff]
    %v244 = vld [vmem:[#allocation6 + $0x5b0] sm:$0xff]
    %v245 = vld [vmem:[#allocation6 + $0x5b8] sm:$0xff]
    %v246 = vld [vmem:[#allocation6 + $0x5c0] sm:$0xff]
    %v247 = vld [vmem:[#allocation6 + $0x5c8] sm:$0xff]
    %v248 = vld [vmem:[#allocation6 + $0x5d0] sm:$0xff]
    %v249 = vld [vmem:[#allocation6 + $0x5d8] sm:$0xff]
    %v250 = vld [vmem:[#allocation6 + $0x5e0] sm:$0xff]
    %v251 = vld [vmem:[#allocation6 + $0x5e8] sm:$0xff]
    %v252 = vld [vmem:[#allocation6 + $0x5f0] sm:$0xff]
    %v253 = vld [vmem:[#allocation6 + $0x5f8] sm:$0xff]
    %v254 = vld [vmem:[#allocation6 + $0x600] sm:$0xff]
    %v255 = vld [vmem:[#allocation6 + $0x608] sm:$0xff]
    %v256 = vld [vmem:[#allocation6 + $0x610] sm:$0xff]
    %v257 = vld [vmem:[#allocation6 + $0x618] sm:$0xff]
    %v258 = vld [vmem:[#allocation6 + $0x620] sm:$0xff]
    %v259 = vld [vmem:[#allocation6 + $0x628] sm:$0xff]
    %v260 = vld [vmem:[#allocation6 + $0x630] sm:$0xff]
    %v261 = vld [vmem:[#allocation6 + $0x638] sm:$0xff]
    %v262 = vld [vmem:[#allocation6 + $0x640] sm:$0xff]
    %v263 = vld [vmem:[#allocation6 + $0x648] sm:$0xff]
    %v264 = vld [vmem:[#allocation6 + $0x650] sm:$0xff]
    %v265 = vld [vmem:[#allocation6 + $0x658] sm:$0xff]
    %v266 = vld [vmem:[#allocation6 + $0x660] sm:$0xff]
    %v267 = vld [vmem:[#allocation6 + $0x668] sm:$0xff]
    %v268 = vld [vmem:[#allocation6 + $0x670] sm:$0xff]
    %v269 = vld [vmem:[#allocation6 + $0x678] sm:$0xff]
    %v270 = vld [vmem:[#allocation6 + $0x680] sm:$0xff]
    %v271 = vld [vmem:[#allocation6 + $0x688] sm:$0xff]
    %v272 = vld [vmem:[#allocation6 + $0x690] sm:$0xff]
    %v273 = vld [vmem:[#allocation6 + $0x698] sm:$0xff]
    %v274 = vld [vmem:[#allocation6 + $0x6a0] sm:$0xff]
    %v275 = vld [vmem:[#allocation6 + $0x6a8] sm:$0xff]
    %v276 = vld [vmem:[#allocation6 + $0x6b0] sm:$0xff]
    %v277 = vld [vmem:[#allocation6 + $0x6b8] sm:$0xff]
    %v278 = vld [vmem:[#allocation6 + $0x6c0] sm:$0xff]
    %v279 = vld [vmem:[#allocation6 + $0x6c8] sm:$0xff]
    %v280 = vld [vmem:[#allocation6 + $0x6d0] sm:$0xff]
    %v281 = vld [vmem:[#allocation6 + $0x6d8] sm:$0xff]
    %v282 = vld [vmem:[#allocation6 + $0x6e0] sm:$0xff]
    %v283 = vld [vmem:[#allocation6 + $0x6e8] sm:$0xff]
    %v284 = vld [vmem:[#allocation6 + $0x6f0] sm:$0xff]
    %v285 = vld [vmem:[#allocation6 + $0x6f8] sm:$0xff]
    %v286 = vld [vmem:[#allocation6 + $0x700] sm:$0xff]
    %v287 = vld [vmem:[#allocation6 + $0x708] sm:$0xff]
    %v288 = vld [vmem:[#allocation6 + $0x710] sm:$0xff]
    %v289 = vld [vmem:[#allocation6 + $0x718] sm:$0xff]
    %v290 = vld [vmem:[#allocation6 + $0x720] sm:$0xff]
    %v291 = vld [vmem:[#allocation6 + $0x728] sm:$0xff]
    %v292 = vld [vmem:[#allocation6 + $0x730] sm:$0xff]
    %v293 = vld [vmem:[#allocation6 + $0x738] sm:$0xff]
    %v294 = vld [vmem:[#allocation6 + $0x740] sm:$0xff]
    %v295 = vld [vmem:[#allocation6 + $0x748] sm:$0xff]
    %v296 = vld [vmem:[#allocation6 + $0x750] sm:$0xff]
    %v297 = vld [vmem:[#allocation6 + $0x758] sm:$0xff]
    %v298 = vld [vmem:[#allocation6 + $0x760] sm:$0xff]
    %v299 = vld [vmem:[#allocation6 + $0x768] sm:$0xff]
    %v300 = vld [vmem:[#allocation6 + $0x770] sm:$0xff]
    %v301 = vld [vmem:[#allocation6 + $0x778] sm:$0xff]
    %v302 = vld [vmem:[#allocation6 + $0x780] sm:$0xff]
    %v303 = vld [vmem:[#allocation6 + $0x788] sm:$0xff]
    %v304 = vld [vmem:[#allocation6 + $0x790] sm:$0xff]
    %v305 = vld [vmem:[#allocation6 + $0x798] sm:$0xff]
    %v306 = vld [vmem:[#allocation6 + $0x7a0] sm:$0xff]
    %v307 = vld [vmem:[#allocation6 + $0x7a8] sm:$0xff]
    %v308 = vld [vmem:[#allocation6 + $0x7b0] sm:$0xff]
    %v309 = vld [vmem:[#allocation6 + $0x7b8] sm:$0xff]
    %v310 = vld [vmem:[#allocation6 + $0x7c0] sm:$0xff]
    %v311 = vld [vmem:[#allocation6 + $0x7c8] sm:$0xff]
    %v312 = vld [vmem:[#allocation6 + $0x7d0] sm:$0xff]
    %v313 = vld [vmem:[#allocation6 + $0x7d8] sm:$0xff]
    %v314 = vld [vmem:[#allocation6 + $0x7e0] sm:$0xff]
    %v315 = vld [vmem:[#allocation6 + $0x7e8] sm:$0xff]
    %v316 = vld [vmem:[#allocation6 + $0x7f0] sm:$0xff]
    %v317 = vld [vmem:[#allocation6 + $0x7f8] sm:$0xff]
    %v318 = vld [vmem:[#allocation6 + $0x800] sm:$0xff]
    %v319 = vld [vmem:[#allocation6 + $0x808] sm:$0xff]
    %v320 = vld [vmem:[#allocation6 + $0x810] sm:$0xff]
    %v321 = vld [vmem:[#allocation6 + $0x818] sm:$0xff]
    %v322 = vld [vmem:[#allocation6 + $0x820] sm:$0xff]
    %v323 = vld [vmem:[#allocation6 + $0x828] sm:$0xff]
    %v324 = vld [vmem:[#allocation6 + $0x830] sm:$0xff]
    %v325 = vld [vmem:[#allocation6 + $0x838] sm:$0xff]
    %v326 = vld [vmem:[#allocation6 + $0x840] sm:$0xff]
    %v327 = vld [vmem:[#allocation6 + $0x848] sm:$0xff]
    %v328 = vld [vmem:[#allocation6 + $0x850] sm:$0xff]
    %v329 = vld [vmem:[#allocation6 + $0x858] sm:$0xff]
    %v330 = vld [vmem:[#allocation6 + $0x860] sm:$0xff]
    %v331 = vld [vmem:[#allocation6 + $0x868] sm:$0xff]
    %v332 = vld [vmem:[#allocation6 + $0x870] sm:$0xff]
    %v333 = vld [vmem:[#allocation6 + $0x878] sm:$0xff]
    %v334 = vld [vmem:[#allocation6 + $0x880] sm:$0xff]
    %v335 = vld [vmem:[#allocation6 + $0x888] sm:$0xff]
    %v336 = vld [vmem:[#allocation6 + $0x890] sm:$0xff]
    %v337 = vld [vmem:[#allocation6 + $0x898] sm:$0xff]
    %v338 = vld [vmem:[#allocation6 + $0x8a0] sm:$0xff]
    %v339 = vld [vmem:[#allocation6 + $0x8a8] sm:$0xff]
    %v340 = vld [vmem:[#allocation6 + $0x8b0] sm:$0xff]
    %v341 = vld [vmem:[#allocation6 + $0x8b8] sm:$0xff]
    %v342 = vld [vmem:[#allocation6 + $0x8c0] sm:$0xff]
    %v343 = vld [vmem:[#allocation6 + $0x8c8] sm:$0xff]
    %v344 = vld [vmem:[#allocation6 + $0x8d0] sm:$0xff]
    %v345 = vld [vmem:[#allocation6 + $0x8d8] sm:$0xff]
    %v346 = vld [vmem:[#allocation6 + $0x8e0] sm:$0xff]
    %v347 = vld [vmem:[#allocation6 + $0x8e8] sm:$0xff]
    %v348 = vld [vmem:[#allocation6 + $0x8f0] sm:$0xff]
    %v349 = vld [vmem:[#allocation6 + $0x8f8] sm:$0xff]
    %v350 = vld [vmem:[#allocation6 + $0x900] sm:$0xff]
    %v351 = vld [vmem:[#allocation6 + $0x908] sm:$0xff]
    %v352 = vld [vmem:[#allocation6 + $0x910] sm:$0xff]
    %v353 = vld [vmem:[#allocation6 + $0x918] sm:$0xff]
    %v354 = vld [vmem:[#allocation6 + $0x920] sm:$0xff]
    %v355 = vld [vmem:[#allocation6 + $0x928] sm:$0xff]
    %v356 = vld [vmem:[#allocation6 + $0x930] sm:$0xff]
    %v357 = vld [vmem:[#allocation6 + $0x938] sm:$0xff]
    %v358 = vld [vmem:[#allocation6 + $0x940] sm:$0xff]
    %v359 = vld [vmem:[#allocation6 + $0x948] sm:$0xff]
    %v360 = vld [vmem:[#allocation6 + $0x950] sm:$0xff]
    %v361 = vld [vmem:[#allocation6 + $0x958] sm:$0xff]
    %v362 = vld [vmem:[#allocation6 + $0x960] sm:$0xff]
    %v363 = vld [vmem:[#allocation6 + $0x968] sm:$0xff]
    %v364 = vld [vmem:[#allocation6 + $0x970] sm:$0xff]
    %v365 = vld [vmem:[#allocation6 + $0x978] sm:$0xff]
    %v366 = vld [vmem:[#allocation6 + $0x980] sm:$0xff]
    %v367 = vld [vmem:[#allocation6 + $0x988] sm:$0xff]
    %v368 = vld [vmem:[#allocation6 + $0x990] sm:$0xff]
    %v369 = vld [vmem:[#allocation6 + $0x998] sm:$0xff]
    %v370 = vld [vmem:[#allocation6 + $0x9a0] sm:$0xff]
    %v371 = vld [vmem:[#allocation6 + $0x9a8] sm:$0xff]
    %v372 = vld [vmem:[#allocation6 + $0x9b0] sm:$0xff]
    %v373 = vld [vmem:[#allocation6 + $0x9b8] sm:$0xff]
    %v374 = vld [vmem:[#allocation6 + $0x9c0] sm:$0xff]
    %v375 = vld [vmem:[#allocation6 + $0x9c8] sm:$0xff]
    %v376 = vld [vmem:[#allocation6 + $0x9d0] sm:$0xff]
    %v377 = vld [vmem:[#allocation6 + $0x9d8] sm:$0xff]
    %v378 = vld [vmem:[#allocation6 + $0x9e0] sm:$0xff]
    %v379 = vld [vmem:[#allocation6 + $0x9e8] sm:$0xff]
    %v380 = vld [vmem:[#allocation6 + $0x9f0] sm:$0xff]
    %v381 = vld [vmem:[#allocation6 + $0x9f8] sm:$0xff]
    %v382 = vld [vmem:[#allocation6 + $0xa00] sm:$0xff]
    %v383 = vld [vmem:[#allocation6 + $0xa08] sm:$0xff]
    %v384 = vld [vmem:[#allocation6 + $0xa10] sm:$0xff]
    %v385 = vld [vmem:[#allocation6 + $0xa18] sm:$0xff]
    %v386 = vld [vmem:[#allocation6 + $0xa20] sm:$0xff]
    %v387 = vld [vmem:[#allocation6 + $0xa28] sm:$0xff]
    %v388 = vld [vmem:[#allocation6 + $0xa30] sm:$0xff]
    %v389 = vld [vmem:[#allocation6 + $0xa38] sm:$0xff]
    %v390 = vld [vmem:[#allocation6 + $0xa40] sm:$0xff]
    %v391 = vld [vmem:[#allocation6 + $0xa48] sm:$0xff]
    %v392 = vld [vmem:[#allocation6 + $0xa50] sm:$0xff]
    %v393 = vld [vmem:[#allocation6 + $0xa58] sm:$0xff]
    %v394 = vld [vmem:[#allocation6 + $0xa60] sm:$0xff]
    %v395 = vld [vmem:[#allocation6 + $0xa68] sm:$0xff]
    %v396 = vld [vmem:[#allocation6 + $0xa70] sm:$0xff]
    %v397 = vld [vmem:[#allocation6 + $0xa78] sm:$0xff]
    %v398 = vld [vmem:[#allocation6 + $0xa80] sm:$0xff]
    %v399 = vld [vmem:[#allocation6 + $0xa88] sm:$0xff]
    %v400 = vld [vmem:[#allocation6 + $0xa90] sm:$0xff]
    %v401 = vld [vmem:[#allocation6 + $0xa98] sm:$0xff]
    %v402 = vld [vmem:[#allocation6 + $0xaa0] sm:$0xff]
    %v403 = vld [vmem:[#allocation6 + $0xaa8] sm:$0xff]
    %v404 = vld [vmem:[#allocation6 + $0xab0] sm:$0xff]
    %v405 = vld [vmem:[#allocation6 + $0xab8] sm:$0xff]
    %v406 = vld [vmem:[#allocation6 + $0xac0] sm:$0xff]
    %v407 = vld [vmem:[#allocation6 + $0xac8] sm:$0xff]
    %v408 = vld [vmem:[#allocation6 + $0xad0] sm:$0xff]
    %v409 = vld [vmem:[#allocation6 + $0xad8] sm:$0xff]
    %v410 = vld [vmem:[#allocation6 + $0xae0] sm:$0xff]
    %v411 = vld [vmem:[#allocation6 + $0xae8] sm:$0xff]
    %v412 = vld [vmem:[#allocation6 + $0xaf0] sm:$0xff]
    %v413 = vld [vmem:[#allocation6 + $0xaf8] sm:$0xff]
    %v414 = vld [vmem:[#allocation6 + $0xb00] sm:$0xff]
    %v415 = vld [vmem:[#allocation6 + $0xb08] sm:$0xff]
    %v416 = vld [vmem:[#allocation6 + $0xb10] sm:$0xff]
    %v417 = vld [vmem:[#allocation6 + $0xb18] sm:$0xff]
    %v418 = vld [vmem:[#allocation6 + $0xb20] sm:$0xff]
    %v419 = vld [vmem:[#allocation6 + $0xb28] sm:$0xff]
    %v420 = vld [vmem:[#allocation6 + $0xb30] sm:$0xff]
    %v421 = vld [vmem:[#allocation6 + $0xb38] sm:$0xff]
    %v422 = vld [vmem:[#allocation6 + $0xb40] sm:$0xff]
    %v423 = vld [vmem:[#allocation6 + $0xb48] sm:$0xff]
    %v424 = vld [vmem:[#allocation6 + $0xb50] sm:$0xff]
    %v425 = vld [vmem:[#allocation6 + $0xb58] sm:$0xff]
    %v426 = vld [vmem:[#allocation6 + $0xb60] sm:$0xff]
    %v427 = vld [vmem:[#allocation6 + $0xb68] sm:$0xff]
    %v428 = vld [vmem:[#allocation6 + $0xb70] sm:$0xff]
    %v429 = vld [vmem:[#allocation6 + $0xb78] sm:$0xff]
    %v430 = vld [vmem:[#allocation6 + $0xb80] sm:$0xff]
    %v431 = vld [vmem:[#allocation6 + $0xb88] sm:$0xff]
    %v432 = vld [vmem:[#allocation6 + $0xb90] sm:$0xff]
    %v433 = vld [vmem:[#allocation6 + $0xb98] sm:$0xff]
    %v434 = vld [vmem:[#allocation6 + $0xba0] sm:$0xff]
    %v435 = vld [vmem:[#allocation6 + $0xba8] sm:$0xff]
    %v436 = vld [vmem:[#allocation6 + $0xbb0] sm:$0xff]
    %v437 = vld [vmem:[#allocation6 + $0xbb8] sm:$0xff]
    %v438 = vld [vmem:[#allocation6 + $0xbc0] sm:$0xff]
    %v439 = vld [vmem:[#allocation6 + $0xbc8] sm:$0xff]
    %v440 = vld [vmem:[#allocation6 + $0xbd0] sm:$0xff]
    %v441 = vld [vmem:[#allocation6 + $0xbd8] sm:$0xff]
    %v442 = vld [vmem:[#allocation6 + $0xbe0] sm:$0xff]
    %v443 = vld [vmem:[#allocation6 + $0xbe8] sm:$0xff]
    %v444 = vld [vmem:[#allocation6 + $0xbf0] sm:$0xff]
    %v445 = vld [vmem:[#allocation6 + $0xbf8] sm:$0xff]
    %v446 = vld [vmem:[#allocation6 + $0xc00] sm:$0xff]
    %v447 = vld [vmem:[#allocation6 + $0xc08] sm:$0xff]
    %v448 = vld [vmem:[#allocation6 + $0xc10] sm:$0xff]
    %v449 = vld [vmem:[#allocation6 + $0xc18] sm:$0xff]
    %v450 = vld [vmem:[#allocation6 + $0xc20] sm:$0xff]
    %v451 = vld [vmem:[#allocation6 + $0xc28] sm:$0xff]
    %v452 = vld [vmem:[#allocation6 + $0xc30] sm:$0xff]
    %v453 = vld [vmem:[#allocation6 + $0xc38] sm:$0xff]
    %v454 = vld [vmem:[#allocation6 + $0xc40] sm:$0xff]
    %v455 = vld [vmem:[#allocation6 + $0xc48] sm:$0xff]
    %v456 = vld [vmem:[#allocation6 + $0xc50] sm:$0xff]
    %v457 = vld [vmem:[#allocation6 + $0xc58] sm:$0xff]
    %v458 = vld [vmem:[#allocation6 + $0xc60] sm:$0xff]
    %v459 = vld [vmem:[#allocation6 + $0xc68] sm:$0xff]
    %v460 = vld [vmem:[#allocation6 + $0xc70] sm:$0xff]
    %v461 = vld [vmem:[#allocation6 + $0xc78] sm:$0xff]
    %v462 = vld [vmem:[#allocation6 + $0xc80] sm:$0xff]
    %v463 = vld [vmem:[#allocation6 + $0xc88] sm:$0xff]
    %v464 = vld [vmem:[#allocation6 + $0xc90] sm:$0xff]
    %v465 = vld [vmem:[#allocation6 + $0xc98] sm:$0xff]
    %v466 = vld [vmem:[#allocation6 + $0xca0] sm:$0xff]
    %v467 = vld [vmem:[#allocation6 + $0xca8] sm:$0xff]
    %v468 = vld [vmem:[#allocation6 + $0xcb0] sm:$0xff]
    %v469 = vld [vmem:[#allocation6 + $0xcb8] sm:$0xff]
    %v470 = vld [vmem:[#allocation6 + $0xcc0] sm:$0xff]
    %v471 = vld [vmem:[#allocation6 + $0xcc8] sm:$0xff]
    %v472 = vld [vmem:[#allocation6 + $0xcd0] sm:$0xff]
    %v473 = vld [vmem:[#allocation6 + $0xcd8] sm:$0xff]
    %v474 = vld [vmem:[#allocation6 + $0xce0] sm:$0xff]
    %v475 = vld [vmem:[#allocation6 + $0xce8] sm:$0xff]
    %v476 = vld [vmem:[#allocation6 + $0xcf0] sm:$0xff]
    %v477 = vld [vmem:[#allocation6 + $0xcf8] sm:$0xff]
    %v478 = vld [vmem:[#allocation6 + $0xd00] sm:$0xff]
    %v479 = vld [vmem:[#allocation6 + $0xd08] sm:$0xff]
    %v480 = vld [vmem:[#allocation6 + $0xd10] sm:$0xff]
    %v481 = vld [vmem:[#allocation6 + $0xd18] sm:$0xff]
    %v482 = vld [vmem:[#allocation6 + $0xd20] sm:$0xff]
    %v483 = vld [vmem:[#allocation6 + $0xd28] sm:$0xff]
    %v484 = vld [vmem:[#allocation6 + $0xd30] sm:$0xff]
    %v485 = vld [vmem:[#allocation6 + $0xd38] sm:$0xff]
    %v486 = vld [vmem:[#allocation6 + $0xd40] sm:$0xff]
    %v487 = vld [vmem:[#allocation6 + $0xd48] sm:$0xff]
    %v488 = vld [vmem:[#allocation6 + $0xd50] sm:$0xff]
    %v489 = vld [vmem:[#allocation6 + $0xd58] sm:$0xff]
    %v490 = vld [vmem:[#allocation6 + $0xd60] sm:$0xff]
    %v491 = vld [vmem:[#allocation6 + $0xd68] sm:$0xff]
    %v492 = vld [vmem:[#allocation6 + $0xd70] sm:$0xff]
    %v493 = vld [vmem:[#allocation6 + $0xd78] sm:$0xff]
    %v494 = vld [vmem:[#allocation6 + $0xd80] sm:$0xff]
    %v495 = vld [vmem:[#allocation6 + $0xd88] sm:$0xff]
    %v496 = vld [vmem:[#allocation6 + $0xd90] sm:$0xff]
    %v497 = vld [vmem:[#allocation6 + $0xd98] sm:$0xff]
    %v498 = vld [vmem:[#allocation6 + $0xda0] sm:$0xff]
    %v499 = vld [vmem:[#allocation6 + $0xda8] sm:$0xff]
    %v500 = vld [vmem:[#allocation6 + $0xdb0] sm:$0xff]
    %v501 = vld [vmem:[#allocation6 + $0xdb8] sm:$0xff]
    %v502 = vld [vmem:[#allocation6 + $0xdc0] sm:$0xff]
    %v503 = vld [vmem:[#allocation6 + $0xdc8] sm:$0xff]
    %v504 = vld [vmem:[#allocation6 + $0xdd0] sm:$0xff]
    %v505 = vld [vmem:[#allocation6 + $0xdd8] sm:$0xff]
    %v506 = vld [vmem:[#allocation6 + $0xde0] sm:$0xff]
    %v507 = vld [vmem:[#allocation6 + $0xde8] sm:$0xff]
    %v508 = vld [vmem:[#allocation6 + $0xdf0] sm:$0xff]
    %v509 = vld [vmem:[#allocation6 + $0xdf8] sm:$0xff]
    %v510 = vld [vmem:[#allocation6 + $0xe00] sm:$0xff]
    %v511 = vld [vmem:[#allocation6 + $0xe08] sm:$0xff]
    %v512 = vld [vmem:[#allocation6 + $0xe10] sm:$0xff]
    %v513 = vld [vmem:[#allocation6 + $0xe18] sm:$0xff]
    %v514 = vld [vmem:[#allocation6 + $0xe20] sm:$0xff]
    %v515 = vld [vmem:[#allocation6 + $0xe28] sm:$0xff]
    %v516 = vld [vmem:[#allocation6 + $0xe30] sm:$0xff]
    %v517 = vld [vmem:[#allocation6 + $0xe38] sm:$0xff]
    %v518 = vld [vmem:[#allocation6 + $0xe40] sm:$0xff]
    %v519 = vld [vmem:[#allocation6 + $0xe48] sm:$0xff]
    %v520 = vld [vmem:[#allocation6 + $0xe50] sm:$0xff]
    %v521 = vld [vmem:[#allocation6 + $0xe58] sm:$0xff]
    %v522 = vld [vmem:[#allocation6 + $0xe60] sm:$0xff]
    %v523 = vld [vmem:[#allocation6 + $0xe68] sm:$0xff]
    %v524 = vld [vmem:[#allocation6 + $0xe70] sm:$0xff]
    %v525 = vld [vmem:[#allocation6 + $0xe78] sm:$0xff]
    %v526 = vld [vmem:[#allocation6 + $0xe80] sm:$0xff]
    %v527 = vld [vmem:[#allocation6 + $0xe88] sm:$0xff]
    %v528 = vld [vmem:[#allocation6 + $0xe90] sm:$0xff]
    %v529 = vld [vmem:[#allocation6 + $0xe98] sm:$0xff]
    %v530 = vld [vmem:[#allocation6 + $0xea0] sm:$0xff]
    %v531 = vld [vmem:[#allocation6 + $0xea8] sm:$0xff]
    %v532 = vld [vmem:[#allocation6 + $0xeb0] sm:$0xff]
    %v533 = vld [vmem:[#allocation6 + $0xeb8] sm:$0xff]
    %v534 = vld [vmem:[#allocation6 + $0xec0] sm:$0xff]
    %v535 = vld [vmem:[#allocation6 + $0xec8] sm:$0xff]
    %v536 = vld [vmem:[#allocation6 + $0xed0] sm:$0xff]
    %v537 = vld [vmem:[#allocation6 + $0xed8] sm:$0xff]
    %v538 = vld [vmem:[#allocation6 + $0xee0] sm:$0xff]
    %v539 = vld [vmem:[#allocation6 + $0xee8] sm:$0xff]
    %v540 = vld [vmem:[#allocation6 + $0xef0] sm:$0xff]
    %v541 = vld [vmem:[#allocation6 + $0xef8] sm:$0xff]
    %v542 = vld [vmem:[#allocation6 + $0xf00] sm:$0xff]
    %v543 = vld [vmem:[#allocation6 + $0xf08] sm:$0xff]
    %v544 = vld [vmem:[#allocation6 + $0xf10] sm:$0xff]
    %v545 = vld [vmem:[#allocation6 + $0xf18] sm:$0xff]
    %v546 = vld [vmem:[#allocation6 + $0xf20] sm:$0xff]
    %v547 = vld [vmem:[#allocation6 + $0xf28] sm:$0xff]
    %v548 = vld [vmem:[#allocation6 + $0xf30] sm:$0xff]
    %v549 = vld [vmem:[#allocation6 + $0xf38] sm:$0xff]
    %v550 = vld [vmem:[#allocation6 + $0xf40] sm:$0xff]
    %v551 = vld [vmem:[#allocation6 + $0xf48] sm:$0xff]
    %v552 = vld [vmem:[#allocation6 + $0xf50] sm:$0xff]
    %v553 = vld [vmem:[#allocation6 + $0xf58] sm:$0xff]
    %v554 = vld [vmem:[#allocation6 + $0xf60] sm:$0xff]
    %v555 = vld [vmem:[#allocation6 + $0xf68] sm:$0xff]
    %v556 = vld [vmem:[#allocation6 + $0xf70] sm:$0xff]
    %v557 = vld [vmem:[#allocation6 + $0xf78] sm:$0xff]
    %v558 = vld [vmem:[#allocation6 + $0xf80] sm:$0xff]
    %v559 = vld [vmem:[#allocation6 + $0xf88] sm:$0xff]
    %v560 = vld [vmem:[#allocation6 + $0xf90] sm:$0xff]
    %v561 = vld [vmem:[#allocation6 + $0xf98] sm:$0xff]
    %v562 = vld [vmem:[#allocation6 + $0xfa0] sm:$0xff]
    %v563 = vld [vmem:[#allocation6 + $0xfa8] sm:$0xff]
    %v564 = vld [vmem:[#allocation6 + $0xfb0] sm:$0xff]
    %v565 = vld [vmem:[#allocation6 + $0xfb8] sm:$0xff]
    %v566 = vld [vmem:[#allocation6 + $0xfc0] sm:$0xff]
    %v567 = vld [vmem:[#allocation6 + $0xfc8] sm:$0xff]
    %v568 = vld [vmem:[#allocation6 + $0xfd0] sm:$0xff]
    %v569 = vld [vmem:[#allocation6 + $0xfd8] sm:$0xff]
    %v570 = vld [vmem:[#allocation6 + $0xfe0] sm:$0xff]
    %v571 = vld [vmem:[#allocation6 + $0xfe8] sm:$0xff]
    %v572 = vld [vmem:[#allocation6 + $0xff0] sm:$0xff]
    %v573 = vld [vmem:[#allocation6 + $0xff8] sm:$0xff]
    %v574 = vld [vmem:[#allocation6 + $0x1000] sm:$0xff]
    %v575 = vld [vmem:[#allocation6 + $0x1008] sm:$0xff]
    %v576 = vld [vmem:[#allocation6 + $0x1010] sm:$0xff]
    %v577 = vld [vmem:[#allocation6 + $0x1018] sm:$0xff]
    %v578 = vld [vmem:[#allocation6 + $0x1020] sm:$0xff]
    %v579 = vld [vmem:[#allocation6 + $0x1028] sm:$0xff]
    %v580 = vld [vmem:[#allocation6 + $0x1030] sm:$0xff]
    %v581 = vld [vmem:[#allocation6 + $0x1038] sm:$0xff]
    %v582 = vld [vmem:[#allocation6 + $0x1040] sm:$0xff]
    %v583 = vld [vmem:[#allocation6 + $0x1048] sm:$0xff]
    %v584 = vld [vmem:[#allocation6 + $0x1050] sm:$0xff]
    %v585 = vld [vmem:[#allocation6 + $0x1058] sm:$0xff]
    %v586 = vld [vmem:[#allocation6 + $0x1060] sm:$0xff]
    %v587 = vld [vmem:[#allocation6 + $0x1068] sm:$0xff]
    %v588 = vld [vmem:[#allocation6 + $0x1070] sm:$0xff]
    %v589 = vld [vmem:[#allocation6 + $0x1078] sm:$0xff]
    %v590 = vld [vmem:[#allocation6 + $0x1080] sm:$0xff]
    %v591 = vld [vmem:[#allocation6 + $0x1088] sm:$0xff]
    %v592 = vld [vmem:[#allocation6 + $0x1090] sm:$0xff]
    %v593 = vld [vmem:[#allocation6 + $0x1098] sm:$0xff]
    %v594 = vld [vmem:[#allocation6 + $0x10a0] sm:$0xff]
    %v595 = vld [vmem:[#allocation6 + $0x10a8] sm:$0xff]
    %v596 = vld [vmem:[#allocation6 + $0x10b0] sm:$0xff]
    %v597 = vld [vmem:[#allocation6 + $0x10b8] sm:$0xff]
    %v598 = vld [vmem:[#allocation6 + $0x10c0] sm:$0xff]
    %v599 = vld [vmem:[#allocation6 + $0x10c8] sm:$0xff]
    %v600 = vld [vmem:[#allocation6 + $0x10d0] sm:$0xff]
    %v601 = vld [vmem:[#allocation6 + $0x10d8] sm:$0xff]
    %v602 = vld [vmem:[#allocation6 + $0x10e0] sm:$0xff]
    %v603 = vld [vmem:[#allocation6 + $0x10e8] sm:$0xff]
    %v604 = vld [vmem:[#allocation6 + $0x10f0] sm:$0xff]
    %v605 = vld [vmem:[#allocation6 + $0x10f8] sm:$0xff]
    %v606 = vld [vmem:[#allocation6 + $0x1100] sm:$0xff]
    %v607 = vld [vmem:[#allocation6 + $0x1108] sm:$0xff]
    %v608 = vld [vmem:[#allocation6 + $0x1110] sm:$0xff]
    %v609 = vld [vmem:[#allocation6 + $0x1118] sm:$0xff]
    %v610 = vld [vmem:[#allocation6 + $0x1120] sm:$0xff]
    %v611 = vld [vmem:[#allocation6 + $0x1128] sm:$0xff]
    %v612 = vld [vmem:[#allocation6 + $0x1130] sm:$0xff]
    %v613 = vld [vmem:[#allocation6 + $0x1138] sm:$0xff]
    %v614 = vld [vmem:[#allocation6 + $0x1140] sm:$0xff]
    %v615 = vld [vmem:[#allocation6 + $0x1148] sm:$0xff]
    %v616 = vld [vmem:[#allocation6 + $0x1150] sm:$0xff]
    %v617 = vld [vmem:[#allocation6 + $0x1158] sm:$0xff]
    %v618 = vld [vmem:[#allocation6 + $0x1160] sm:$0xff]
    %v619 = vld [vmem:[#allocation6 + $0x1168] sm:$0xff]
    %v620 = vld [vmem:[#allocation6 + $0x1170] sm:$0xff]
    %v621 = vld [vmem:[#allocation6 + $0x1178] sm:$0xff]
    %v622 = vld [vmem:[#allocation6 + $0x1180] sm:$0xff]
    %v623 = vld [vmem:[#allocation6 + $0x1188] sm:$0xff]
    %v624 = vld [vmem:[#allocation6 + $0x1190] sm:$0xff]
    %v625 = vld [vmem:[#allocation6 + $0x1198] sm:$0xff]
    %v626 = vld [vmem:[#allocation6 + $0x11a0] sm:$0xff]
    %v627 = vld [vmem:[#allocation6 + $0x11a8] sm:$0xff]
    %v628 = vld [vmem:[#allocation6 + $0x11b0] sm:$0xff]
    %v629 = vld [vmem:[#allocation6 + $0x11b8] sm:$0xff]
    %v630 = vld [vmem:[#allocation6 + $0x11c0] sm:$0xff]
    %v631 = vld [vmem:[#allocation6 + $0x11c8] sm:$0xff]
    %v632 = vld [vmem:[#allocation6 + $0x11d0] sm:$0xff]
    %v633 = vld [vmem:[#allocation6 + $0x11d8] sm:$0xff]
    %v634 = vld [vmem:[#allocation6 + $0x11e0] sm:$0xff]
    %v635 = vld [vmem:[#allocation6 + $0x11e8] sm:$0xff]
    %v636 = vld [vmem:[#allocation6 + $0x11f0] sm:$0xff]
    %v637 = vld [vmem:[#allocation6 + $0x11f8] sm:$0xff]
    %v638 = vld [vmem:[#allocation6 + $0x1200] sm:$0xff]
    %v639 = vld [vmem:[#allocation6 + $0x1208] sm:$0xff]
    %v640 = vld [vmem:[#allocation6 + $0x1210] sm:$0xff]
    %v641 = vld [vmem:[#allocation6 + $0x1218] sm:$0xff]
    %v642 = vld [vmem:[#allocation6 + $0x1220] sm:$0xff]
    %v643 = vld [vmem:[#allocation6 + $0x1228] sm:$0xff]
    %v644 = vld [vmem:[#allocation6 + $0x1230] sm:$0xff]
    %v645 = vld [vmem:[#allocation6 + $0x1238] sm:$0xff]
    %v646 = vld [vmem:[#allocation6 + $0x1240] sm:$0xff]
    %v647 = vld [vmem:[#allocation6 + $0x1248] sm:$0xff]
    %v648 = vld [vmem:[#allocation6 + $0x1250] sm:$0xff]
    %v649 = vld [vmem:[#allocation6 + $0x1258] sm:$0xff]
    %v650 = vld [vmem:[#allocation6 + $0x1260] sm:$0xff]
    %v651 = vld [vmem:[#allocation6 + $0x1268] sm:$0xff]
    %v652 = vld [vmem:[#allocation6 + $0x1270] sm:$0xff]
    %v653 = vld [vmem:[#allocation6 + $0x1278] sm:$0xff]
    %v654 = vld [vmem:[#allocation6 + $0x1280] sm:$0xff]
    %v655 = vld [vmem:[#allocation6 + $0x1288] sm:$0xff]
    %v656 = vld [vmem:[#allocation6 + $0x1290] sm:$0xff]
    %v657 = vld [vmem:[#allocation6 + $0x1298] sm:$0xff]
    %v658 = vld [vmem:[#allocation6 + $0x12a0] sm:$0xff]
    %v659 = vld [vmem:[#allocation6 + $0x12a8] sm:$0xff]
    %v660 = vld [vmem:[#allocation6 + $0x12b0] sm:$0xff]
    %v661 = vld [vmem:[#allocation6 + $0x12b8] sm:$0xff]
    %v662 = vld [vmem:[#allocation6 + $0x12c0] sm:$0xff]
    %v663 = vld [vmem:[#allocation6 + $0x12c8] sm:$0xff]
    %v664 = vld [vmem:[#allocation6 + $0x12d0] sm:$0xff]
    %v665 = vld [vmem:[#allocation6 + $0x12d8] sm:$0xff]
    %v666 = vld [vmem:[#allocation6 + $0x12e0] sm:$0xff]
    %v667 = vld [vmem:[#allocation6 + $0x12e8] sm:$0xff]
    %v668 = vld [vmem:[#allocation6 + $0x12f0] sm:$0xff]
    %v669 = vld [vmem:[#allocation6 + $0x12f8] sm:$0xff]
    %v670 = vld [vmem:[#allocation6 + $0x1300] sm:$0xff]
    %v671 = vld [vmem:[#allocation6 + $0x1308] sm:$0xff]
    %v672 = vld [vmem:[#allocation6 + $0x1310] sm:$0xff]
    %v673 = vld [vmem:[#allocation6 + $0x1318] sm:$0xff]
    %v674 = vld [vmem:[#allocation6 + $0x1320] sm:$0xff]
    %v675 = vld [vmem:[#allocation6 + $0x1328] sm:$0xff]
    %v676 = vld [vmem:[#allocation6 + $0x1330] sm:$0xff]
    %v677 = vld [vmem:[#allocation6 + $0x1338] sm:$0xff]
    %v678 = vld [vmem:[#allocation6 + $0x1340] sm:$0xff]
    %v679 = vld [vmem:[#allocation6 + $0x1348] sm:$0xff]
    %v680 = vld [vmem:[#allocation6 + $0x1350] sm:$0xff]
    %v681 = vld [vmem:[#allocation6 + $0x1358] sm:$0xff]
    %v682 = vld [vmem:[#allocation6 + $0x1360] sm:$0xff]
    %v683 = vld [vmem:[#allocation6 + $0x1368] sm:$0xff]
    %v684 = vld [vmem:[#allocation6 + $0x1370] sm:$0xff]
    %v685 = vld [vmem:[#allocation6 + $0x1378] sm:$0xff]
    %v686 = vld [vmem:[#allocation6 + $0x1380] sm:$0xff]
    %v687 = vld [vmem:[#allocation6 + $0x1388] sm:$0xff]
    %v688 = vld [vmem:[#allocation6 + $0x1390] sm:$0xff]
    %v689 = vld [vmem:[#allocation6 + $0x1398] sm:$0xff]
    %v690 = vld [vmem:[#allocation6 + $0x13a0] sm:$0xff]
    %v691 = vld [vmem:[#allocation6 + $0x13a8] sm:$0xff]
    %v692 = vld [vmem:[#allocation6 + $0x13b0] sm:$0xff]
    %v693 = vld [vmem:[#allocation6 + $0x13b8] sm:$0xff]
    %v694 = vld [vmem:[#allocation6 + $0x13c0] sm:$0xff]
    %v695 = vld [vmem:[#allocation6 + $0x13c8] sm:$0xff]
    %v696 = vld [vmem:[#allocation6 + $0x13d0] sm:$0xff]
    %v697 = vld [vmem:[#allocation6 + $0x13d8] sm:$0xff]
    %v698 = vld [vmem:[#allocation6 + $0x13e0] sm:$0xff]
    %v699 = vld [vmem:[#allocation6 + $0x13e8] sm:$0xff]
    %v700 = vld [vmem:[#allocation6 + $0x13f0] sm:$0xff]
    %v701 = vld [vmem:[#allocation6 + $0x13f8] sm:$0xff]
    %v702 = vld [vmem:[#allocation6 + $0x1400] sm:$0xff]
    %v703 = vld [vmem:[#allocation6 + $0x1408] sm:$0xff]
    %v704 = vld [vmem:[#allocation6 + $0x1410] sm:$0xff]
    %v705 = vld [vmem:[#allocation6 + $0x1418] sm:$0xff]
    %v706 = vld [vmem:[#allocation6 + $0x1420] sm:$0xff]
    %v707 = vld [vmem:[#allocation6 + $0x1428] sm:$0xff]
    %v708 = vld [vmem:[#allocation6 + $0x1430] sm:$0xff]
    %v709 = vld [vmem:[#allocation6 + $0x1438] sm:$0xff]
    %v710 = vld [vmem:[#allocation6 + $0x1440] sm:$0xff]
    %v711 = vld [vmem:[#allocation6 + $0x1448] sm:$0xff]
    %v712 = vld [vmem:[#allocation6 + $0x1450] sm:$0xff]
    %v713 = vld [vmem:[#allocation6 + $0x1458] sm:$0xff]
    %v714 = vld [vmem:[#allocation6 + $0x1460] sm:$0xff]
    %v715 = vld [vmem:[#allocation6 + $0x1468] sm:$0xff]
    %v716 = vld [vmem:[#allocation6 + $0x1470] sm:$0xff]
    %v717 = vld [vmem:[#allocation6 + $0x1478] sm:$0xff]
    %v718 = vld [vmem:[#allocation6 + $0x1480] sm:$0xff]
    %v719 = vld [vmem:[#allocation6 + $0x1488] sm:$0xff]
    %v720 = vld [vmem:[#allocation6 + $0x1490] sm:$0xff]
    %v721 = vld [vmem:[#allocation6 + $0x1498] sm:$0xff]
    %v722 = vld [vmem:[#allocation6 + $0x14a0] sm:$0xff]
    %v723 = vld [vmem:[#allocation6 + $0x14a8] sm:$0xff]
    %v724 = vld [vmem:[#allocation6 + $0x14b0] sm:$0xff]
    %v725 = vld [vmem:[#allocation6 + $0x14b8] sm:$0xff]
    %v726 = vld [vmem:[#allocation6 + $0x14c0] sm:$0xff]
    %v727 = vld [vmem:[#allocation6 + $0x14c8] sm:$0xff]
    %v728 = vld [vmem:[#allocation6 + $0x14d0] sm:$0xff]
    %v729 = vld [vmem:[#allocation6 + $0x14d8] sm:$0xff]
    %v730 = vld [vmem:[#allocation6 + $0x14e0] sm:$0xff]
    %v731 = vld [vmem:[#allocation6 + $0x14e8] sm:$0xff]
    %v732 = vld [vmem:[#allocation6 + $0x14f0] sm:$0xff]
    %v733 = vld [vmem:[#allocation6 + $0x14f8] sm:$0xff]
    %v734 = vld [vmem:[#allocation6 + $0x1500] sm:$0xff]
    %v735 = vld [vmem:[#allocation6 + $0x1508] sm:$0xff]
    %v736 = vld [vmem:[#allocation6 + $0x1510] sm:$0xff]
    %v737 = vld [vmem:[#allocation6 + $0x1518] sm:$0xff]
    %v738 = vld [vmem:[#allocation6 + $0x1520] sm:$0xff]
    %v739 = vld [vmem:[#allocation6 + $0x1528] sm:$0xff]
    %v740 = vld [vmem:[#allocation6 + $0x1530] sm:$0xff]
    %v741 = vld [vmem:[#allocation6 + $0x1538] sm:$0xff]
    %v742 = vld [vmem:[#allocation6 + $0x1540] sm:$0xff]
    %v743 = vld [vmem:[#allocation6 + $0x1548] sm:$0xff]
    %v744 = vld [vmem:[#allocation6 + $0x1550] sm:$0xff]
    %v745 = vld [vmem:[#allocation6 + $0x1558] sm:$0xff]
    %v746 = vld [vmem:[#allocation6 + $0x1560] sm:$0xff]
    %v747 = vld [vmem:[#allocation6 + $0x1568] sm:$0xff]
    %v748 = vld [vmem:[#allocation6 + $0x1570] sm:$0xff]
    %v749 = vld [vmem:[#allocation6 + $0x1578] sm:$0xff]
    %v750 = vld [vmem:[#allocation6 + $0x1580] sm:$0xff]
    %v751 = vld [vmem:[#allocation6 + $0x1588] sm:$0xff]
    %v752 = vld [vmem:[#allocation6 + $0x1590] sm:$0xff]
    %v753 = vld [vmem:[#allocation6 + $0x1598] sm:$0xff]
    %v754 = vld [vmem:[#allocation6 + $0x15a0] sm:$0xff]
    %v755 = vld [vmem:[#allocation6 + $0x15a8] sm:$0xff]
    %v756 = vld [vmem:[#allocation6 + $0x15b0] sm:$0xff]
    %v757 = vld [vmem:[#allocation6 + $0x15b8] sm:$0xff]
    %v758 = vld [vmem:[#allocation6 + $0x15c0] sm:$0xff]
    %v759 = vld [vmem:[#allocation6 + $0x15c8] sm:$0xff]
    %v760 = vld [vmem:[#allocation6 + $0x15d0] sm:$0xff]
    %v761 = vld [vmem:[#allocation6 + $0x15d8] sm:$0xff]
    %v762 = vld [vmem:[#allocation6 + $0x15e0] sm:$0xff]
    %v763 = vld [vmem:[#allocation6 + $0x15e8] sm:$0xff]
    %v764 = vld [vmem:[#allocation6 + $0x15f0] sm:$0xff]
    %v765 = vld [vmem:[#allocation6 + $0x15f8] sm:$0xff]
    %v766 = vld [vmem:[#allocation6 + $0x1600] sm:$0xff]
    %v767 = vld [vmem:[#allocation6 + $0x1608] sm:$0xff]
    %v768 = vld [vmem:[#allocation6 + $0x1610] sm:$0xff]
    %v769 = vld [vmem:[#allocation6 + $0x1618] sm:$0xff]
    %v770 = vld [vmem:[#allocation6 + $0x1620] sm:$0xff]
    %v771 = vld [vmem:[#allocation6 + $0x1628] sm:$0xff]
    %v772 = vld [vmem:[#allocation6 + $0x1630] sm:$0xff]
    %v773 = vld [vmem:[#allocation6 + $0x1638] sm:$0xff]
    %v774 = vld [vmem:[#allocation6 + $0x1640] sm:$0xff]
    %v775 = vld [vmem:[#allocation6 + $0x1648] sm:$0xff]
    %v776 = vld [vmem:[#allocation6 + $0x1650] sm:$0xff]
    %v777 = vld [vmem:[#allocation6 + $0x1658] sm:$0xff]
    %v778 = vld [vmem:[#allocation6 + $0x1660] sm:$0xff]
    %v779 = vld [vmem:[#allocation6 + $0x1668] sm:$0xff]
    %v780 = vld [vmem:[#allocation6 + $0x1670] sm:$0xff]
    %v781 = vld [vmem:[#allocation6 + $0x1678] sm:$0xff]
    %v782 = vld [vmem:[#allocation6 + $0x1680] sm:$0xff]
    %v783 = vld [vmem:[#allocation6 + $0x1688] sm:$0xff]
    %v784 = vld [vmem:[#allocation6 + $0x1690] sm:$0xff]
    %v785 = vld [vmem:[#allocation6 + $0x1698] sm:$0xff]
    %v786 = vld [vmem:[#allocation6 + $0x16a0] sm:$0xff]
    %v787 = vld [vmem:[#allocation6 + $0x16a8] sm:$0xff]
    %v788 = vld [vmem:[#allocation6 + $0x16b0] sm:$0xff]
    %v789 = vld [vmem:[#allocation6 + $0x16b8] sm:$0xff]
    %v790 = vld [vmem:[#allocation6 + $0x16c0] sm:$0xff]
    %v791 = vld [vmem:[#allocation6 + $0x16c8] sm:$0xff]
    %v792 = vld [vmem:[#allocation6 + $0x16d0] sm:$0xff]
    %v793 = vld [vmem:[#allocation6 + $0x16d8] sm:$0xff]
    %v794 = vld [vmem:[#allocation6 + $0x16e0] sm:$0xff]
    %v795 = vld [vmem:[#allocation6 + $0x16e8] sm:$0xff]
    %v796 = vld [vmem:[#allocation6 + $0x16f0] sm:$0xff]
    %v797 = vld [vmem:[#allocation6 + $0x16f8] sm:$0xff]
    %v798 = vld [vmem:[#allocation6 + $0x1700] sm:$0xff]
    %v799 = vld [vmem:[#allocation6 + $0x1708] sm:$0xff]
    %v800 = vld [vmem:[#allocation6 + $0x1710] sm:$0xff]
    %v801 = vld [vmem:[#allocation6 + $0x1718] sm:$0xff]
    %v802 = vld [vmem:[#allocation6 + $0x1720] sm:$0xff]
    %v803 = vld [vmem:[#allocation6 + $0x1728] sm:$0xff]
    %v804 = vld [vmem:[#allocation6 + $0x1730] sm:$0xff]
    %v805 = vld [vmem:[#allocation6 + $0x1738] sm:$0xff]
    %v806 = vld [vmem:[#allocation6 + $0x1740] sm:$0xff]
    %v807 = vld [vmem:[#allocation6 + $0x1748] sm:$0xff]
    %v808 = vld [vmem:[#allocation6 + $0x1750] sm:$0xff]
    %v809 = vld [vmem:[#allocation6 + $0x1758] sm:$0xff]
    %v810 = vld [vmem:[#allocation6 + $0x1760] sm:$0xff]
    %v811 = vld [vmem:[#allocation6 + $0x1768] sm:$0xff]
    %v812 = vld [vmem:[#allocation6 + $0x1770] sm:$0xff]
    %v813 = vld [vmem:[#allocation6 + $0x1778] sm:$0xff]
    %v814 = vld [vmem:[#allocation6 + $0x1780] sm:$0xff]
    %v815 = vld [vmem:[#allocation6 + $0x1788] sm:$0xff]
    %v816 = vld [vmem:[#allocation6 + $0x1790] sm:$0xff]
    %v817 = vld [vmem:[#allocation6 + $0x1798] sm:$0xff]
    %v818 = vld [vmem:[#allocation6 + $0x17a0] sm:$0xff]
    %v819 = vld [vmem:[#allocation6 + $0x17a8] sm:$0xff]
    %v820 = vld [vmem:[#allocation6 + $0x17b0] sm:$0xff]
    %v821 = vld [vmem:[#allocation6 + $0x17b8] sm:$0xff]
    %v822 = vld [vmem:[#allocation6 + $0x17c0] sm:$0xff]
    %v823 = vld [vmem:[#allocation6 + $0x17c8] sm:$0xff]
    %v824 = vld [vmem:[#allocation6 + $0x17d0] sm:$0xff]
    %v825 = vld [vmem:[#allocation6 + $0x17d8] sm:$0xff]
    %v826 = vld [vmem:[#allocation6 + $0x17e0] sm:$0xff]
    %v827 = vld [vmem:[#allocation6 + $0x17e8] sm:$0xff]
    %v828 = vld [vmem:[#allocation6 + $0x17f0] sm:$0xff]
    %v829 = vld [vmem:[#allocation6 + $0x17f8] sm:$0xff]
    %v830 = vld [vmem:[#allocation6 + $0x1800] sm:$0xff]
    %v831 = vld [vmem:[#allocation6 + $0x1808] sm:$0xff]
    %v832 = vld [vmem:[#allocation6 + $0x1810] sm:$0xff]
    %v833 = vld [vmem:[#allocation6 + $0x1818] sm:$0xff]
    %v834 = vld [vmem:[#allocation6 + $0x1820] sm:$0xff]
    %v835 = vld [vmem:[#allocation6 + $0x1828] sm:$0xff]
    %v836 = vld [vmem:[#allocation6 + $0x1830] sm:$0xff]
    %v837 = vld [vmem:[#allocation6 + $0x1838] sm:$0xff]
    %v838 = vld [vmem:[#allocation6 + $0x1840] sm:$0xff]
    %v839 = vld [vmem:[#allocation6 + $0x1848] sm:$0xff]
    %v840 = vld [vmem:[#allocation6 + $0x1850] sm:$0xff]
    %v841 = vld [vmem:[#allocation6 + $0x1858] sm:$0xff]
    %v842 = vld [vmem:[#allocation6 + $0x1860] sm:$0xff]
    %v843 = vld [vmem:[#allocation6 + $0x1868] sm:$0xff]
    %v844 = vld [vmem:[#allocation6 + $0x1870] sm:$0xff]
    %v845 = vld [vmem:[#allocation6 + $0x1878] sm:$0xff]
    %v846 = vld [vmem:[#allocation6 + $0x1880] sm:$0xff]
    %v847 = vld [vmem:[#allocation6 + $0x1888] sm:$0xff]
    %v848 = vld [vmem:[#allocation6 + $0x1890] sm:$0xff]
    %v849 = vld [vmem:[#allocation6 + $0x1898] sm:$0xff]
    %v850 = vld [vmem:[#allocation6 + $0x18a0] sm:$0xff]
    %v851 = vld [vmem:[#allocation6 + $0x18a8] sm:$0xff]
    %v852 = vld [vmem:[#allocation6 + $0x18b0] sm:$0xff]
    %v853 = vld [vmem:[#allocation6 + $0x18b8] sm:$0xff]
    %v854 = vld [vmem:[#allocation6 + $0x18c0] sm:$0xff]
    %v855 = vld [vmem:[#allocation6 + $0x18c8] sm:$0xff]
    %v856 = vld [vmem:[#allocation6 + $0x18d0] sm:$0xff]
    %v857 = vld [vmem:[#allocation6 + $0x18d8] sm:$0xff]
    %v858 = vld [vmem:[#allocation6 + $0x18e0] sm:$0xff]
    %v859 = vld [vmem:[#allocation6 + $0x18e8] sm:$0xff]
    %v860 = vld [vmem:[#allocation6 + $0x18f0] sm:$0xff]
    %v861 = vld [vmem:[#allocation6 + $0x18f8] sm:$0xff]
    %v862 = vld [vmem:[#allocation6 + $0x1900] sm:$0xff]
    %v863 = vld [vmem:[#allocation6 + $0x1908] sm:$0xff]
    %v864 = vld [vmem:[#allocation6 + $0x1910] sm:$0xff]
    %v865 = vld [vmem:[#allocation6 + $0x1918] sm:$0xff]
    %v866 = vld [vmem:[#allocation6 + $0x1920] sm:$0xff]
    %v867 = vld [vmem:[#allocation6 + $0x1928] sm:$0xff]
    %v868 = vld [vmem:[#allocation6 + $0x1930] sm:$0xff]
    %v869 = vld [vmem:[#allocation6 + $0x1938] sm:$0xff]
    %v870 = vld [vmem:[#allocation6 + $0x1940] sm:$0xff]
    %v871 = vld [vmem:[#allocation6 + $0x1948] sm:$0xff]
    %v872 = vld [vmem:[#allocation6 + $0x1950] sm:$0xff]
    %v873 = vld [vmem:[#allocation6 + $0x1958] sm:$0xff]
    %v874 = vld [vmem:[#allocation6 + $0x1960] sm:$0xff]
    %v875 = vld [vmem:[#allocation6 + $0x1968] sm:$0xff]
    %v876 = vld [vmem:[#allocation6 + $0x1970] sm:$0xff]
    %v877 = vld [vmem:[#allocation6 + $0x1978] sm:$0xff]
    %v878 = vld [vmem:[#allocation6 + $0x1980] sm:$0xff]
    %v879 = vld [vmem:[#allocation6 + $0x1988] sm:$0xff]
    %v880 = vld [vmem:[#allocation6 + $0x1990] sm:$0xff]
    %v881 = vld [vmem:[#allocation6 + $0x1998] sm:$0xff]
    %v882 = vld [vmem:[#allocation6 + $0x19a0] sm:$0xff]
    %v883 = vld [vmem:[#allocation6 + $0x19a8] sm:$0xff]
    %v884 = vld [vmem:[#allocation6 + $0x19b0] sm:$0xff]
    %v885 = vld [vmem:[#allocation6 + $0x19b8] sm:$0xff]
    %v886 = vld [vmem:[#allocation6 + $0x19c0] sm:$0xff]
    %v887 = vld [vmem:[#allocation6 + $0x19c8] sm:$0xff]
    %v888 = vld [vmem:[#allocation6 + $0x19d0] sm:$0xff]
    %v889 = vld [vmem:[#allocation6 + $0x19d8] sm:$0xff]
    %v890 = vld [vmem:[#allocation6 + $0x19e0] sm:$0xff]
    %v891 = vld [vmem:[#allocation6 + $0x19e8] sm:$0xff]
    %v892 = vld [vmem:[#allocation6 + $0x19f0] sm:$0xff]
    %v893 = vld [vmem:[#allocation6 + $0x19f8] sm:$0xff]
    %v894 = vld [vmem:[#allocation6 + $0x1a00] sm:$0xff]
    %v895 = vld [vmem:[#allocation6 + $0x1a08] sm:$0xff]
    %v896 = vld [vmem:[#allocation6 + $0x1a10] sm:$0xff]
    %v897 = vld [vmem:[#allocation6 + $0x1a18] sm:$0xff]
    %v898 = vld [vmem:[#allocation6 + $0x1a20] sm:$0xff]
    %v899 = vld [vmem:[#allocation6 + $0x1a28] sm:$0xff]
    %v900 = vld [vmem:[#allocation6 + $0x1a30] sm:$0xff]
    %v901 = vld [vmem:[#allocation6 + $0x1a38] sm:$0xff]
    %v902 = vld [vmem:[#allocation6 + $0x1a40] sm:$0xff]
    %v903 = vld [vmem:[#allocation6 + $0x1a48] sm:$0xff]
    %v904 = vld [vmem:[#allocation6 + $0x1a50] sm:$0xff]
    %v905 = vld [vmem:[#allocation6 + $0x1a58] sm:$0xff]
    %v906 = vld [vmem:[#allocation6 + $0x1a60] sm:$0xff]
    %v907 = vld [vmem:[#allocation6 + $0x1a68] sm:$0xff]
    %v908 = vld [vmem:[#allocation6 + $0x1a70] sm:$0xff]
    %v909 = vld [vmem:[#allocation6 + $0x1a78] sm:$0xff]
    %v910 = vld [vmem:[#allocation6 + $0x1a80] sm:$0xff]
    %v911 = vld [vmem:[#allocation6 + $0x1a88] sm:$0xff]
    %v912 = vld [vmem:[#allocation6 + $0x1a90] sm:$0xff]
    %v913 = vld [vmem:[#allocation6 + $0x1a98] sm:$0xff]
    %v914 = vld [vmem:[#allocation6 + $0x1aa0] sm:$0xff]
    %v915 = vld [vmem:[#allocation6 + $0x1aa8] sm:$0xff]
    %v916 = vld [vmem:[#allocation6 + $0x1ab0] sm:$0xff]
    %v917 = vld [vmem:[#allocation6 + $0x1ab8] sm:$0xff]
    %v918 = vld [vmem:[#allocation6 + $0x1ac0] sm:$0xff]
    %v919 = vld [vmem:[#allocation6 + $0x1ac8] sm:$0xff]
    %v920 = vld [vmem:[#allocation6 + $0x1ad0] sm:$0xff]
    %v921 = vld [vmem:[#allocation6 + $0x1ad8] sm:$0xff]
    %v922 = vld [vmem:[#allocation6 + $0x1ae0] sm:$0xff]
    %v923 = vld [vmem:[#allocation6 + $0x1ae8] sm:$0xff]
    %v924 = vld [vmem:[#allocation6 + $0x1af0] sm:$0xff]
    %v925 = vld [vmem:[#allocation6 + $0x1af8] sm:$0xff]
    %v926 = vld [vmem:[#allocation6 + $0x1b00] sm:$0xff]
    %v927 = vld [vmem:[#allocation6 + $0x1b08] sm:$0xff]
    %v928 = vld [vmem:[#allocation6 + $0x1b10] sm:$0xff]
    %v929 = vld [vmem:[#allocation6 + $0x1b18] sm:$0xff]
    %v930 = vld [vmem:[#allocation6 + $0x1b20] sm:$0xff]
    %v931 = vld [vmem:[#allocation6 + $0x1b28] sm:$0xff]
    %v932 = vld [vmem:[#allocation6 + $0x1b30] sm:$0xff]
    %v933 = vld [vmem:[#allocation6 + $0x1b38] sm:$0xff]
    %v934 = vld [vmem:[#allocation6 + $0x1b40] sm:$0xff]
    %v935 = vld [vmem:[#allocation6 + $0x1b48] sm:$0xff]
    %v936 = vld [vmem:[#allocation6 + $0x1b50] sm:$0xff]
    %v937 = vld [vmem:[#allocation6 + $0x1b58] sm:$0xff]
    %v938 = vld [vmem:[#allocation6 + $0x1b60] sm:$0xff]
    %v939 = vld [vmem:[#allocation6 + $0x1b68] sm:$0xff]
    %v940 = vld [vmem:[#allocation6 + $0x1b70] sm:$0xff]
    %v941 = vld [vmem:[#allocation6 + $0x1b78] sm:$0xff]
    %v942 = vld [vmem:[#allocation6 + $0x1b80] sm:$0xff]
    %v943 = vld [vmem:[#allocation6 + $0x1b88] sm:$0xff]
    %v944 = vld [vmem:[#allocation6 + $0x1b90] sm:$0xff]
    %v945 = vld [vmem:[#allocation6 + $0x1b98] sm:$0xff]
    %v946 = vld [vmem:[#allocation6 + $0x1ba0] sm:$0xff]
    %v947 = vld [vmem:[#allocation6 + $0x1ba8] sm:$0xff]
    %v948 = vld [vmem:[#allocation6 + $0x1bb0] sm:$0xff]
    %v949 = vld [vmem:[#allocation6 + $0x1bb8] sm:$0xff]
    %v950 = vld [vmem:[#allocation6 + $0x1bc0] sm:$0xff]
    %v951 = vld [vmem:[#allocation6 + $0x1bc8] sm:$0xff]
    %v952 = vld [vmem:[#allocation6 + $0x1bd0] sm:$0xff]
    %v953 = vld [vmem:[#allocation6 + $0x1bd8] sm:$0xff]
    %v954 = vld [vmem:[#allocation6 + $0x1be0] sm:$0xff]
    %v955 = vld [vmem:[#allocation6 + $0x1be8] sm:$0xff]
    %v956 = vld [vmem:[#allocation6 + $0x1bf0] sm:$0xff]
    %v957 = vld [vmem:[#allocation6 + $0x1bf8] sm:$0xff]
    %v958 = vld [vmem:[#allocation6 + $0x1c00] sm:$0xff]
    %v959 = vld [vmem:[#allocation6 + $0x1c08] sm:$0xff]
    %v960 = vld [vmem:[#allocation6 + $0x1c10] sm:$0xff]
    %v961 = vld [vmem:[#allocation6 + $0x1c18] sm:$0xff]
    %v962 = vld [vmem:[#allocation6 + $0x1c20] sm:$0xff]
    %v963 = vld [vmem:[#allocation6 + $0x1c28] sm:$0xff]
    %v964 = vld [vmem:[#allocation6 + $0x1c30] sm:$0xff]
    %v965 = vld [vmem:[#allocation6 + $0x1c38] sm:$0xff]
    %v966 = vld [vmem:[#allocation6 + $0x1c40] sm:$0xff]
    %v967 = vld [vmem:[#allocation6 + $0x1c48] sm:$0xff]
    %v968 = vld [vmem:[#allocation6 + $0x1c50] sm:$0xff]
    %v969 = vld [vmem:[#allocation6 + $0x1c58] sm:$0xff]
    %v970 = vld [vmem:[#allocation6 + $0x1c60] sm:$0xff]
    %v971 = vld [vmem:[#allocation6 + $0x1c68] sm:$0xff]
    %v972 = vld [vmem:[#allocation6 + $0x1c70] sm:$0xff]
    %v973 = vld [vmem:[#allocation6 + $0x1c78] sm:$0xff]
    %v974 = vld [vmem:[#allocation6 + $0x1c80] sm:$0xff]
    %v975 = vld [vmem:[#allocation6 + $0x1c88] sm:$0xff]
    %v976 = vld [vmem:[#allocation6 + $0x1c90] sm:$0xff]
    %v977 = vld [vmem:[#allocation6 + $0x1c98] sm:$0xff]
    %v978 = vld [vmem:[#allocation6 + $0x1ca0] sm:$0xff]
    %v979 = vld [vmem:[#allocation6 + $0x1ca8] sm:$0xff]
    %v980 = vld [vmem:[#allocation6 + $0x1cb0] sm:$0xff]
    %v981 = vld [vmem:[#allocation6 + $0x1cb8] sm:$0xff]
    %v982 = vld [vmem:[#allocation6 + $0x1cc0] sm:$0xff]
    %v983 = vld [vmem:[#allocation6 + $0x1cc8] sm:$0xff]
    %v984 = vld [vmem:[#allocation6 + $0x1cd0] sm:$0xff]
    %v985 = vld [vmem:[#allocation6 + $0x1cd8] sm:$0xff]
    %v986 = vld [vmem:[#allocation6 + $0x1ce0] sm:$0xff]
    %v987 = vld [vmem:[#allocation6 + $0x1ce8] sm:$0xff]
    %v988 = vld [vmem:[#allocation6 + $0x1cf0] sm:$0xff]
    %v989 = vld [vmem:[#allocation6 + $0x1cf8] sm:$0xff]
    %v990 = vld [vmem:[#allocation6 + $0x1d00] sm:$0xff]
    %v991 = vld [vmem:[#allocation6 + $0x1d08] sm:$0xff]
    %v992 = vld [vmem:[#allocation6 + $0x1d10] sm:$0xff]
    %v993 = vld [vmem:[#allocation6 + $0x1d18] sm:$0xff]
    %v994 = vld [vmem:[#allocation6 + $0x1d20] sm:$0xff]
    %v995 = vld [vmem:[#allocation6 + $0x1d28] sm:$0xff]
    %v996 = vld [vmem:[#allocation6 + $0x1d30] sm:$0xff]
    %v997 = vld [vmem:[#allocation6 + $0x1d38] sm:$0xff]
    %v998 = vld [vmem:[#allocation6 + $0x1d40] sm:$0xff]
    %v999 = vld [vmem:[#allocation6 + $0x1d48] sm:$0xff]
    %v1000 = vld [vmem:[#allocation6 + $0x1d50] sm:$0xff]
    %v1001 = vld [vmem:[#allocation6 + $0x1d58] sm:$0xff]
    %v1002 = vld [vmem:[#allocation6 + $0x1d60] sm:$0xff]
    %v1003 = vld [vmem:[#allocation6 + $0x1d68] sm:$0xff]
    %v1004 = vld [vmem:[#allocation6 + $0x1d70] sm:$0xff]
    %v1005 = vld [vmem:[#allocation6 + $0x1d78] sm:$0xff]
    %v1006 = vld [vmem:[#allocation6 + $0x1d80] sm:$0xff]
    %v1007 = vld [vmem:[#allocation6 + $0x1d88] sm:$0xff]
    %v1008 = vld [vmem:[#allocation6 + $0x1d90] sm:$0xff]
    %v1009 = vld [vmem:[#allocation6 + $0x1d98] sm:$0xff]
    %v1010 = vld [vmem:[#allocation6 + $0x1da0] sm:$0xff]
    %v1011 = vld [vmem:[#allocation6 + $0x1da8] sm:$0xff]
    %v1012 = vld [vmem:[#allocation6 + $0x1db0] sm:$0xff]
    %v1013 = vld [vmem:[#allocation6 + $0x1db8] sm:$0xff]
    %v1014 = vld [vmem:[#allocation6 + $0x1dc0] sm:$0xff]
    %v1015 = vld [vmem:[#allocation6 + $0x1dc8] sm:$0xff]
    %v1016 = vld [vmem:[#allocation6 + $0x1dd0] sm:$0xff]
    %v1017 = vld [vmem:[#allocation6 + $0x1dd8] sm:$0xff]
    %v1018 = vld [vmem:[#allocation6 + $0x1de0] sm:$0xff]
    %v1019 = vld [vmem:[#allocation6 + $0x1de8] sm:$0xff]
    %v1020 = vld [vmem:[#allocation6 + $0x1df0] sm:$0xff]
    %v1021 = vld [vmem:[#allocation6 + $0x1df8] sm:$0xff]
    %v1022 = vld [vmem:[#allocation6 + $0x1e00] sm:$0xff]
    %v1023 = vld [vmem:[#allocation6 + $0x1e08] sm:$0xff]
    %v1024 = vld [vmem:[#allocation6 + $0x1e10] sm:$0xff]
    %v1025 = vld [vmem:[#allocation6 + $0x1e18] sm:$0xff]
    %v1026 = vld [vmem:[#allocation6 + $0x1e20] sm:$0xff]
    %v1027 = vld [vmem:[#allocation6 + $0x1e28] sm:$0xff]
    %v1028 = vld [vmem:[#allocation6 + $0x1e30] sm:$0xff]
    %v1029 = vld [vmem:[#allocation6 + $0x1e38] sm:$0xff]
    %v1030 = vld [vmem:[#allocation6 + $0x1e40] sm:$0xff]
    %v1031 = vld [vmem:[#allocation6 + $0x1e48] sm:$0xff]
    %v1032 = vld [vmem:[#allocation6 + $0x1e50] sm:$0xff]
    %v1033 = vld [vmem:[#allocation6 + $0x1e58] sm:$0xff]
    %v1034 = vld [vmem:[#allocation6 + $0x1e60] sm:$0xff]
    %v1035 = vld [vmem:[#allocation6 + $0x1e68] sm:$0xff]
    %v1036 = vld [vmem:[#allocation6 + $0x1e70] sm:$0xff]
    %v1037 = vld [vmem:[#allocation6 + $0x1e78] sm:$0xff]
    %v1038 = vld [vmem:[#allocation6 + $0x1e80] sm:$0xff]
    %v1039 = vld [vmem:[#allocation6 + $0x1e88] sm:$0xff]
    %v1040 = vld [vmem:[#allocation6 + $0x1e90] sm:$0xff]
    %v1041 = vld [vmem:[#allocation6 + $0x1e98] sm:$0xff]
    %v1042 = vld [vmem:[#allocation6 + $0x1ea0] sm:$0xff]
    %v1043 = vld [vmem:[#allocation6 + $0x1ea8] sm:$0xff]
    %v1044 = vld [vmem:[#allocation6 + $0x1eb0] sm:$0xff]
    %v1045 = vld [vmem:[#allocation6 + $0x1eb8] sm:$0xff]
    %v1046 = vld [vmem:[#allocation6 + $0x1ec0] sm:$0xff]
    %v1047 = vld [vmem:[#allocation6 + $0x1ec8] sm:$0xff]
    %v1048 = vld [vmem:[#allocation6 + $0x1ed0] sm:$0xff]
    %v1049 = vld [vmem:[#allocation6 + $0x1ed8] sm:$0xff]
    %v1050 = vld [vmem:[#allocation6 + $0x1ee0] sm:$0xff]
    %v1051 = vld [vmem:[#allocation6 + $0x1ee8] sm:$0xff]
    %v1052 = vld [vmem:[#allocation6 + $0x1ef0] sm:$0xff]
    %v1053 = vld [vmem:[#allocation6 + $0x1ef8] sm:$0xff]
    %v1054 = vld [vmem:[#allocation6 + $0x1f00] sm:$0xff]
    %v1055 = vld [vmem:[#allocation6 + $0x1f08] sm:$0xff]
    %v1056 = vld [vmem:[#allocation6 + $0x1f10] sm:$0xff]
    %v1057 = vld [vmem:[#allocation6 + $0x1f18] sm:$0xff]
    %v1058 = vld [vmem:[#allocation6 + $0x1f20] sm:$0xff]
    %v1059 = vld [vmem:[#allocation6 + $0x1f28] sm:$0xff]
    %v1060 = vld [vmem:[#allocation6 + $0x1f30] sm:$0xff]
    %v1061 = vld [vmem:[#allocation6 + $0x1f38] sm:$0xff]
    %v1062 = vld [vmem:[#allocation6 + $0x1f40] sm:$0xff]
    %v1063 = vld [vmem:[#allocation6 + $0x1f48] sm:$0xff]
    %v1064 = vld [vmem:[#allocation6 + $0x1f50] sm:$0xff]
    %v1065 = vld [vmem:[#allocation6 + $0x1f58] sm:$0xff]
    %v1066 = vld [vmem:[#allocation6 + $0x1f60] sm:$0xff]
    %v1067 = vld [vmem:[#allocation6 + $0x1f68] sm:$0xff]
    %v1068 = vld [vmem:[#allocation6 + $0x1f70] sm:$0xff]
    %v1069 = vld [vmem:[#allocation6 + $0x1f78] sm:$0xff]
    %v1070 = vld [vmem:[#allocation6 + $0x1f80] sm:$0xff]
    %v1071 = vld [vmem:[#allocation6 + $0x1f88] sm:$0xff]
    %v1072 = vld [vmem:[#allocation6 + $0x1f90] sm:$0xff]
    %v1073 = vld [vmem:[#allocation6 + $0x1f98] sm:$0xff]
    %v1074 = vld [vmem:[#allocation6 + $0x1fa0] sm:$0xff]
    %v1075 = vld [vmem:[#allocation6 + $0x1fa8] sm:$0xff]
    %v1076 = vld [vmem:[#allocation6 + $0x1fb0] sm:$0xff]
    %v1077 = vld [vmem:[#allocation6 + $0x1fb8] sm:$0xff]
    %v1078 = vld [vmem:[#allocation6 + $0x1fc0] sm:$0xff]
    %v1079 = vld [vmem:[#allocation6 + $0x1fc8] sm:$0xff]
    %v1080 = vld [vmem:[#allocation6 + $0x1fd0] sm:$0xff]
    %v1081 = vld [vmem:[#allocation6 + $0x1fd8] sm:$0xff]
    %v1082 = vld [vmem:[#allocation6 + $0x1fe0] sm:$0xff]
    %v1083 = vld [vmem:[#allocation6 + $0x1fe8] sm:$0xff]
    %v1084 = vld [vmem:[#allocation6 + $0x1ff0] sm:$0xff]
    %v1085 = vld [vmem:[#allocation6 + $0x1ff8] sm:$0xff]
    %v1088 = vcombine.high %v60, %v60
    %v1090 = vunpack.c.l.s4 1966171168
    %v1091 = vunpack.c.0.s8 %v1090
    %v1092 = vlaneseq
    %v1093 = vshrl.u32 %v1092, 7
    %v1094 = vsub.s32 %v1091, %v1093
    %v1095 = vrot.slane %v60, %v1094
    %v1097 = vunpack.c.l.s4 1966171168
    %v1098 = vunpack.c.0.s8 %v1097
    %v1099 = vlaneseq
    %v1100 = vshrl.u32 %v1099, 7
    %v1101 = vsub.s32 %v1098, %v1100
    %v1102 = vrot.slane %v1088, %v1101
    %v1103 = vcombine.high %v1095, %v1095
    %v1104 = vcombine.high %v1102, %v1102
    %v1106 = vunpack.c.l.s4 1966171168
    %v1107 = vunpack.c.0.s8 %v1106
    %v1108 = vlaneseq
    %v1109 = vshrl.u32 %v1108, 7
    %v1110 = vsub.s32 %v1107, %v1109
    %v1111 = vrot.slane %v1095, %v1110
    %v1113 = vunpack.c.l.s4 1966171168
    %v1114 = vunpack.c.0.s8 %v1113
    %v1115 = vlaneseq
    %v1116 = vshrl.u32 %v1115, 7
    %v1117 = vsub.s32 %v1114, %v1116
    %v1118 = vrot.slane %v1102, %v1117
    %v1120 = vunpack.c.l.s4 1966171168
    %v1121 = vunpack.c.0.s8 %v1120
    %v1122 = vlaneseq
    %v1123 = vshrl.u32 %v1122, 7
    %v1124 = vsub.s32 %v1121, %v1123
    %v1125 = vrot.slane %v1103, %v1124
    %v1127 = vunpack.c.l.s4 1966171168
    %v1128 = vunpack.c.0.s8 %v1127
    %v1129 = vlaneseq
    %v1130 = vshrl.u32 %v1129, 7
    %v1131 = vsub.s32 %v1128, %v1130
    %v1132 = vrot.slane %v1104, %v1131
    %v1133 = vcombine.high %v1111, %v1111
    %v1134 = vcombine.high %v1118, %v1118
    %v1135 = vcombine.high %v1125, %v1125
    %v1136 = vcombine.high %v1132, %v1132
    %v1137 = vcombine.high %v61, %v61
    %v1139 = vunpack.c.l.s4 1966171168
    %v1140 = vunpack.c.0.s8 %v1139
    %v1141 = vlaneseq
    %v1142 = vshrl.u32 %v1141, 7
    %v1143 = vsub.s32 %v1140, %v1142
    %v1144 = vrot.slane %v61, %v1143
    %v1146 = vunpack.c.l.s4 1966171168
    %v1147 = vunpack.c.0.s8 %v1146
    %v1148 = vlaneseq
    %v1149 = vshrl.u32 %v1148, 7
    %v1150 = vsub.s32 %v1147, %v1149
    %v1151 = vrot.slane %v1137, %v1150
    %v1152 = vcombine.high %v1144, %v1144
    %v1153 = vcombine.high %v1151, %v1151
    %v1155 = vunpack.c.l.s4 1966171168
    %v1156 = vunpack.c.0.s8 %v1155
    %v1157 = vlaneseq
    %v1158 = vshrl.u32 %v1157, 7
    %v1159 = vsub.s32 %v1156, %v1158
    %v1160 = vrot.slane %v1144, %v1159
    %v1162 = vunpack.c.l.s4 1966171168
    %v1163 = vunpack.c.0.s8 %v1162
    %v1164 = vlaneseq
    %v1165 = vshrl.u32 %v1164, 7
    %v1166 = vsub.s32 %v1163, %v1165
    %v1167 = vrot.slane %v1151, %v1166
    %v1169 = vunpack.c.l.s4 1966171168
    %v1170 = vunpack.c.0.s8 %v1169
    %v1171 = vlaneseq
    %v1172 = vshrl.u32 %v1171, 7
    %v1173 = vsub.s32 %v1170, %v1172
    %v1174 = vrot.slane %v1152, %v1173
    %v1176 = vunpack.c.l.s4 1966171168
    %v1177 = vunpack.c.0.s8 %v1176
    %v1178 = vlaneseq
    %v1179 = vshrl.u32 %v1178, 7
    %v1180 = vsub.s32 %v1177, %v1179
    %v1181 = vrot.slane %v1153, %v1180
    %v1182 = vcombine.high %v1160, %v1160
    %v1183 = vcombine.high %v1167, %v1167
    %v1184 = vcombine.high %v1174, %v1174
    %v1185 = vcombine.high %v1181, %v1181
    %v2226 = vunpack.c.l.b16 %v62
    %v2227 = vunpack.c.h.b16 %v62
    %v2228 = vunpack.c.l.b16 %v63
    %v2229 = vunpack.c.h.b16 %v63
    %v2230 = vunpack.c.l.b16 %v64
    %v2231 = vunpack.c.h.b16 %v64
    %v2232 = vunpack.c.l.b16 %v65
    %v2233 = vunpack.c.h.b16 %v65
    %v2234 = vunpack.c.l.b16 %v66
    %v2235 = vunpack.c.h.b16 %v66
    %v2236 = vunpack.c.l.b16 %v67
    %v2237 = vunpack.c.h.b16 %v67
    %v2238 = vunpack.c.l.b16 %v68
    %v2239 = vunpack.c.h.b16 %v68
    %v2240 = vunpack.c.l.b16 %v69
    %v2241 = vunpack.c.h.b16 %v69
    %v2242 = vunpack.c.l.b16 %v70
    %v2243 = vunpack.c.h.b16 %v70
    %v2244 = vunpack.c.l.b16 %v71
    %v2245 = vunpack.c.h.b16 %v71
    %v2246 = vunpack.c.l.b16 %v72
    %v2247 = vunpack.c.h.b16 %v72
    %v2248 = vunpack.c.l.b16 %v73
    %v2249 = vunpack.c.h.b16 %v73
    %v2250 = vunpack.c.l.b16 %v74
    %v2251 = vunpack.c.h.b16 %v74
    %v2252 = vunpack.c.l.b16 %v75
    %v2253 = vunpack.c.h.b16 %v75
    %v2254 = vunpack.c.l.b16 %v76
    %v2255 = vunpack.c.h.b16 %v76
    %v2256 = vunpack.c.l.b16 %v77
    %v2257 = vunpack.c.h.b16 %v77
    %v2258 = vunpack.c.l.b16 %v78
    %v2259 = vunpack.c.h.b16 %v78
    %v2260 = vunpack.c.l.b16 %v79
    %v2261 = vunpack.c.h.b16 %v79
    %v2262 = vunpack.c.l.b16 %v80
    %v2263 = vunpack.c.h.b16 %v80
    %v2264 = vunpack.c.l.b16 %v81
    %v2265 = vunpack.c.h.b16 %v81
    %v2266 = vunpack.c.l.b16 %v82
    %v2267 = vunpack.c.h.b16 %v82
    %v2268 = vunpack.c.l.b16 %v83
    %v2269 = vunpack.c.h.b16 %v83
    %v2270 = vunpack.c.l.b16 %v84
    %v2271 = vunpack.c.h.b16 %v84
    %v2272 = vunpack.c.l.b16 %v85
    %v2273 = vunpack.c.h.b16 %v85
    %v2274 = vunpack.c.l.b16 %v86
    %v2275 = vunpack.c.h.b16 %v86
    %v2276 = vunpack.c.l.b16 %v87
    %v2277 = vunpack.c.h.b16 %v87
    %v2278 = vunpack.c.l.b16 %v88
    %v2279 = vunpack.c.h.b16 %v88
    %v2280 = vunpack.c.l.b16 %v89
    %v2281 = vunpack.c.h.b16 %v89
    %v2282 = vunpack.c.l.b16 %v90
    %v2283 = vunpack.c.h.b16 %v90
    %v2284 = vunpack.c.l.b16 %v91
    %v2285 = vunpack.c.h.b16 %v91
    %v2286 = vunpack.c.l.b16 %v92
    %v2287 = vunpack.c.h.b16 %v92
    %v2288 = vunpack.c.l.b16 %v93
    %v2289 = vunpack.c.h.b16 %v93
    %v2290 = vunpack.c.l.b16 %v94
    %v2291 = vunpack.c.h.b16 %v94
    %v2292 = vunpack.c.l.b16 %v95
    %v2293 = vunpack.c.h.b16 %v95
    %v2294 = vunpack.c.l.b16 %v96
    %v2295 = vunpack.c.h.b16 %v96
    %v2296 = vunpack.c.l.b16 %v97
    %v2297 = vunpack.c.h.b16 %v97
    %v2298 = vunpack.c.l.b16 %v98
    %v2299 = vunpack.c.h.b16 %v98
    %v2300 = vunpack.c.l.b16 %v99
    %v2301 = vunpack.c.h.b16 %v99
    %v2302 = vunpack.c.l.b16 %v100
    %v2303 = vunpack.c.h.b16 %v100
    %v2304 = vunpack.c.l.b16 %v101
    %v2305 = vunpack.c.h.b16 %v101
    %v2306 = vunpack.c.l.b16 %v102
    %v2307 = vunpack.c.h.b16 %v102
    %v2308 = vunpack.c.l.b16 %v103
    %v2309 = vunpack.c.h.b16 %v103
    %v2310 = vunpack.c.l.b16 %v104
    %v2311 = vunpack.c.h.b16 %v104
    %v2312 = vunpack.c.l.b16 %v105
    %v2313 = vunpack.c.h.b16 %v105
    %v2314 = vunpack.c.l.b16 %v106
    %v2315 = vunpack.c.h.b16 %v106
    %v2316 = vunpack.c.l.b16 %v107
    %v2317 = vunpack.c.h.b16 %v107
    %v2318 = vunpack.c.l.b16 %v108
    %v2319 = vunpack.c.h.b16 %v108
    %v2320 = vunpack.c.l.b16 %v109
    %v2321 = vunpack.c.h.b16 %v109
    %v2322 = vunpack.c.l.b16 %v110
    %v2323 = vunpack.c.h.b16 %v110
    %v2324 = vunpack.c.l.b16 %v111
    %v2325 = vunpack.c.h.b16 %v111
    %v2326 = vunpack.c.l.b16 %v112
    %v2327 = vunpack.c.h.b16 %v112
    %v2328 = vunpack.c.l.b16 %v113
    %v2329 = vunpack.c.h.b16 %v113
    %v2330 = vunpack.c.l.b16 %v114
    %v2331 = vunpack.c.h.b16 %v114
    %v2332 = vunpack.c.l.b16 %v115
    %v2333 = vunpack.c.h.b16 %v115
    %v2334 = vunpack.c.l.b16 %v116
    %v2335 = vunpack.c.h.b16 %v116
    %v2336 = vunpack.c.l.b16 %v117
    %v2337 = vunpack.c.h.b16 %v117
    %v2338 = vunpack.c.l.b16 %v118
    %v2339 = vunpack.c.h.b16 %v118
    %v2340 = vunpack.c.l.b16 %v119
    %v2341 = vunpack.c.h.b16 %v119
    %v2342 = vunpack.c.l.b16 %v120
    %v2343 = vunpack.c.h.b16 %v120
    %v2344 = vunpack.c.l.b16 %v121
    %v2345 = vunpack.c.h.b16 %v121
    %v2346 = vunpack.c.l.b16 %v122
    %v2347 = vunpack.c.h.b16 %v122
    %v2348 = vunpack.c.l.b16 %v123
    %v2349 = vunpack.c.h.b16 %v123
    %v2350 = vunpack.c.l.b16 %v124
    %v2351 = vunpack.c.h.b16 %v124
    %v2352 = vunpack.c.l.b16 %v125
    %v2353 = vunpack.c.h.b16 %v125
    %v2354 = vunpack.c.l.b16 %v126
    %v2355 = vunpack.c.h.b16 %v126
    %v2356 = vunpack.c.l.b16 %v127
    %v2357 = vunpack.c.h.b16 %v127
    %v2358 = vunpack.c.l.b16 %v128
    %v2359 = vunpack.c.h.b16 %v128
    %v2360 = vunpack.c.l.b16 %v129
    %v2361 = vunpack.c.h.b16 %v129
    %v2362 = vunpack.c.l.b16 %v130
    %v2363 = vunpack.c.h.b16 %v130
    %v2364 = vunpack.c.l.b16 %v131
    %v2365 = vunpack.c.h.b16 %v131
    %v2366 = vunpack.c.l.b16 %v132
    %v2367 = vunpack.c.h.b16 %v132
    %v2368 = vunpack.c.l.b16 %v133
    %v2369 = vunpack.c.h.b16 %v133
    %v2370 = vunpack.c.l.b16 %v134
    %v2371 = vunpack.c.h.b16 %v134
    %v2372 = vunpack.c.l.b16 %v135
    %v2373 = vunpack.c.h.b16 %v135
    %v2374 = vunpack.c.l.b16 %v136
    %v2375 = vunpack.c.h.b16 %v136
    %v2376 = vunpack.c.l.b16 %v137
    %v2377 = vunpack.c.h.b16 %v137
    %v2378 = vunpack.c.l.b16 %v138
    %v2379 = vunpack.c.h.b16 %v138
    %v2380 = vunpack.c.l.b16 %v139
    %v2381 = vunpack.c.h.b16 %v139
    %v2382 = vunpack.c.l.b16 %v140
    %v2383 = vunpack.c.h.b16 %v140
    %v2384 = vunpack.c.l.b16 %v141
    %v2385 = vunpack.c.h.b16 %v141
    %v2386 = vunpack.c.l.b16 %v142
    %v2387 = vunpack.c.h.b16 %v142
    %v2388 = vunpack.c.l.b16 %v143
    %v2389 = vunpack.c.h.b16 %v143
    %v2390 = vunpack.c.l.b16 %v144
    %v2391 = vunpack.c.h.b16 %v144
    %v2392 = vunpack.c.l.b16 %v145
    %v2393 = vunpack.c.h.b16 %v145
    %v2394 = vunpack.c.l.b16 %v146
    %v2395 = vunpack.c.h.b16 %v146
    %v2396 = vunpack.c.l.b16 %v147
    %v2397 = vunpack.c.h.b16 %v147
    %v2398 = vunpack.c.l.b16 %v148
    %v2399 = vunpack.c.h.b16 %v148
    %v2400 = vunpack.c.l.b16 %v149
    %v2401 = vunpack.c.h.b16 %v149
    %v2402 = vunpack.c.l.b16 %v150
    %v2403 = vunpack.c.h.b16 %v150
    %v2404 = vunpack.c.l.b16 %v151
    %v2405 = vunpack.c.h.b16 %v151
    %v2406 = vunpack.c.l.b16 %v152
    %v2407 = vunpack.c.h.b16 %v152
    %v2408 = vunpack.c.l.b16 %v153
    %v2409 = vunpack.c.h.b16 %v153
    %v2410 = vunpack.c.l.b16 %v154
    %v2411 = vunpack.c.h.b16 %v154
    %v2412 = vunpack.c.l.b16 %v155
    %v2413 = vunpack.c.h.b16 %v155
    %v2414 = vunpack.c.l.b16 %v156
    %v2415 = vunpack.c.h.b16 %v156
    %v2416 = vunpack.c.l.b16 %v157
    %v2417 = vunpack.c.h.b16 %v157
    %v2418 = vunpack.c.l.b16 %v158
    %v2419 = vunpack.c.h.b16 %v158
    %v2420 = vunpack.c.l.b16 %v159
    %v2421 = vunpack.c.h.b16 %v159
    %v2422 = vunpack.c.l.b16 %v160
    %v2423 = vunpack.c.h.b16 %v160
    %v2424 = vunpack.c.l.b16 %v161
    %v2425 = vunpack.c.h.b16 %v161
    %v2426 = vunpack.c.l.b16 %v162
    %v2427 = vunpack.c.h.b16 %v162
    %v2428 = vunpack.c.l.b16 %v163
    %v2429 = vunpack.c.h.b16 %v163
    %v2430 = vunpack.c.l.b16 %v164
    %v2431 = vunpack.c.h.b16 %v164
    %v2432 = vunpack.c.l.b16 %v165
    %v2433 = vunpack.c.h.b16 %v165
    %v2434 = vunpack.c.l.b16 %v166
    %v2435 = vunpack.c.h.b16 %v166
    %v2436 = vunpack.c.l.b16 %v167
    %v2437 = vunpack.c.h.b16 %v167
    %v2438 = vunpack.c.l.b16 %v168
    %v2439 = vunpack.c.h.b16 %v168
    %v2440 = vunpack.c.l.b16 %v169
    %v2441 = vunpack.c.h.b16 %v169
    %v2442 = vunpack.c.l.b16 %v170
    %v2443 = vunpack.c.h.b16 %v170
    %v2444 = vunpack.c.l.b16 %v171
    %v2445 = vunpack.c.h.b16 %v171
    %v2446 = vunpack.c.l.b16 %v172
    %v2447 = vunpack.c.h.b16 %v172
    %v2448 = vunpack.c.l.b16 %v173
    %v2449 = vunpack.c.h.b16 %v173
    %v2450 = vunpack.c.l.b16 %v174
    %v2451 = vunpack.c.h.b16 %v174
    %v2452 = vunpack.c.l.b16 %v175
    %v2453 = vunpack.c.h.b16 %v175
    %v2454 = vunpack.c.l.b16 %v176
    %v2455 = vunpack.c.h.b16 %v176
    %v2456 = vunpack.c.l.b16 %v177
    %v2457 = vunpack.c.h.b16 %v177
    %v2458 = vunpack.c.l.b16 %v178
    %v2459 = vunpack.c.h.b16 %v178
    %v2460 = vunpack.c.l.b16 %v179
    %v2461 = vunpack.c.h.b16 %v179
    %v2462 = vunpack.c.l.b16 %v180
    %v2463 = vunpack.c.h.b16 %v180
    %v2464 = vunpack.c.l.b16 %v181
    %v2465 = vunpack.c.h.b16 %v181
    %v2466 = vunpack.c.l.b16 %v182
    %v2467 = vunpack.c.h.b16 %v182
    %v2468 = vunpack.c.l.b16 %v183
    %v2469 = vunpack.c.h.b16 %v183
    %v2470 = vunpack.c.l.b16 %v184
    %v2471 = vunpack.c.h.b16 %v184
    %v2472 = vunpack.c.l.b16 %v185
    %v2473 = vunpack.c.h.b16 %v185
    %v2474 = vunpack.c.l.b16 %v186
    %v2475 = vunpack.c.h.b16 %v186
    %v2476 = vunpack.c.l.b16 %v187
    %v2477 = vunpack.c.h.b16 %v187
    %v2478 = vunpack.c.l.b16 %v188
    %v2479 = vunpack.c.h.b16 %v188
    %v2480 = vunpack.c.l.b16 %v189
    %v2481 = vunpack.c.h.b16 %v189
    %v2482 = vunpack.c.l.b16 %v190
    %v2483 = vunpack.c.h.b16 %v190
    %v2484 = vunpack.c.l.b16 %v191
    %v2485 = vunpack.c.h.b16 %v191
    %v2486 = vunpack.c.l.b16 %v192
    %v2487 = vunpack.c.h.b16 %v192
    %v2488 = vunpack.c.l.b16 %v193
    %v2489 = vunpack.c.h.b16 %v193
    %v2490 = vunpack.c.l.b16 %v194
    %v2491 = vunpack.c.h.b16 %v194
    %v2492 = vunpack.c.l.b16 %v195
    %v2493 = vunpack.c.h.b16 %v195
    %v2494 = vunpack.c.l.b16 %v196
    %v2495 = vunpack.c.h.b16 %v196
    %v2496 = vunpack.c.l.b16 %v197
    %v2497 = vunpack.c.h.b16 %v197
    %v2498 = vunpack.c.l.b16 %v198
    %v2499 = vunpack.c.h.b16 %v198
    %v2500 = vunpack.c.l.b16 %v199
    %v2501 = vunpack.c.h.b16 %v199
    %v2502 = vunpack.c.l.b16 %v200
    %v2503 = vunpack.c.h.b16 %v200
    %v2504 = vunpack.c.l.b16 %v201
    %v2505 = vunpack.c.h.b16 %v201
    %v2506 = vunpack.c.l.b16 %v202
    %v2507 = vunpack.c.h.b16 %v202
    %v2508 = vunpack.c.l.b16 %v203
    %v2509 = vunpack.c.h.b16 %v203
    %v2510 = vunpack.c.l.b16 %v204
    %v2511 = vunpack.c.h.b16 %v204
    %v2512 = vunpack.c.l.b16 %v205
    %v2513 = vunpack.c.h.b16 %v205
    %v2514 = vunpack.c.l.b16 %v206
    %v2515 = vunpack.c.h.b16 %v206
    %v2516 = vunpack.c.l.b16 %v207
    %v2517 = vunpack.c.h.b16 %v207
    %v2518 = vunpack.c.l.b16 %v208
    %v2519 = vunpack.c.h.b16 %v208
    %v2520 = vunpack.c.l.b16 %v209
    %v2521 = vunpack.c.h.b16 %v209
    %v2522 = vunpack.c.l.b16 %v210
    %v2523 = vunpack.c.h.b16 %v210
    %v2524 = vunpack.c.l.b16 %v211
    %v2525 = vunpack.c.h.b16 %v211
    %v2526 = vunpack.c.l.b16 %v212
    %v2527 = vunpack.c.h.b16 %v212
    %v2528 = vunpack.c.l.b16 %v213
    %v2529 = vunpack.c.h.b16 %v213
    %v2530 = vunpack.c.l.b16 %v214
    %v2531 = vunpack.c.h.b16 %v214
    %v2532 = vunpack.c.l.b16 %v215
    %v2533 = vunpack.c.h.b16 %v215
    %v2534 = vunpack.c.l.b16 %v216
    %v2535 = vunpack.c.h.b16 %v216
    %v2536 = vunpack.c.l.b16 %v217
    %v2537 = vunpack.c.h.b16 %v217
    %v2538 = vunpack.c.l.b16 %v218
    %v2539 = vunpack.c.h.b16 %v218
    %v2540 = vunpack.c.l.b16 %v219
    %v2541 = vunpack.c.h.b16 %v219
    %v2542 = vunpack.c.l.b16 %v220
    %v2543 = vunpack.c.h.b16 %v220
    %v2544 = vunpack.c.l.b16 %v221
    %v2545 = vunpack.c.h.b16 %v221
    %v2546 = vunpack.c.l.b16 %v222
    %v2547 = vunpack.c.h.b16 %v222
    %v2548 = vunpack.c.l.b16 %v223
    %v2549 = vunpack.c.h.b16 %v223
    %v2550 = vunpack.c.l.b16 %v224
    %v2551 = vunpack.c.h.b16 %v224
    %v2552 = vunpack.c.l.b16 %v225
    %v2553 = vunpack.c.h.b16 %v225
    %v2554 = vunpack.c.l.b16 %v226
    %v2555 = vunpack.c.h.b16 %v226
    %v2556 = vunpack.c.l.b16 %v227
    %v2557 = vunpack.c.h.b16 %v227
    %v2558 = vunpack.c.l.b16 %v228
    %v2559 = vunpack.c.h.b16 %v228
    %v2560 = vunpack.c.l.b16 %v229
    %v2561 = vunpack.c.h.b16 %v229
    %v2562 = vunpack.c.l.b16 %v230
    %v2563 = vunpack.c.h.b16 %v230
    %v2564 = vunpack.c.l.b16 %v231
    %v2565 = vunpack.c.h.b16 %v231
    %v2566 = vunpack.c.l.b16 %v232
    %v2567 = vunpack.c.h.b16 %v232
    %v2568 = vunpack.c.l.b16 %v233
    %v2569 = vunpack.c.h.b16 %v233
    %v2570 = vunpack.c.l.b16 %v234
    %v2571 = vunpack.c.h.b16 %v234
    %v2572 = vunpack.c.l.b16 %v235
    %v2573 = vunpack.c.h.b16 %v235
    %v2574 = vunpack.c.l.b16 %v236
    %v2575 = vunpack.c.h.b16 %v236
    %v2576 = vunpack.c.l.b16 %v237
    %v2577 = vunpack.c.h.b16 %v237
    %v2578 = vunpack.c.l.b16 %v238
    %v2579 = vunpack.c.h.b16 %v238
    %v2580 = vunpack.c.l.b16 %v239
    %v2581 = vunpack.c.h.b16 %v239
    %v2582 = vunpack.c.l.b16 %v240
    %v2583 = vunpack.c.h.b16 %v240
    %v2584 = vunpack.c.l.b16 %v241
    %v2585 = vunpack.c.h.b16 %v241
    %v2586 = vunpack.c.l.b16 %v242
    %v2587 = vunpack.c.h.b16 %v242
    %v2588 = vunpack.c.l.b16 %v243
    %v2589 = vunpack.c.h.b16 %v243
    %v2590 = vunpack.c.l.b16 %v244
    %v2591 = vunpack.c.h.b16 %v244
    %v2592 = vunpack.c.l.b16 %v245
    %v2593 = vunpack.c.h.b16 %v245
    %v2594 = vunpack.c.l.b16 %v246
    %v2595 = vunpack.c.h.b16 %v246
    %v2596 = vunpack.c.l.b16 %v247
    %v2597 = vunpack.c.h.b16 %v247
    %v2598 = vunpack.c.l.b16 %v248
    %v2599 = vunpack.c.h.b16 %v248
    %v2600 = vunpack.c.l.b16 %v249
    %v2601 = vunpack.c.h.b16 %v249
    %v2602 = vunpack.c.l.b16 %v250
    %v2603 = vunpack.c.h.b16 %v250
    %v2604 = vunpack.c.l.b16 %v251
    %v2605 = vunpack.c.h.b16 %v251
    %v2606 = vunpack.c.l.b16 %v252
    %v2607 = vunpack.c.h.b16 %v252
    %v2608 = vunpack.c.l.b16 %v253
    %v2609 = vunpack.c.h.b16 %v253
    %v2610 = vunpack.c.l.b16 %v254
    %v2611 = vunpack.c.h.b16 %v254
    %v2612 = vunpack.c.l.b16 %v255
    %v2613 = vunpack.c.h.b16 %v255
    %v2614 = vunpack.c.l.b16 %v256
    %v2615 = vunpack.c.h.b16 %v256
    %v2616 = vunpack.c.l.b16 %v257
    %v2617 = vunpack.c.h.b16 %v257
    %v2618 = vunpack.c.l.b16 %v258
    %v2619 = vunpack.c.h.b16 %v258
    %v2620 = vunpack.c.l.b16 %v259
    %v2621 = vunpack.c.h.b16 %v259
    %v2622 = vunpack.c.l.b16 %v260
    %v2623 = vunpack.c.h.b16 %v260
    %v2624 = vunpack.c.l.b16 %v261
    %v2625 = vunpack.c.h.b16 %v261
    %v2626 = vunpack.c.l.b16 %v262
    %v2627 = vunpack.c.h.b16 %v262
    %v2628 = vunpack.c.l.b16 %v263
    %v2629 = vunpack.c.h.b16 %v263
    %v2630 = vunpack.c.l.b16 %v264
    %v2631 = vunpack.c.h.b16 %v264
    %v2632 = vunpack.c.l.b16 %v265
    %v2633 = vunpack.c.h.b16 %v265
    %v2634 = vunpack.c.l.b16 %v266
    %v2635 = vunpack.c.h.b16 %v266
    %v2636 = vunpack.c.l.b16 %v267
    %v2637 = vunpack.c.h.b16 %v267
    %v2638 = vunpack.c.l.b16 %v268
    %v2639 = vunpack.c.h.b16 %v268
    %v2640 = vunpack.c.l.b16 %v269
    %v2641 = vunpack.c.h.b16 %v269
    %v2642 = vunpack.c.l.b16 %v270
    %v2643 = vunpack.c.h.b16 %v270
    %v2644 = vunpack.c.l.b16 %v271
    %v2645 = vunpack.c.h.b16 %v271
    %v2646 = vunpack.c.l.b16 %v272
    %v2647 = vunpack.c.h.b16 %v272
    %v2648 = vunpack.c.l.b16 %v273
    %v2649 = vunpack.c.h.b16 %v273
    %v2650 = vunpack.c.l.b16 %v274
    %v2651 = vunpack.c.h.b16 %v274
    %v2652 = vunpack.c.l.b16 %v275
    %v2653 = vunpack.c.h.b16 %v275
    %v2654 = vunpack.c.l.b16 %v276
    %v2655 = vunpack.c.h.b16 %v276
    %v2656 = vunpack.c.l.b16 %v277
    %v2657 = vunpack.c.h.b16 %v277
    %v2658 = vunpack.c.l.b16 %v278
    %v2659 = vunpack.c.h.b16 %v278
    %v2660 = vunpack.c.l.b16 %v279
    %v2661 = vunpack.c.h.b16 %v279
    %v2662 = vunpack.c.l.b16 %v280
    %v2663 = vunpack.c.h.b16 %v280
    %v2664 = vunpack.c.l.b16 %v281
    %v2665 = vunpack.c.h.b16 %v281
    %v2666 = vunpack.c.l.b16 %v282
    %v2667 = vunpack.c.h.b16 %v282
    %v2668 = vunpack.c.l.b16 %v283
    %v2669 = vunpack.c.h.b16 %v283
    %v2670 = vunpack.c.l.b16 %v284
    %v2671 = vunpack.c.h.b16 %v284
    %v2672 = vunpack.c.l.b16 %v285
    %v2673 = vunpack.c.h.b16 %v285
    %v2674 = vunpack.c.l.b16 %v286
    %v2675 = vunpack.c.h.b16 %v286
    %v2676 = vunpack.c.l.b16 %v287
    %v2677 = vunpack.c.h.b16 %v287
    %v2678 = vunpack.c.l.b16 %v288
    %v2679 = vunpack.c.h.b16 %v288
    %v2680 = vunpack.c.l.b16 %v289
    %v2681 = vunpack.c.h.b16 %v289
    %v2682 = vunpack.c.l.b16 %v290
    %v2683 = vunpack.c.h.b16 %v290
    %v2684 = vunpack.c.l.b16 %v291
    %v2685 = vunpack.c.h.b16 %v291
    %v2686 = vunpack.c.l.b16 %v292
    %v2687 = vunpack.c.h.b16 %v292
    %v2688 = vunpack.c.l.b16 %v293
    %v2689 = vunpack.c.h.b16 %v293
    %v2690 = vunpack.c.l.b16 %v294
    %v2691 = vunpack.c.h.b16 %v294
    %v2692 = vunpack.c.l.b16 %v295
    %v2693 = vunpack.c.h.b16 %v295
    %v2694 = vunpack.c.l.b16 %v296
    %v2695 = vunpack.c.h.b16 %v296
    %v2696 = vunpack.c.l.b16 %v297
    %v2697 = vunpack.c.h.b16 %v297
    %v2698 = vunpack.c.l.b16 %v298
    %v2699 = vunpack.c.h.b16 %v298
    %v2700 = vunpack.c.l.b16 %v299
    %v2701 = vunpack.c.h.b16 %v299
    %v2702 = vunpack.c.l.b16 %v300
    %v2703 = vunpack.c.h.b16 %v300
    %v2704 = vunpack.c.l.b16 %v301
    %v2705 = vunpack.c.h.b16 %v301
    %v2706 = vunpack.c.l.b16 %v302
    %v2707 = vunpack.c.h.b16 %v302
    %v2708 = vunpack.c.l.b16 %v303
    %v2709 = vunpack.c.h.b16 %v303
    %v2710 = vunpack.c.l.b16 %v304
    %v2711 = vunpack.c.h.b16 %v304
    %v2712 = vunpack.c.l.b16 %v305
    %v2713 = vunpack.c.h.b16 %v305
    %v2714 = vunpack.c.l.b16 %v306
    %v2715 = vunpack.c.h.b16 %v306
    %v2716 = vunpack.c.l.b16 %v307
    %v2717 = vunpack.c.h.b16 %v307
    %v2718 = vunpack.c.l.b16 %v308
    %v2719 = vunpack.c.h.b16 %v308
    %v2720 = vunpack.c.l.b16 %v309
    %v2721 = vunpack.c.h.b16 %v309
    %v2722 = vunpack.c.l.b16 %v310
    %v2723 = vunpack.c.h.b16 %v310
    %v2724 = vunpack.c.l.b16 %v311
    %v2725 = vunpack.c.h.b16 %v311
    %v2726 = vunpack.c.l.b16 %v312
    %v2727 = vunpack.c.h.b16 %v312
    %v2728 = vunpack.c.l.b16 %v313
    %v2729 = vunpack.c.h.b16 %v313
    %v2730 = vunpack.c.l.b16 %v314
    %v2731 = vunpack.c.h.b16 %v314
    %v2732 = vunpack.c.l.b16 %v315
    %v2733 = vunpack.c.h.b16 %v315
    %v2734 = vunpack.c.l.b16 %v316
    %v2735 = vunpack.c.h.b16 %v316
    %v2736 = vunpack.c.l.b16 %v317
    %v2737 = vunpack.c.h.b16 %v317
    %v2738 = vunpack.c.l.b16 %v318
    %v2739 = vunpack.c.h.b16 %v318
    %v2740 = vunpack.c.l.b16 %v319
    %v2741 = vunpack.c.h.b16 %v319
    %v2742 = vunpack.c.l.b16 %v320
    %v2743 = vunpack.c.h.b16 %v320
    %v2744 = vunpack.c.l.b16 %v321
    %v2745 = vunpack.c.h.b16 %v321
    %v2746 = vunpack.c.l.b16 %v322
    %v2747 = vunpack.c.h.b16 %v322
    %v2748 = vunpack.c.l.b16 %v323
    %v2749 = vunpack.c.h.b16 %v323
    %v2750 = vunpack.c.l.b16 %v324
    %v2751 = vunpack.c.h.b16 %v324
    %v2752 = vunpack.c.l.b16 %v325
    %v2753 = vunpack.c.h.b16 %v325
    %v2754 = vunpack.c.l.b16 %v326
    %v2755 = vunpack.c.h.b16 %v326
    %v2756 = vunpack.c.l.b16 %v327
    %v2757 = vunpack.c.h.b16 %v327
    %v2758 = vunpack.c.l.b16 %v328
    %v2759 = vunpack.c.h.b16 %v328
    %v2760 = vunpack.c.l.b16 %v329
    %v2761 = vunpack.c.h.b16 %v329
    %v2762 = vunpack.c.l.b16 %v330
    %v2763 = vunpack.c.h.b16 %v330
    %v2764 = vunpack.c.l.b16 %v331
    %v2765 = vunpack.c.h.b16 %v331
    %v2766 = vunpack.c.l.b16 %v332
    %v2767 = vunpack.c.h.b16 %v332
    %v2768 = vunpack.c.l.b16 %v333
    %v2769 = vunpack.c.h.b16 %v333
    %v2770 = vunpack.c.l.b16 %v334
    %v2771 = vunpack.c.h.b16 %v334
    %v2772 = vunpack.c.l.b16 %v335
    %v2773 = vunpack.c.h.b16 %v335
    %v2774 = vunpack.c.l.b16 %v336
    %v2775 = vunpack.c.h.b16 %v336
    %v2776 = vunpack.c.l.b16 %v337
    %v2777 = vunpack.c.h.b16 %v337
    %v2778 = vunpack.c.l.b16 %v338
    %v2779 = vunpack.c.h.b16 %v338
    %v2780 = vunpack.c.l.b16 %v339
    %v2781 = vunpack.c.h.b16 %v339
    %v2782 = vunpack.c.l.b16 %v340
    %v2783 = vunpack.c.h.b16 %v340
    %v2784 = vunpack.c.l.b16 %v341
    %v2785 = vunpack.c.h.b16 %v341
    %v2786 = vunpack.c.l.b16 %v342
    %v2787 = vunpack.c.h.b16 %v342
    %v2788 = vunpack.c.l.b16 %v343
    %v2789 = vunpack.c.h.b16 %v343
    %v2790 = vunpack.c.l.b16 %v344
    %v2791 = vunpack.c.h.b16 %v344
    %v2792 = vunpack.c.l.b16 %v345
    %v2793 = vunpack.c.h.b16 %v345
    %v2794 = vunpack.c.l.b16 %v346
    %v2795 = vunpack.c.h.b16 %v346
    %v2796 = vunpack.c.l.b16 %v347
    %v2797 = vunpack.c.h.b16 %v347
    %v2798 = vunpack.c.l.b16 %v348
    %v2799 = vunpack.c.h.b16 %v348
    %v2800 = vunpack.c.l.b16 %v349
    %v2801 = vunpack.c.h.b16 %v349
    %v2802 = vunpack.c.l.b16 %v350
    %v2803 = vunpack.c.h.b16 %v350
    %v2804 = vunpack.c.l.b16 %v351
    %v2805 = vunpack.c.h.b16 %v351
    %v2806 = vunpack.c.l.b16 %v352
    %v2807 = vunpack.c.h.b16 %v352
    %v2808 = vunpack.c.l.b16 %v353
    %v2809 = vunpack.c.h.b16 %v353
    %v2810 = vunpack.c.l.b16 %v354
    %v2811 = vunpack.c.h.b16 %v354
    %v2812 = vunpack.c.l.b16 %v355
    %v2813 = vunpack.c.h.b16 %v355
    %v2814 = vunpack.c.l.b16 %v356
    %v2815 = vunpack.c.h.b16 %v356
    %v2816 = vunpack.c.l.b16 %v357
    %v2817 = vunpack.c.h.b16 %v357
    %v2818 = vunpack.c.l.b16 %v358
    %v2819 = vunpack.c.h.b16 %v358
    %v2820 = vunpack.c.l.b16 %v359
    %v2821 = vunpack.c.h.b16 %v359
    %v2822 = vunpack.c.l.b16 %v360
    %v2823 = vunpack.c.h.b16 %v360
    %v2824 = vunpack.c.l.b16 %v361
    %v2825 = vunpack.c.h.b16 %v361
    %v2826 = vunpack.c.l.b16 %v362
    %v2827 = vunpack.c.h.b16 %v362
    %v2828 = vunpack.c.l.b16 %v363
    %v2829 = vunpack.c.h.b16 %v363
    %v2830 = vunpack.c.l.b16 %v364
    %v2831 = vunpack.c.h.b16 %v364
    %v2832 = vunpack.c.l.b16 %v365
    %v2833 = vunpack.c.h.b16 %v365
    %v2834 = vunpack.c.l.b16 %v366
    %v2835 = vunpack.c.h.b16 %v366
    %v2836 = vunpack.c.l.b16 %v367
    %v2837 = vunpack.c.h.b16 %v367
    %v2838 = vunpack.c.l.b16 %v368
    %v2839 = vunpack.c.h.b16 %v368
    %v2840 = vunpack.c.l.b16 %v369
    %v2841 = vunpack.c.h.b16 %v369
    %v2842 = vunpack.c.l.b16 %v370
    %v2843 = vunpack.c.h.b16 %v370
    %v2844 = vunpack.c.l.b16 %v371
    %v2845 = vunpack.c.h.b16 %v371
    %v2846 = vunpack.c.l.b16 %v372
    %v2847 = vunpack.c.h.b16 %v372
    %v2848 = vunpack.c.l.b16 %v373
    %v2849 = vunpack.c.h.b16 %v373
    %v2850 = vunpack.c.l.b16 %v374
    %v2851 = vunpack.c.h.b16 %v374
    %v2852 = vunpack.c.l.b16 %v375
    %v2853 = vunpack.c.h.b16 %v375
    %v2854 = vunpack.c.l.b16 %v376
    %v2855 = vunpack.c.h.b16 %v376
    %v2856 = vunpack.c.l.b16 %v377
    %v2857 = vunpack.c.h.b16 %v377
    %v2858 = vunpack.c.l.b16 %v378
    %v2859 = vunpack.c.h.b16 %v378
    %v2860 = vunpack.c.l.b16 %v379
    %v2861 = vunpack.c.h.b16 %v379
    %v2862 = vunpack.c.l.b16 %v380
    %v2863 = vunpack.c.h.b16 %v380
    %v2864 = vunpack.c.l.b16 %v381
    %v2865 = vunpack.c.h.b16 %v381
    %v2866 = vunpack.c.l.b16 %v382
    %v2867 = vunpack.c.h.b16 %v382
    %v2868 = vunpack.c.l.b16 %v383
    %v2869 = vunpack.c.h.b16 %v383
    %v2870 = vunpack.c.l.b16 %v384
    %v2871 = vunpack.c.h.b16 %v384
    %v2872 = vunpack.c.l.b16 %v385
    %v2873 = vunpack.c.h.b16 %v385
    %v2874 = vunpack.c.l.b16 %v386
    %v2875 = vunpack.c.h.b16 %v386
    %v2876 = vunpack.c.l.b16 %v387
    %v2877 = vunpack.c.h.b16 %v387
    %v2878 = vunpack.c.l.b16 %v388
    %v2879 = vunpack.c.h.b16 %v388
    %v2880 = vunpack.c.l.b16 %v389
    %v2881 = vunpack.c.h.b16 %v389
    %v2882 = vunpack.c.l.b16 %v390
    %v2883 = vunpack.c.h.b16 %v390
    %v2884 = vunpack.c.l.b16 %v391
    %v2885 = vunpack.c.h.b16 %v391
    %v2886 = vunpack.c.l.b16 %v392
    %v2887 = vunpack.c.h.b16 %v392
    %v2888 = vunpack.c.l.b16 %v393
    %v2889 = vunpack.c.h.b16 %v393
    %v2890 = vunpack.c.l.b16 %v394
    %v2891 = vunpack.c.h.b16 %v394
    %v2892 = vunpack.c.l.b16 %v395
    %v2893 = vunpack.c.h.b16 %v395
    %v2894 = vunpack.c.l.b16 %v396
    %v2895 = vunpack.c.h.b16 %v396
    %v2896 = vunpack.c.l.b16 %v397
    %v2897 = vunpack.c.h.b16 %v397
    %v2898 = vunpack.c.l.b16 %v398
    %v2899 = vunpack.c.h.b16 %v398
    %v2900 = vunpack.c.l.b16 %v399
    %v2901 = vunpack.c.h.b16 %v399
    %v2902 = vunpack.c.l.b16 %v400
    %v2903 = vunpack.c.h.b16 %v400
    %v2904 = vunpack.c.l.b16 %v401
    %v2905 = vunpack.c.h.b16 %v401
    %v2906 = vunpack.c.l.b16 %v402
    %v2907 = vunpack.c.h.b16 %v402
    %v2908 = vunpack.c.l.b16 %v403
    %v2909 = vunpack.c.h.b16 %v403
    %v2910 = vunpack.c.l.b16 %v404
    %v2911 = vunpack.c.h.b16 %v404
    %v2912 = vunpack.c.l.b16 %v405
    %v2913 = vunpack.c.h.b16 %v405
    %v2914 = vunpack.c.l.b16 %v406
    %v2915 = vunpack.c.h.b16 %v406
    %v2916 = vunpack.c.l.b16 %v407
    %v2917 = vunpack.c.h.b16 %v407
    %v2918 = vunpack.c.l.b16 %v408
    %v2919 = vunpack.c.h.b16 %v408
    %v2920 = vunpack.c.l.b16 %v409
    %v2921 = vunpack.c.h.b16 %v409
    %v2922 = vunpack.c.l.b16 %v410
    %v2923 = vunpack.c.h.b16 %v410
    %v2924 = vunpack.c.l.b16 %v411
    %v2925 = vunpack.c.h.b16 %v411
    %v2926 = vunpack.c.l.b16 %v412
    %v2927 = vunpack.c.h.b16 %v412
    %v2928 = vunpack.c.l.b16 %v413
    %v2929 = vunpack.c.h.b16 %v413
    %v2930 = vunpack.c.l.b16 %v414
    %v2931 = vunpack.c.h.b16 %v414
    %v2932 = vunpack.c.l.b16 %v415
    %v2933 = vunpack.c.h.b16 %v415
    %v2934 = vunpack.c.l.b16 %v416
    %v2935 = vunpack.c.h.b16 %v416
    %v2936 = vunpack.c.l.b16 %v417
    %v2937 = vunpack.c.h.b16 %v417
    %v2938 = vunpack.c.l.b16 %v418
    %v2939 = vunpack.c.h.b16 %v418
    %v2940 = vunpack.c.l.b16 %v419
    %v2941 = vunpack.c.h.b16 %v419
    %v2942 = vunpack.c.l.b16 %v420
    %v2943 = vunpack.c.h.b16 %v420
    %v2944 = vunpack.c.l.b16 %v421
    %v2945 = vunpack.c.h.b16 %v421
    %v2946 = vunpack.c.l.b16 %v422
    %v2947 = vunpack.c.h.b16 %v422
    %v2948 = vunpack.c.l.b16 %v423
    %v2949 = vunpack.c.h.b16 %v423
    %v2950 = vunpack.c.l.b16 %v424
    %v2951 = vunpack.c.h.b16 %v424
    %v2952 = vunpack.c.l.b16 %v425
    %v2953 = vunpack.c.h.b16 %v425
    %v2954 = vunpack.c.l.b16 %v426
    %v2955 = vunpack.c.h.b16 %v426
    %v2956 = vunpack.c.l.b16 %v427
    %v2957 = vunpack.c.h.b16 %v427
    %v2958 = vunpack.c.l.b16 %v428
    %v2959 = vunpack.c.h.b16 %v428
    %v2960 = vunpack.c.l.b16 %v429
    %v2961 = vunpack.c.h.b16 %v429
    %v2962 = vunpack.c.l.b16 %v430
    %v2963 = vunpack.c.h.b16 %v430
    %v2964 = vunpack.c.l.b16 %v431
    %v2965 = vunpack.c.h.b16 %v431
    %v2966 = vunpack.c.l.b16 %v432
    %v2967 = vunpack.c.h.b16 %v432
    %v2968 = vunpack.c.l.b16 %v433
    %v2969 = vunpack.c.h.b16 %v433
    %v2970 = vunpack.c.l.b16 %v434
    %v2971 = vunpack.c.h.b16 %v434
    %v2972 = vunpack.c.l.b16 %v435
    %v2973 = vunpack.c.h.b16 %v435
    %v2974 = vunpack.c.l.b16 %v436
    %v2975 = vunpack.c.h.b16 %v436
    %v2976 = vunpack.c.l.b16 %v437
    %v2977 = vunpack.c.h.b16 %v437
    %v2978 = vunpack.c.l.b16 %v438
    %v2979 = vunpack.c.h.b16 %v438
    %v2980 = vunpack.c.l.b16 %v439
    %v2981 = vunpack.c.h.b16 %v439
    %v2982 = vunpack.c.l.b16 %v440
    %v2983 = vunpack.c.h.b16 %v440
    %v2984 = vunpack.c.l.b16 %v441
    %v2985 = vunpack.c.h.b16 %v441
    %v2986 = vunpack.c.l.b16 %v442
    %v2987 = vunpack.c.h.b16 %v442
    %v2988 = vunpack.c.l.b16 %v443
    %v2989 = vunpack.c.h.b16 %v443
    %v2990 = vunpack.c.l.b16 %v444
    %v2991 = vunpack.c.h.b16 %v444
    %v2992 = vunpack.c.l.b16 %v445
    %v2993 = vunpack.c.h.b16 %v445
    %v2994 = vunpack.c.l.b16 %v446
    %v2995 = vunpack.c.h.b16 %v446
    %v2996 = vunpack.c.l.b16 %v447
    %v2997 = vunpack.c.h.b16 %v447
    %v2998 = vunpack.c.l.b16 %v448
    %v2999 = vunpack.c.h.b16 %v448
    %v3000 = vunpack.c.l.b16 %v449
    %v3001 = vunpack.c.h.b16 %v449
    %v3002 = vunpack.c.l.b16 %v450
    %v3003 = vunpack.c.h.b16 %v450
    %v3004 = vunpack.c.l.b16 %v451
    %v3005 = vunpack.c.h.b16 %v451
    %v3006 = vunpack.c.l.b16 %v452
    %v3007 = vunpack.c.h.b16 %v452
    %v3008 = vunpack.c.l.b16 %v453
    %v3009 = vunpack.c.h.b16 %v453
    %v3010 = vunpack.c.l.b16 %v454
    %v3011 = vunpack.c.h.b16 %v454
    %v3012 = vunpack.c.l.b16 %v455
    %v3013 = vunpack.c.h.b16 %v455
    %v3014 = vunpack.c.l.b16 %v456
    %v3015 = vunpack.c.h.b16 %v456
    %v3016 = vunpack.c.l.b16 %v457
    %v3017 = vunpack.c.h.b16 %v457
    %v3018 = vunpack.c.l.b16 %v458
    %v3019 = vunpack.c.h.b16 %v458
    %v3020 = vunpack.c.l.b16 %v459
    %v3021 = vunpack.c.h.b16 %v459
    %v3022 = vunpack.c.l.b16 %v460
    %v3023 = vunpack.c.h.b16 %v460
    %v3024 = vunpack.c.l.b16 %v461
    %v3025 = vunpack.c.h.b16 %v461
    %v3026 = vunpack.c.l.b16 %v462
    %v3027 = vunpack.c.h.b16 %v462
    %v3028 = vunpack.c.l.b16 %v463
    %v3029 = vunpack.c.h.b16 %v463
    %v3030 = vunpack.c.l.b16 %v464
    %v3031 = vunpack.c.h.b16 %v464
    %v3032 = vunpack.c.l.b16 %v465
    %v3033 = vunpack.c.h.b16 %v465
    %v3034 = vunpack.c.l.b16 %v466
    %v3035 = vunpack.c.h.b16 %v466
    %v3036 = vunpack.c.l.b16 %v467
    %v3037 = vunpack.c.h.b16 %v467
    %v3038 = vunpack.c.l.b16 %v468
    %v3039 = vunpack.c.h.b16 %v468
    %v3040 = vunpack.c.l.b16 %v469
    %v3041 = vunpack.c.h.b16 %v469
    %v3042 = vunpack.c.l.b16 %v470
    %v3043 = vunpack.c.h.b16 %v470
    %v3044 = vunpack.c.l.b16 %v471
    %v3045 = vunpack.c.h.b16 %v471
    %v3046 = vunpack.c.l.b16 %v472
    %v3047 = vunpack.c.h.b16 %v472
    %v3048 = vunpack.c.l.b16 %v473
    %v3049 = vunpack.c.h.b16 %v473
    %v3050 = vunpack.c.l.b16 %v474
    %v3051 = vunpack.c.h.b16 %v474
    %v3052 = vunpack.c.l.b16 %v475
    %v3053 = vunpack.c.h.b16 %v475
    %v3054 = vunpack.c.l.b16 %v476
    %v3055 = vunpack.c.h.b16 %v476
    %v3056 = vunpack.c.l.b16 %v477
    %v3057 = vunpack.c.h.b16 %v477
    %v3058 = vunpack.c.l.b16 %v478
    %v3059 = vunpack.c.h.b16 %v478
    %v3060 = vunpack.c.l.b16 %v479
    %v3061 = vunpack.c.h.b16 %v479
    %v3062 = vunpack.c.l.b16 %v480
    %v3063 = vunpack.c.h.b16 %v480
    %v3064 = vunpack.c.l.b16 %v481
    %v3065 = vunpack.c.h.b16 %v481
    %v3066 = vunpack.c.l.b16 %v482
    %v3067 = vunpack.c.h.b16 %v482
    %v3068 = vunpack.c.l.b16 %v483
    %v3069 = vunpack.c.h.b16 %v483
    %v3070 = vunpack.c.l.b16 %v484
    %v3071 = vunpack.c.h.b16 %v484
    %v3072 = vunpack.c.l.b16 %v485
    %v3073 = vunpack.c.h.b16 %v485
    %v3074 = vunpack.c.l.b16 %v486
    %v3075 = vunpack.c.h.b16 %v486
    %v3076 = vunpack.c.l.b16 %v487
    %v3077 = vunpack.c.h.b16 %v487
    %v3078 = vunpack.c.l.b16 %v488
    %v3079 = vunpack.c.h.b16 %v488
    %v3080 = vunpack.c.l.b16 %v489
    %v3081 = vunpack.c.h.b16 %v489
    %v3082 = vunpack.c.l.b16 %v490
    %v3083 = vunpack.c.h.b16 %v490
    %v3084 = vunpack.c.l.b16 %v491
    %v3085 = vunpack.c.h.b16 %v491
    %v3086 = vunpack.c.l.b16 %v492
    %v3087 = vunpack.c.h.b16 %v492
    %v3088 = vunpack.c.l.b16 %v493
    %v3089 = vunpack.c.h.b16 %v493
    %v3090 = vunpack.c.l.b16 %v494
    %v3091 = vunpack.c.h.b16 %v494
    %v3092 = vunpack.c.l.b16 %v495
    %v3093 = vunpack.c.h.b16 %v495
    %v3094 = vunpack.c.l.b16 %v496
    %v3095 = vunpack.c.h.b16 %v496
    %v3096 = vunpack.c.l.b16 %v497
    %v3097 = vunpack.c.h.b16 %v497
    %v3098 = vunpack.c.l.b16 %v498
    %v3099 = vunpack.c.h.b16 %v498
    %v3100 = vunpack.c.l.b16 %v499
    %v3101 = vunpack.c.h.b16 %v499
    %v3102 = vunpack.c.l.b16 %v500
    %v3103 = vunpack.c.h.b16 %v500
    %v3104 = vunpack.c.l.b16 %v501
    %v3105 = vunpack.c.h.b16 %v501
    %v3106 = vunpack.c.l.b16 %v502
    %v3107 = vunpack.c.h.b16 %v502
    %v3108 = vunpack.c.l.b16 %v503
    %v3109 = vunpack.c.h.b16 %v503
    %v3110 = vunpack.c.l.b16 %v504
    %v3111 = vunpack.c.h.b16 %v504
    %v3112 = vunpack.c.l.b16 %v505
    %v3113 = vunpack.c.h.b16 %v505
    %v3114 = vunpack.c.l.b16 %v506
    %v3115 = vunpack.c.h.b16 %v506
    %v3116 = vunpack.c.l.b16 %v507
    %v3117 = vunpack.c.h.b16 %v507
    %v3118 = vunpack.c.l.b16 %v508
    %v3119 = vunpack.c.h.b16 %v508
    %v3120 = vunpack.c.l.b16 %v509
    %v3121 = vunpack.c.h.b16 %v509
    %v3122 = vunpack.c.l.b16 %v510
    %v3123 = vunpack.c.h.b16 %v510
    %v3124 = vunpack.c.l.b16 %v511
    %v3125 = vunpack.c.h.b16 %v511
    %v3126 = vunpack.c.l.b16 %v512
    %v3127 = vunpack.c.h.b16 %v512
    %v3128 = vunpack.c.l.b16 %v513
    %v3129 = vunpack.c.h.b16 %v513
    %v3130 = vunpack.c.l.b16 %v514
    %v3131 = vunpack.c.h.b16 %v514
    %v3132 = vunpack.c.l.b16 %v515
    %v3133 = vunpack.c.h.b16 %v515
    %v3134 = vunpack.c.l.b16 %v516
    %v3135 = vunpack.c.h.b16 %v516
    %v3136 = vunpack.c.l.b16 %v517
    %v3137 = vunpack.c.h.b16 %v517
    %v3138 = vunpack.c.l.b16 %v518
    %v3139 = vunpack.c.h.b16 %v518
    %v3140 = vunpack.c.l.b16 %v519
    %v3141 = vunpack.c.h.b16 %v519
    %v3142 = vunpack.c.l.b16 %v520
    %v3143 = vunpack.c.h.b16 %v520
    %v3144 = vunpack.c.l.b16 %v521
    %v3145 = vunpack.c.h.b16 %v521
    %v3146 = vunpack.c.l.b16 %v522
    %v3147 = vunpack.c.h.b16 %v522
    %v3148 = vunpack.c.l.b16 %v523
    %v3149 = vunpack.c.h.b16 %v523
    %v3150 = vunpack.c.l.b16 %v524
    %v3151 = vunpack.c.h.b16 %v524
    %v3152 = vunpack.c.l.b16 %v525
    %v3153 = vunpack.c.h.b16 %v525
    %v3154 = vunpack.c.l.b16 %v526
    %v3155 = vunpack.c.h.b16 %v526
    %v3156 = vunpack.c.l.b16 %v527
    %v3157 = vunpack.c.h.b16 %v527
    %v3158 = vunpack.c.l.b16 %v528
    %v3159 = vunpack.c.h.b16 %v528
    %v3160 = vunpack.c.l.b16 %v529
    %v3161 = vunpack.c.h.b16 %v529
    %v3162 = vunpack.c.l.b16 %v530
    %v3163 = vunpack.c.h.b16 %v530
    %v3164 = vunpack.c.l.b16 %v531
    %v3165 = vunpack.c.h.b16 %v531
    %v3166 = vunpack.c.l.b16 %v532
    %v3167 = vunpack.c.h.b16 %v532
    %v3168 = vunpack.c.l.b16 %v533
    %v3169 = vunpack.c.h.b16 %v533
    %v3170 = vunpack.c.l.b16 %v534
    %v3171 = vunpack.c.h.b16 %v534
    %v3172 = vunpack.c.l.b16 %v535
    %v3173 = vunpack.c.h.b16 %v535
    %v3174 = vunpack.c.l.b16 %v536
    %v3175 = vunpack.c.h.b16 %v536
    %v3176 = vunpack.c.l.b16 %v537
    %v3177 = vunpack.c.h.b16 %v537
    %v3178 = vunpack.c.l.b16 %v538
    %v3179 = vunpack.c.h.b16 %v538
    %v3180 = vunpack.c.l.b16 %v539
    %v3181 = vunpack.c.h.b16 %v539
    %v3182 = vunpack.c.l.b16 %v540
    %v3183 = vunpack.c.h.b16 %v540
    %v3184 = vunpack.c.l.b16 %v541
    %v3185 = vunpack.c.h.b16 %v541
    %v3186 = vunpack.c.l.b16 %v542
    %v3187 = vunpack.c.h.b16 %v542
    %v3188 = vunpack.c.l.b16 %v543
    %v3189 = vunpack.c.h.b16 %v543
    %v3190 = vunpack.c.l.b16 %v544
    %v3191 = vunpack.c.h.b16 %v544
    %v3192 = vunpack.c.l.b16 %v545
    %v3193 = vunpack.c.h.b16 %v545
    %v3194 = vunpack.c.l.b16 %v546
    %v3195 = vunpack.c.h.b16 %v546
    %v3196 = vunpack.c.l.b16 %v547
    %v3197 = vunpack.c.h.b16 %v547
    %v3198 = vunpack.c.l.b16 %v548
    %v3199 = vunpack.c.h.b16 %v548
    %v3200 = vunpack.c.l.b16 %v549
    %v3201 = vunpack.c.h.b16 %v549
    %v3202 = vunpack.c.l.b16 %v550
    %v3203 = vunpack.c.h.b16 %v550
    %v3204 = vunpack.c.l.b16 %v551
    %v3205 = vunpack.c.h.b16 %v551
    %v3206 = vunpack.c.l.b16 %v552
    %v3207 = vunpack.c.h.b16 %v552
    %v3208 = vunpack.c.l.b16 %v553
    %v3209 = vunpack.c.h.b16 %v553
    %v3210 = vunpack.c.l.b16 %v554
    %v3211 = vunpack.c.h.b16 %v554
    %v3212 = vunpack.c.l.b16 %v555
    %v3213 = vunpack.c.h.b16 %v555
    %v3214 = vunpack.c.l.b16 %v556
    %v3215 = vunpack.c.h.b16 %v556
    %v3216 = vunpack.c.l.b16 %v557
    %v3217 = vunpack.c.h.b16 %v557
    %v3218 = vunpack.c.l.b16 %v558
    %v3219 = vunpack.c.h.b16 %v558
    %v3220 = vunpack.c.l.b16 %v559
    %v3221 = vunpack.c.h.b16 %v559
    %v3222 = vunpack.c.l.b16 %v560
    %v3223 = vunpack.c.h.b16 %v560
    %v3224 = vunpack.c.l.b16 %v561
    %v3225 = vunpack.c.h.b16 %v561
    %v3226 = vunpack.c.l.b16 %v562
    %v3227 = vunpack.c.h.b16 %v562
    %v3228 = vunpack.c.l.b16 %v563
    %v3229 = vunpack.c.h.b16 %v563
    %v3230 = vunpack.c.l.b16 %v564
    %v3231 = vunpack.c.h.b16 %v564
    %v3232 = vunpack.c.l.b16 %v565
    %v3233 = vunpack.c.h.b16 %v565
    %v3234 = vunpack.c.l.b16 %v566
    %v3235 = vunpack.c.h.b16 %v566
    %v3236 = vunpack.c.l.b16 %v567
    %v3237 = vunpack.c.h.b16 %v567
    %v3238 = vunpack.c.l.b16 %v568
    %v3239 = vunpack.c.h.b16 %v568
    %v3240 = vunpack.c.l.b16 %v569
    %v3241 = vunpack.c.h.b16 %v569
    %v3242 = vunpack.c.l.b16 %v570
    %v3243 = vunpack.c.h.b16 %v570
    %v3244 = vunpack.c.l.b16 %v571
    %v3245 = vunpack.c.h.b16 %v571
    %v3246 = vunpack.c.l.b16 %v572
    %v3247 = vunpack.c.h.b16 %v572
    %v3248 = vunpack.c.l.b16 %v573
    %v3249 = vunpack.c.h.b16 %v573
    %v3250 = vunpack.c.l.b16 %v574
    %v3251 = vunpack.c.h.b16 %v574
    %v3252 = vunpack.c.l.b16 %v575
    %v3253 = vunpack.c.h.b16 %v575
    %v3254 = vunpack.c.l.b16 %v576
    %v3255 = vunpack.c.h.b16 %v576
    %v3256 = vunpack.c.l.b16 %v577
    %v3257 = vunpack.c.h.b16 %v577
    %v3258 = vunpack.c.l.b16 %v578
    %v3259 = vunpack.c.h.b16 %v578
    %v3260 = vunpack.c.l.b16 %v579
    %v3261 = vunpack.c.h.b16 %v579
    %v3262 = vunpack.c.l.b16 %v580
    %v3263 = vunpack.c.h.b16 %v580
    %v3264 = vunpack.c.l.b16 %v581
    %v3265 = vunpack.c.h.b16 %v581
    %v3266 = vunpack.c.l.b16 %v582
    %v3267 = vunpack.c.h.b16 %v582
    %v3268 = vunpack.c.l.b16 %v583
    %v3269 = vunpack.c.h.b16 %v583
    %v3270 = vunpack.c.l.b16 %v584
    %v3271 = vunpack.c.h.b16 %v584
    %v3272 = vunpack.c.l.b16 %v585
    %v3273 = vunpack.c.h.b16 %v585
    %v3274 = vunpack.c.l.b16 %v586
    %v3275 = vunpack.c.h.b16 %v586
    %v3276 = vunpack.c.l.b16 %v587
    %v3277 = vunpack.c.h.b16 %v587
    %v3278 = vunpack.c.l.b16 %v588
    %v3279 = vunpack.c.h.b16 %v588
    %v3280 = vunpack.c.l.b16 %v589
    %v3281 = vunpack.c.h.b16 %v589
    %v3282 = vunpack.c.l.b16 %v590
    %v3283 = vunpack.c.h.b16 %v590
    %v3284 = vunpack.c.l.b16 %v591
    %v3285 = vunpack.c.h.b16 %v591
    %v3286 = vunpack.c.l.b16 %v592
    %v3287 = vunpack.c.h.b16 %v592
    %v3288 = vunpack.c.l.b16 %v593
    %v3289 = vunpack.c.h.b16 %v593
    %v3290 = vunpack.c.l.b16 %v594
    %v3291 = vunpack.c.h.b16 %v594
    %v3292 = vunpack.c.l.b16 %v595
    %v3293 = vunpack.c.h.b16 %v595
    %v3294 = vunpack.c.l.b16 %v596
    %v3295 = vunpack.c.h.b16 %v596
    %v3296 = vunpack.c.l.b16 %v597
    %v3297 = vunpack.c.h.b16 %v597
    %v3298 = vunpack.c.l.b16 %v598
    %v3299 = vunpack.c.h.b16 %v598
    %v3300 = vunpack.c.l.b16 %v599
    %v3301 = vunpack.c.h.b16 %v599
    %v3302 = vunpack.c.l.b16 %v600
    %v3303 = vunpack.c.h.b16 %v600
    %v3304 = vunpack.c.l.b16 %v601
    %v3305 = vunpack.c.h.b16 %v601
    %v3306 = vunpack.c.l.b16 %v602
    %v3307 = vunpack.c.h.b16 %v602
    %v3308 = vunpack.c.l.b16 %v603
    %v3309 = vunpack.c.h.b16 %v603
    %v3310 = vunpack.c.l.b16 %v604
    %v3311 = vunpack.c.h.b16 %v604
    %v3312 = vunpack.c.l.b16 %v605
    %v3313 = vunpack.c.h.b16 %v605
    %v3314 = vunpack.c.l.b16 %v606
    %v3315 = vunpack.c.h.b16 %v606
    %v3316 = vunpack.c.l.b16 %v607
    %v3317 = vunpack.c.h.b16 %v607
    %v3318 = vunpack.c.l.b16 %v608
    %v3319 = vunpack.c.h.b16 %v608
    %v3320 = vunpack.c.l.b16 %v609
    %v3321 = vunpack.c.h.b16 %v609
    %v3322 = vunpack.c.l.b16 %v610
    %v3323 = vunpack.c.h.b16 %v610
    %v3324 = vunpack.c.l.b16 %v611
    %v3325 = vunpack.c.h.b16 %v611
    %v3326 = vunpack.c.l.b16 %v612
    %v3327 = vunpack.c.h.b16 %v612
    %v3328 = vunpack.c.l.b16 %v613
    %v3329 = vunpack.c.h.b16 %v613
    %v3330 = vunpack.c.l.b16 %v614
    %v3331 = vunpack.c.h.b16 %v614
    %v3332 = vunpack.c.l.b16 %v615
    %v3333 = vunpack.c.h.b16 %v615
    %v3334 = vunpack.c.l.b16 %v616
    %v3335 = vunpack.c.h.b16 %v616
    %v3336 = vunpack.c.l.b16 %v617
    %v3337 = vunpack.c.h.b16 %v617
    %v3338 = vunpack.c.l.b16 %v618
    %v3339 = vunpack.c.h.b16 %v618
    %v3340 = vunpack.c.l.b16 %v619
    %v3341 = vunpack.c.h.b16 %v619
    %v3342 = vunpack.c.l.b16 %v620
    %v3343 = vunpack.c.h.b16 %v620
    %v3344 = vunpack.c.l.b16 %v621
    %v3345 = vunpack.c.h.b16 %v621
    %v3346 = vunpack.c.l.b16 %v622
    %v3347 = vunpack.c.h.b16 %v622
    %v3348 = vunpack.c.l.b16 %v623
    %v3349 = vunpack.c.h.b16 %v623
    %v3350 = vunpack.c.l.b16 %v624
    %v3351 = vunpack.c.h.b16 %v624
    %v3352 = vunpack.c.l.b16 %v625
    %v3353 = vunpack.c.h.b16 %v625
    %v3354 = vunpack.c.l.b16 %v626
    %v3355 = vunpack.c.h.b16 %v626
    %v3356 = vunpack.c.l.b16 %v627
    %v3357 = vunpack.c.h.b16 %v627
    %v3358 = vunpack.c.l.b16 %v628
    %v3359 = vunpack.c.h.b16 %v628
    %v3360 = vunpack.c.l.b16 %v629
    %v3361 = vunpack.c.h.b16 %v629
    %v3362 = vunpack.c.l.b16 %v630
    %v3363 = vunpack.c.h.b16 %v630
    %v3364 = vunpack.c.l.b16 %v631
    %v3365 = vunpack.c.h.b16 %v631
    %v3366 = vunpack.c.l.b16 %v632
    %v3367 = vunpack.c.h.b16 %v632
    %v3368 = vunpack.c.l.b16 %v633
    %v3369 = vunpack.c.h.b16 %v633
    %v3370 = vunpack.c.l.b16 %v634
    %v3371 = vunpack.c.h.b16 %v634
    %v3372 = vunpack.c.l.b16 %v635
    %v3373 = vunpack.c.h.b16 %v635
    %v3374 = vunpack.c.l.b16 %v636
    %v3375 = vunpack.c.h.b16 %v636
    %v3376 = vunpack.c.l.b16 %v637
    %v3377 = vunpack.c.h.b16 %v637
    %v3378 = vunpack.c.l.b16 %v638
    %v3379 = vunpack.c.h.b16 %v638
    %v3380 = vunpack.c.l.b16 %v639
    %v3381 = vunpack.c.h.b16 %v639
    %v3382 = vunpack.c.l.b16 %v640
    %v3383 = vunpack.c.h.b16 %v640
    %v3384 = vunpack.c.l.b16 %v641
    %v3385 = vunpack.c.h.b16 %v641
    %v3386 = vunpack.c.l.b16 %v642
    %v3387 = vunpack.c.h.b16 %v642
    %v3388 = vunpack.c.l.b16 %v643
    %v3389 = vunpack.c.h.b16 %v643
    %v3390 = vunpack.c.l.b16 %v644
    %v3391 = vunpack.c.h.b16 %v644
    %v3392 = vunpack.c.l.b16 %v645
    %v3393 = vunpack.c.h.b16 %v645
    %v3394 = vunpack.c.l.b16 %v646
    %v3395 = vunpack.c.h.b16 %v646
    %v3396 = vunpack.c.l.b16 %v647
    %v3397 = vunpack.c.h.b16 %v647
    %v3398 = vunpack.c.l.b16 %v648
    %v3399 = vunpack.c.h.b16 %v648
    %v3400 = vunpack.c.l.b16 %v649
    %v3401 = vunpack.c.h.b16 %v649
    %v3402 = vunpack.c.l.b16 %v650
    %v3403 = vunpack.c.h.b16 %v650
    %v3404 = vunpack.c.l.b16 %v651
    %v3405 = vunpack.c.h.b16 %v651
    %v3406 = vunpack.c.l.b16 %v652
    %v3407 = vunpack.c.h.b16 %v652
    %v3408 = vunpack.c.l.b16 %v653
    %v3409 = vunpack.c.h.b16 %v653
    %v3410 = vunpack.c.l.b16 %v654
    %v3411 = vunpack.c.h.b16 %v654
    %v3412 = vunpack.c.l.b16 %v655
    %v3413 = vunpack.c.h.b16 %v655
    %v3414 = vunpack.c.l.b16 %v656
    %v3415 = vunpack.c.h.b16 %v656
    %v3416 = vunpack.c.l.b16 %v657
    %v3417 = vunpack.c.h.b16 %v657
    %v3418 = vunpack.c.l.b16 %v658
    %v3419 = vunpack.c.h.b16 %v658
    %v3420 = vunpack.c.l.b16 %v659
    %v3421 = vunpack.c.h.b16 %v659
    %v3422 = vunpack.c.l.b16 %v660
    %v3423 = vunpack.c.h.b16 %v660
    %v3424 = vunpack.c.l.b16 %v661
    %v3425 = vunpack.c.h.b16 %v661
    %v3426 = vunpack.c.l.b16 %v662
    %v3427 = vunpack.c.h.b16 %v662
    %v3428 = vunpack.c.l.b16 %v663
    %v3429 = vunpack.c.h.b16 %v663
    %v3430 = vunpack.c.l.b16 %v664
    %v3431 = vunpack.c.h.b16 %v664
    %v3432 = vunpack.c.l.b16 %v665
    %v3433 = vunpack.c.h.b16 %v665
    %v3434 = vunpack.c.l.b16 %v666
    %v3435 = vunpack.c.h.b16 %v666
    %v3436 = vunpack.c.l.b16 %v667
    %v3437 = vunpack.c.h.b16 %v667
    %v3438 = vunpack.c.l.b16 %v668
    %v3439 = vunpack.c.h.b16 %v668
    %v3440 = vunpack.c.l.b16 %v669
    %v3441 = vunpack.c.h.b16 %v669
    %v3442 = vunpack.c.l.b16 %v670
    %v3443 = vunpack.c.h.b16 %v670
    %v3444 = vunpack.c.l.b16 %v671
    %v3445 = vunpack.c.h.b16 %v671
    %v3446 = vunpack.c.l.b16 %v672
    %v3447 = vunpack.c.h.b16 %v672
    %v3448 = vunpack.c.l.b16 %v673
    %v3449 = vunpack.c.h.b16 %v673
    %v3450 = vunpack.c.l.b16 %v674
    %v3451 = vunpack.c.h.b16 %v674
    %v3452 = vunpack.c.l.b16 %v675
    %v3453 = vunpack.c.h.b16 %v675
    %v3454 = vunpack.c.l.b16 %v676
    %v3455 = vunpack.c.h.b16 %v676
    %v3456 = vunpack.c.l.b16 %v677
    %v3457 = vunpack.c.h.b16 %v677
    %v3458 = vunpack.c.l.b16 %v678
    %v3459 = vunpack.c.h.b16 %v678
    %v3460 = vunpack.c.l.b16 %v679
    %v3461 = vunpack.c.h.b16 %v679
    %v3462 = vunpack.c.l.b16 %v680
    %v3463 = vunpack.c.h.b16 %v680
    %v3464 = vunpack.c.l.b16 %v681
    %v3465 = vunpack.c.h.b16 %v681
    %v3466 = vunpack.c.l.b16 %v682
    %v3467 = vunpack.c.h.b16 %v682
    %v3468 = vunpack.c.l.b16 %v683
    %v3469 = vunpack.c.h.b16 %v683
    %v3470 = vunpack.c.l.b16 %v684
    %v3471 = vunpack.c.h.b16 %v684
    %v3472 = vunpack.c.l.b16 %v685
    %v3473 = vunpack.c.h.b16 %v685
    %v3474 = vunpack.c.l.b16 %v686
    %v3475 = vunpack.c.h.b16 %v686
    %v3476 = vunpack.c.l.b16 %v687
    %v3477 = vunpack.c.h.b16 %v687
    %v3478 = vunpack.c.l.b16 %v688
    %v3479 = vunpack.c.h.b16 %v688
    %v3480 = vunpack.c.l.b16 %v689
    %v3481 = vunpack.c.h.b16 %v689
    %v3482 = vunpack.c.l.b16 %v690
    %v3483 = vunpack.c.h.b16 %v690
    %v3484 = vunpack.c.l.b16 %v691
    %v3485 = vunpack.c.h.b16 %v691
    %v3486 = vunpack.c.l.b16 %v692
    %v3487 = vunpack.c.h.b16 %v692
    %v3488 = vunpack.c.l.b16 %v693
    %v3489 = vunpack.c.h.b16 %v693
    %v3490 = vunpack.c.l.b16 %v694
    %v3491 = vunpack.c.h.b16 %v694
    %v3492 = vunpack.c.l.b16 %v695
    %v3493 = vunpack.c.h.b16 %v695
    %v3494 = vunpack.c.l.b16 %v696
    %v3495 = vunpack.c.h.b16 %v696
    %v3496 = vunpack.c.l.b16 %v697
    %v3497 = vunpack.c.h.b16 %v697
    %v3498 = vunpack.c.l.b16 %v698
    %v3499 = vunpack.c.h.b16 %v698
    %v3500 = vunpack.c.l.b16 %v699
    %v3501 = vunpack.c.h.b16 %v699
    %v3502 = vunpack.c.l.b16 %v700
    %v3503 = vunpack.c.h.b16 %v700
    %v3504 = vunpack.c.l.b16 %v701
    %v3505 = vunpack.c.h.b16 %v701
    %v3506 = vunpack.c.l.b16 %v702
    %v3507 = vunpack.c.h.b16 %v702
    %v3508 = vunpack.c.l.b16 %v703
    %v3509 = vunpack.c.h.b16 %v703
    %v3510 = vunpack.c.l.b16 %v704
    %v3511 = vunpack.c.h.b16 %v704
    %v3512 = vunpack.c.l.b16 %v705
    %v3513 = vunpack.c.h.b16 %v705
    %v3514 = vunpack.c.l.b16 %v706
    %v3515 = vunpack.c.h.b16 %v706
    %v3516 = vunpack.c.l.b16 %v707
    %v3517 = vunpack.c.h.b16 %v707
    %v3518 = vunpack.c.l.b16 %v708
    %v3519 = vunpack.c.h.b16 %v708
    %v3520 = vunpack.c.l.b16 %v709
    %v3521 = vunpack.c.h.b16 %v709
    %v3522 = vunpack.c.l.b16 %v710
    %v3523 = vunpack.c.h.b16 %v710
    %v3524 = vunpack.c.l.b16 %v711
    %v3525 = vunpack.c.h.b16 %v711
    %v3526 = vunpack.c.l.b16 %v712
    %v3527 = vunpack.c.h.b16 %v712
    %v3528 = vunpack.c.l.b16 %v713
    %v3529 = vunpack.c.h.b16 %v713
    %v3530 = vunpack.c.l.b16 %v714
    %v3531 = vunpack.c.h.b16 %v714
    %v3532 = vunpack.c.l.b16 %v715
    %v3533 = vunpack.c.h.b16 %v715
    %v3534 = vunpack.c.l.b16 %v716
    %v3535 = vunpack.c.h.b16 %v716
    %v3536 = vunpack.c.l.b16 %v717
    %v3537 = vunpack.c.h.b16 %v717
    %v3538 = vunpack.c.l.b16 %v718
    %v3539 = vunpack.c.h.b16 %v718
    %v3540 = vunpack.c.l.b16 %v719
    %v3541 = vunpack.c.h.b16 %v719
    %v3542 = vunpack.c.l.b16 %v720
    %v3543 = vunpack.c.h.b16 %v720
    %v3544 = vunpack.c.l.b16 %v721
    %v3545 = vunpack.c.h.b16 %v721
    %v3546 = vunpack.c.l.b16 %v722
    %v3547 = vunpack.c.h.b16 %v722
    %v3548 = vunpack.c.l.b16 %v723
    %v3549 = vunpack.c.h.b16 %v723
    %v3550 = vunpack.c.l.b16 %v724
    %v3551 = vunpack.c.h.b16 %v724
    %v3552 = vunpack.c.l.b16 %v725
    %v3553 = vunpack.c.h.b16 %v725
    %v3554 = vunpack.c.l.b16 %v726
    %v3555 = vunpack.c.h.b16 %v726
    %v3556 = vunpack.c.l.b16 %v727
    %v3557 = vunpack.c.h.b16 %v727
    %v3558 = vunpack.c.l.b16 %v728
    %v3559 = vunpack.c.h.b16 %v728
    %v3560 = vunpack.c.l.b16 %v729
    %v3561 = vunpack.c.h.b16 %v729
    %v3562 = vunpack.c.l.b16 %v730
    %v3563 = vunpack.c.h.b16 %v730
    %v3564 = vunpack.c.l.b16 %v731
    %v3565 = vunpack.c.h.b16 %v731
    %v3566 = vunpack.c.l.b16 %v732
    %v3567 = vunpack.c.h.b16 %v732
    %v3568 = vunpack.c.l.b16 %v733
    %v3569 = vunpack.c.h.b16 %v733
    %v3570 = vunpack.c.l.b16 %v734
    %v3571 = vunpack.c.h.b16 %v734
    %v3572 = vunpack.c.l.b16 %v735
    %v3573 = vunpack.c.h.b16 %v735
    %v3574 = vunpack.c.l.b16 %v736
    %v3575 = vunpack.c.h.b16 %v736
    %v3576 = vunpack.c.l.b16 %v737
    %v3577 = vunpack.c.h.b16 %v737
    %v3578 = vunpack.c.l.b16 %v738
    %v3579 = vunpack.c.h.b16 %v738
    %v3580 = vunpack.c.l.b16 %v739
    %v3581 = vunpack.c.h.b16 %v739
    %v3582 = vunpack.c.l.b16 %v740
    %v3583 = vunpack.c.h.b16 %v740
    %v3584 = vunpack.c.l.b16 %v741
    %v3585 = vunpack.c.h.b16 %v741
    %v3586 = vunpack.c.l.b16 %v742
    %v3587 = vunpack.c.h.b16 %v742
    %v3588 = vunpack.c.l.b16 %v743
    %v3589 = vunpack.c.h.b16 %v743
    %v3590 = vunpack.c.l.b16 %v744
    %v3591 = vunpack.c.h.b16 %v744
    %v3592 = vunpack.c.l.b16 %v745
    %v3593 = vunpack.c.h.b16 %v745
    %v3594 = vunpack.c.l.b16 %v746
    %v3595 = vunpack.c.h.b16 %v746
    %v3596 = vunpack.c.l.b16 %v747
    %v3597 = vunpack.c.h.b16 %v747
    %v3598 = vunpack.c.l.b16 %v748
    %v3599 = vunpack.c.h.b16 %v748
    %v3600 = vunpack.c.l.b16 %v749
    %v3601 = vunpack.c.h.b16 %v749
    %v3602 = vunpack.c.l.b16 %v750
    %v3603 = vunpack.c.h.b16 %v750
    %v3604 = vunpack.c.l.b16 %v751
    %v3605 = vunpack.c.h.b16 %v751
    %v3606 = vunpack.c.l.b16 %v752
    %v3607 = vunpack.c.h.b16 %v752
    %v3608 = vunpack.c.l.b16 %v753
    %v3609 = vunpack.c.h.b16 %v753
    %v3610 = vunpack.c.l.b16 %v754
    %v3611 = vunpack.c.h.b16 %v754
    %v3612 = vunpack.c.l.b16 %v755
    %v3613 = vunpack.c.h.b16 %v755
    %v3614 = vunpack.c.l.b16 %v756
    %v3615 = vunpack.c.h.b16 %v756
    %v3616 = vunpack.c.l.b16 %v757
    %v3617 = vunpack.c.h.b16 %v757
    %v3618 = vunpack.c.l.b16 %v758
    %v3619 = vunpack.c.h.b16 %v758
    %v3620 = vunpack.c.l.b16 %v759
    %v3621 = vunpack.c.h.b16 %v759
    %v3622 = vunpack.c.l.b16 %v760
    %v3623 = vunpack.c.h.b16 %v760
    %v3624 = vunpack.c.l.b16 %v761
    %v3625 = vunpack.c.h.b16 %v761
    %v3626 = vunpack.c.l.b16 %v762
    %v3627 = vunpack.c.h.b16 %v762
    %v3628 = vunpack.c.l.b16 %v763
    %v3629 = vunpack.c.h.b16 %v763
    %v3630 = vunpack.c.l.b16 %v764
    %v3631 = vunpack.c.h.b16 %v764
    %v3632 = vunpack.c.l.b16 %v765
    %v3633 = vunpack.c.h.b16 %v765
    %v3634 = vunpack.c.l.b16 %v766
    %v3635 = vunpack.c.h.b16 %v766
    %v3636 = vunpack.c.l.b16 %v767
    %v3637 = vunpack.c.h.b16 %v767
    %v3638 = vunpack.c.l.b16 %v768
    %v3639 = vunpack.c.h.b16 %v768
    %v3640 = vunpack.c.l.b16 %v769
    %v3641 = vunpack.c.h.b16 %v769
    %v3642 = vunpack.c.l.b16 %v770
    %v3643 = vunpack.c.h.b16 %v770
    %v3644 = vunpack.c.l.b16 %v771
    %v3645 = vunpack.c.h.b16 %v771
    %v3646 = vunpack.c.l.b16 %v772
    %v3647 = vunpack.c.h.b16 %v772
    %v3648 = vunpack.c.l.b16 %v773
    %v3649 = vunpack.c.h.b16 %v773
    %v3650 = vunpack.c.l.b16 %v774
    %v3651 = vunpack.c.h.b16 %v774
    %v3652 = vunpack.c.l.b16 %v775
    %v3653 = vunpack.c.h.b16 %v775
    %v3654 = vunpack.c.l.b16 %v776
    %v3655 = vunpack.c.h.b16 %v776
    %v3656 = vunpack.c.l.b16 %v777
    %v3657 = vunpack.c.h.b16 %v777
    %v3658 = vunpack.c.l.b16 %v778
    %v3659 = vunpack.c.h.b16 %v778
    %v3660 = vunpack.c.l.b16 %v779
    %v3661 = vunpack.c.h.b16 %v779
    %v3662 = vunpack.c.l.b16 %v780
    %v3663 = vunpack.c.h.b16 %v780
    %v3664 = vunpack.c.l.b16 %v781
    %v3665 = vunpack.c.h.b16 %v781
    %v3666 = vunpack.c.l.b16 %v782
    %v3667 = vunpack.c.h.b16 %v782
    %v3668 = vunpack.c.l.b16 %v783
    %v3669 = vunpack.c.h.b16 %v783
    %v3670 = vunpack.c.l.b16 %v784
    %v3671 = vunpack.c.h.b16 %v784
    %v3672 = vunpack.c.l.b16 %v785
    %v3673 = vunpack.c.h.b16 %v785
    %v3674 = vunpack.c.l.b16 %v786
    %v3675 = vunpack.c.h.b16 %v786
    %v3676 = vunpack.c.l.b16 %v787
    %v3677 = vunpack.c.h.b16 %v787
    %v3678 = vunpack.c.l.b16 %v788
    %v3679 = vunpack.c.h.b16 %v788
    %v3680 = vunpack.c.l.b16 %v789
    %v3681 = vunpack.c.h.b16 %v789
    %v3682 = vunpack.c.l.b16 %v790
    %v3683 = vunpack.c.h.b16 %v790
    %v3684 = vunpack.c.l.b16 %v791
    %v3685 = vunpack.c.h.b16 %v791
    %v3686 = vunpack.c.l.b16 %v792
    %v3687 = vunpack.c.h.b16 %v792
    %v3688 = vunpack.c.l.b16 %v793
    %v3689 = vunpack.c.h.b16 %v793
    %v3690 = vunpack.c.l.b16 %v794
    %v3691 = vunpack.c.h.b16 %v794
    %v3692 = vunpack.c.l.b16 %v795
    %v3693 = vunpack.c.h.b16 %v795
    %v3694 = vunpack.c.l.b16 %v796
    %v3695 = vunpack.c.h.b16 %v796
    %v3696 = vunpack.c.l.b16 %v797
    %v3697 = vunpack.c.h.b16 %v797
    %v3698 = vunpack.c.l.b16 %v798
    %v3699 = vunpack.c.h.b16 %v798
    %v3700 = vunpack.c.l.b16 %v799
    %v3701 = vunpack.c.h.b16 %v799
    %v3702 = vunpack.c.l.b16 %v800
    %v3703 = vunpack.c.h.b16 %v800
    %v3704 = vunpack.c.l.b16 %v801
    %v3705 = vunpack.c.h.b16 %v801
    %v3706 = vunpack.c.l.b16 %v802
    %v3707 = vunpack.c.h.b16 %v802
    %v3708 = vunpack.c.l.b16 %v803
    %v3709 = vunpack.c.h.b16 %v803
    %v3710 = vunpack.c.l.b16 %v804
    %v3711 = vunpack.c.h.b16 %v804
    %v3712 = vunpack.c.l.b16 %v805
    %v3713 = vunpack.c.h.b16 %v805
    %v3714 = vunpack.c.l.b16 %v806
    %v3715 = vunpack.c.h.b16 %v806
    %v3716 = vunpack.c.l.b16 %v807
    %v3717 = vunpack.c.h.b16 %v807
    %v3718 = vunpack.c.l.b16 %v808
    %v3719 = vunpack.c.h.b16 %v808
    %v3720 = vunpack.c.l.b16 %v809
    %v3721 = vunpack.c.h.b16 %v809
    %v3722 = vunpack.c.l.b16 %v810
    %v3723 = vunpack.c.h.b16 %v810
    %v3724 = vunpack.c.l.b16 %v811
    %v3725 = vunpack.c.h.b16 %v811
    %v3726 = vunpack.c.l.b16 %v812
    %v3727 = vunpack.c.h.b16 %v812
    %v3728 = vunpack.c.l.b16 %v813
    %v3729 = vunpack.c.h.b16 %v813
    %v3730 = vunpack.c.l.b16 %v814
    %v3731 = vunpack.c.h.b16 %v814
    %v3732 = vunpack.c.l.b16 %v815
    %v3733 = vunpack.c.h.b16 %v815
    %v3734 = vunpack.c.l.b16 %v816
    %v3735 = vunpack.c.h.b16 %v816
    %v3736 = vunpack.c.l.b16 %v817
    %v3737 = vunpack.c.h.b16 %v817
    %v3738 = vunpack.c.l.b16 %v818
    %v3739 = vunpack.c.h.b16 %v818
    %v3740 = vunpack.c.l.b16 %v819
    %v3741 = vunpack.c.h.b16 %v819
    %v3742 = vunpack.c.l.b16 %v820
    %v3743 = vunpack.c.h.b16 %v820
    %v3744 = vunpack.c.l.b16 %v821
    %v3745 = vunpack.c.h.b16 %v821
    %v3746 = vunpack.c.l.b16 %v822
    %v3747 = vunpack.c.h.b16 %v822
    %v3748 = vunpack.c.l.b16 %v823
    %v3749 = vunpack.c.h.b16 %v823
    %v3750 = vunpack.c.l.b16 %v824
    %v3751 = vunpack.c.h.b16 %v824
    %v3752 = vunpack.c.l.b16 %v825
    %v3753 = vunpack.c.h.b16 %v825
    %v3754 = vunpack.c.l.b16 %v826
    %v3755 = vunpack.c.h.b16 %v826
    %v3756 = vunpack.c.l.b16 %v827
    %v3757 = vunpack.c.h.b16 %v827
    %v3758 = vunpack.c.l.b16 %v828
    %v3759 = vunpack.c.h.b16 %v828
    %v3760 = vunpack.c.l.b16 %v829
    %v3761 = vunpack.c.h.b16 %v829
    %v3762 = vunpack.c.l.b16 %v830
    %v3763 = vunpack.c.h.b16 %v830
    %v3764 = vunpack.c.l.b16 %v831
    %v3765 = vunpack.c.h.b16 %v831
    %v3766 = vunpack.c.l.b16 %v832
    %v3767 = vunpack.c.h.b16 %v832
    %v3768 = vunpack.c.l.b16 %v833
    %v3769 = vunpack.c.h.b16 %v833
    %v3770 = vunpack.c.l.b16 %v834
    %v3771 = vunpack.c.h.b16 %v834
    %v3772 = vunpack.c.l.b16 %v835
    %v3773 = vunpack.c.h.b16 %v835
    %v3774 = vunpack.c.l.b16 %v836
    %v3775 = vunpack.c.h.b16 %v836
    %v3776 = vunpack.c.l.b16 %v837
    %v3777 = vunpack.c.h.b16 %v837
    %v3778 = vunpack.c.l.b16 %v838
    %v3779 = vunpack.c.h.b16 %v838
    %v3780 = vunpack.c.l.b16 %v839
    %v3781 = vunpack.c.h.b16 %v839
    %v3782 = vunpack.c.l.b16 %v840
    %v3783 = vunpack.c.h.b16 %v840
    %v3784 = vunpack.c.l.b16 %v841
    %v3785 = vunpack.c.h.b16 %v841
    %v3786 = vunpack.c.l.b16 %v842
    %v3787 = vunpack.c.h.b16 %v842
    %v3788 = vunpack.c.l.b16 %v843
    %v3789 = vunpack.c.h.b16 %v843
    %v3790 = vunpack.c.l.b16 %v844
    %v3791 = vunpack.c.h.b16 %v844
    %v3792 = vunpack.c.l.b16 %v845
    %v3793 = vunpack.c.h.b16 %v845
    %v3794 = vunpack.c.l.b16 %v846
    %v3795 = vunpack.c.h.b16 %v846
    %v3796 = vunpack.c.l.b16 %v847
    %v3797 = vunpack.c.h.b16 %v847
    %v3798 = vunpack.c.l.b16 %v848
    %v3799 = vunpack.c.h.b16 %v848
    %v3800 = vunpack.c.l.b16 %v849
    %v3801 = vunpack.c.h.b16 %v849
    %v3802 = vunpack.c.l.b16 %v850
    %v3803 = vunpack.c.h.b16 %v850
    %v3804 = vunpack.c.l.b16 %v851
    %v3805 = vunpack.c.h.b16 %v851
    %v3806 = vunpack.c.l.b16 %v852
    %v3807 = vunpack.c.h.b16 %v852
    %v3808 = vunpack.c.l.b16 %v853
    %v3809 = vunpack.c.h.b16 %v853
    %v3810 = vunpack.c.l.b16 %v854
    %v3811 = vunpack.c.h.b16 %v854
    %v3812 = vunpack.c.l.b16 %v855
    %v3813 = vunpack.c.h.b16 %v855
    %v3814 = vunpack.c.l.b16 %v856
    %v3815 = vunpack.c.h.b16 %v856
    %v3816 = vunpack.c.l.b16 %v857
    %v3817 = vunpack.c.h.b16 %v857
    %v3818 = vunpack.c.l.b16 %v858
    %v3819 = vunpack.c.h.b16 %v858
    %v3820 = vunpack.c.l.b16 %v859
    %v3821 = vunpack.c.h.b16 %v859
    %v3822 = vunpack.c.l.b16 %v860
    %v3823 = vunpack.c.h.b16 %v860
    %v3824 = vunpack.c.l.b16 %v861
    %v3825 = vunpack.c.h.b16 %v861
    %v3826 = vunpack.c.l.b16 %v862
    %v3827 = vunpack.c.h.b16 %v862
    %v3828 = vunpack.c.l.b16 %v863
    %v3829 = vunpack.c.h.b16 %v863
    %v3830 = vunpack.c.l.b16 %v864
    %v3831 = vunpack.c.h.b16 %v864
    %v3832 = vunpack.c.l.b16 %v865
    %v3833 = vunpack.c.h.b16 %v865
    %v3834 = vunpack.c.l.b16 %v866
    %v3835 = vunpack.c.h.b16 %v866
    %v3836 = vunpack.c.l.b16 %v867
    %v3837 = vunpack.c.h.b16 %v867
    %v3838 = vunpack.c.l.b16 %v868
    %v3839 = vunpack.c.h.b16 %v868
    %v3840 = vunpack.c.l.b16 %v869
    %v3841 = vunpack.c.h.b16 %v869
    %v3842 = vunpack.c.l.b16 %v870
    %v3843 = vunpack.c.h.b16 %v870
    %v3844 = vunpack.c.l.b16 %v871
    %v3845 = vunpack.c.h.b16 %v871
    %v3846 = vunpack.c.l.b16 %v872
    %v3847 = vunpack.c.h.b16 %v872
    %v3848 = vunpack.c.l.b16 %v873
    %v3849 = vunpack.c.h.b16 %v873
    %v3850 = vunpack.c.l.b16 %v874
    %v3851 = vunpack.c.h.b16 %v874
    %v3852 = vunpack.c.l.b16 %v875
    %v3853 = vunpack.c.h.b16 %v875
    %v3854 = vunpack.c.l.b16 %v876
    %v3855 = vunpack.c.h.b16 %v876
    %v3856 = vunpack.c.l.b16 %v877
    %v3857 = vunpack.c.h.b16 %v877
    %v3858 = vunpack.c.l.b16 %v878
    %v3859 = vunpack.c.h.b16 %v878
    %v3860 = vunpack.c.l.b16 %v879
    %v3861 = vunpack.c.h.b16 %v879
    %v3862 = vunpack.c.l.b16 %v880
    %v3863 = vunpack.c.h.b16 %v880
    %v3864 = vunpack.c.l.b16 %v881
    %v3865 = vunpack.c.h.b16 %v881
    %v3866 = vunpack.c.l.b16 %v882
    %v3867 = vunpack.c.h.b16 %v882
    %v3868 = vunpack.c.l.b16 %v883
    %v3869 = vunpack.c.h.b16 %v883
    %v3870 = vunpack.c.l.b16 %v884
    %v3871 = vunpack.c.h.b16 %v884
    %v3872 = vunpack.c.l.b16 %v885
    %v3873 = vunpack.c.h.b16 %v885
    %v3874 = vunpack.c.l.b16 %v886
    %v3875 = vunpack.c.h.b16 %v886
    %v3876 = vunpack.c.l.b16 %v887
    %v3877 = vunpack.c.h.b16 %v887
    %v3878 = vunpack.c.l.b16 %v888
    %v3879 = vunpack.c.h.b16 %v888
    %v3880 = vunpack.c.l.b16 %v889
    %v3881 = vunpack.c.h.b16 %v889
    %v3882 = vunpack.c.l.b16 %v890
    %v3883 = vunpack.c.h.b16 %v890
    %v3884 = vunpack.c.l.b16 %v891
    %v3885 = vunpack.c.h.b16 %v891
    %v3886 = vunpack.c.l.b16 %v892
    %v3887 = vunpack.c.h.b16 %v892
    %v3888 = vunpack.c.l.b16 %v893
    %v3889 = vunpack.c.h.b16 %v893
    %v3890 = vunpack.c.l.b16 %v894
    %v3891 = vunpack.c.h.b16 %v894
    %v3892 = vunpack.c.l.b16 %v895
    %v3893 = vunpack.c.h.b16 %v895
    %v3894 = vunpack.c.l.b16 %v896
    %v3895 = vunpack.c.h.b16 %v896
    %v3896 = vunpack.c.l.b16 %v897
    %v3897 = vunpack.c.h.b16 %v897
    %v3898 = vunpack.c.l.b16 %v898
    %v3899 = vunpack.c.h.b16 %v898
    %v3900 = vunpack.c.l.b16 %v899
    %v3901 = vunpack.c.h.b16 %v899
    %v3902 = vunpack.c.l.b16 %v900
    %v3903 = vunpack.c.h.b16 %v900
    %v3904 = vunpack.c.l.b16 %v901
    %v3905 = vunpack.c.h.b16 %v901
    %v3906 = vunpack.c.l.b16 %v902
    %v3907 = vunpack.c.h.b16 %v902
    %v3908 = vunpack.c.l.b16 %v903
    %v3909 = vunpack.c.h.b16 %v903
    %v3910 = vunpack.c.l.b16 %v904
    %v3911 = vunpack.c.h.b16 %v904
    %v3912 = vunpack.c.l.b16 %v905
    %v3913 = vunpack.c.h.b16 %v905
    %v3914 = vunpack.c.l.b16 %v906
    %v3915 = vunpack.c.h.b16 %v906
    %v3916 = vunpack.c.l.b16 %v907
    %v3917 = vunpack.c.h.b16 %v907
    %v3918 = vunpack.c.l.b16 %v908
    %v3919 = vunpack.c.h.b16 %v908
    %v3920 = vunpack.c.l.b16 %v909
    %v3921 = vunpack.c.h.b16 %v909
    %v3922 = vunpack.c.l.b16 %v910
    %v3923 = vunpack.c.h.b16 %v910
    %v3924 = vunpack.c.l.b16 %v911
    %v3925 = vunpack.c.h.b16 %v911
    %v3926 = vunpack.c.l.b16 %v912
    %v3927 = vunpack.c.h.b16 %v912
    %v3928 = vunpack.c.l.b16 %v913
    %v3929 = vunpack.c.h.b16 %v913
    %v3930 = vunpack.c.l.b16 %v914
    %v3931 = vunpack.c.h.b16 %v914
    %v3932 = vunpack.c.l.b16 %v915
    %v3933 = vunpack.c.h.b16 %v915
    %v3934 = vunpack.c.l.b16 %v916
    %v3935 = vunpack.c.h.b16 %v916
    %v3936 = vunpack.c.l.b16 %v917
    %v3937 = vunpack.c.h.b16 %v917
    %v3938 = vunpack.c.l.b16 %v918
    %v3939 = vunpack.c.h.b16 %v918
    %v3940 = vunpack.c.l.b16 %v919
    %v3941 = vunpack.c.h.b16 %v919
    %v3942 = vunpack.c.l.b16 %v920
    %v3943 = vunpack.c.h.b16 %v920
    %v3944 = vunpack.c.l.b16 %v921
    %v3945 = vunpack.c.h.b16 %v921
    %v3946 = vunpack.c.l.b16 %v922
    %v3947 = vunpack.c.h.b16 %v922
    %v3948 = vunpack.c.l.b16 %v923
    %v3949 = vunpack.c.h.b16 %v923
    %v3950 = vunpack.c.l.b16 %v924
    %v3951 = vunpack.c.h.b16 %v924
    %v3952 = vunpack.c.l.b16 %v925
    %v3953 = vunpack.c.h.b16 %v925
    %v3954 = vunpack.c.l.b16 %v926
    %v3955 = vunpack.c.h.b16 %v926
    %v3956 = vunpack.c.l.b16 %v927
    %v3957 = vunpack.c.h.b16 %v927
    %v3958 = vunpack.c.l.b16 %v928
    %v3959 = vunpack.c.h.b16 %v928
    %v3960 = vunpack.c.l.b16 %v929
    %v3961 = vunpack.c.h.b16 %v929
    %v3962 = vunpack.c.l.b16 %v930
    %v3963 = vunpack.c.h.b16 %v930
    %v3964 = vunpack.c.l.b16 %v931
    %v3965 = vunpack.c.h.b16 %v931
    %v3966 = vunpack.c.l.b16 %v932
    %v3967 = vunpack.c.h.b16 %v932
    %v3968 = vunpack.c.l.b16 %v933
    %v3969 = vunpack.c.h.b16 %v933
    %v3970 = vunpack.c.l.b16 %v934
    %v3971 = vunpack.c.h.b16 %v934
    %v3972 = vunpack.c.l.b16 %v935
    %v3973 = vunpack.c.h.b16 %v935
    %v3974 = vunpack.c.l.b16 %v936
    %v3975 = vunpack.c.h.b16 %v936
    %v3976 = vunpack.c.l.b16 %v937
    %v3977 = vunpack.c.h.b16 %v937
    %v3978 = vunpack.c.l.b16 %v938
    %v3979 = vunpack.c.h.b16 %v938
    %v3980 = vunpack.c.l.b16 %v939
    %v3981 = vunpack.c.h.b16 %v939
    %v3982 = vunpack.c.l.b16 %v940
    %v3983 = vunpack.c.h.b16 %v940
    %v3984 = vunpack.c.l.b16 %v941
    %v3985 = vunpack.c.h.b16 %v941
    %v3986 = vunpack.c.l.b16 %v942
    %v3987 = vunpack.c.h.b16 %v942
    %v3988 = vunpack.c.l.b16 %v943
    %v3989 = vunpack.c.h.b16 %v943
    %v3990 = vunpack.c.l.b16 %v944
    %v3991 = vunpack.c.h.b16 %v944
    %v3992 = vunpack.c.l.b16 %v945
    %v3993 = vunpack.c.h.b16 %v945
    %v3994 = vunpack.c.l.b16 %v946
    %v3995 = vunpack.c.h.b16 %v946
    %v3996 = vunpack.c.l.b16 %v947
    %v3997 = vunpack.c.h.b16 %v947
    %v3998 = vunpack.c.l.b16 %v948
    %v3999 = vunpack.c.h.b16 %v948
    %v4000 = vunpack.c.l.b16 %v949
    %v4001 = vunpack.c.h.b16 %v949
    %v4002 = vunpack.c.l.b16 %v950
    %v4003 = vunpack.c.h.b16 %v950
    %v4004 = vunpack.c.l.b16 %v951
    %v4005 = vunpack.c.h.b16 %v951
    %v4006 = vunpack.c.l.b16 %v952
    %v4007 = vunpack.c.h.b16 %v952
    %v4008 = vunpack.c.l.b16 %v953
    %v4009 = vunpack.c.h.b16 %v953
    %v4010 = vunpack.c.l.b16 %v954
    %v4011 = vunpack.c.h.b16 %v954
    %v4012 = vunpack.c.l.b16 %v955
    %v4013 = vunpack.c.h.b16 %v955
    %v4014 = vunpack.c.l.b16 %v956
    %v4015 = vunpack.c.h.b16 %v956
    %v4016 = vunpack.c.l.b16 %v957
    %v4017 = vunpack.c.h.b16 %v957
    %v4018 = vunpack.c.l.b16 %v958
    %v4019 = vunpack.c.h.b16 %v958
    %v4020 = vunpack.c.l.b16 %v959
    %v4021 = vunpack.c.h.b16 %v959
    %v4022 = vunpack.c.l.b16 %v960
    %v4023 = vunpack.c.h.b16 %v960
    %v4024 = vunpack.c.l.b16 %v961
    %v4025 = vunpack.c.h.b16 %v961
    %v4026 = vunpack.c.l.b16 %v962
    %v4027 = vunpack.c.h.b16 %v962
    %v4028 = vunpack.c.l.b16 %v963
    %v4029 = vunpack.c.h.b16 %v963
    %v4030 = vunpack.c.l.b16 %v964
    %v4031 = vunpack.c.h.b16 %v964
    %v4032 = vunpack.c.l.b16 %v965
    %v4033 = vunpack.c.h.b16 %v965
    %v4034 = vunpack.c.l.b16 %v966
    %v4035 = vunpack.c.h.b16 %v966
    %v4036 = vunpack.c.l.b16 %v967
    %v4037 = vunpack.c.h.b16 %v967
    %v4038 = vunpack.c.l.b16 %v968
    %v4039 = vunpack.c.h.b16 %v968
    %v4040 = vunpack.c.l.b16 %v969
    %v4041 = vunpack.c.h.b16 %v969
    %v4042 = vunpack.c.l.b16 %v970
    %v4043 = vunpack.c.h.b16 %v970
    %v4044 = vunpack.c.l.b16 %v971
    %v4045 = vunpack.c.h.b16 %v971
    %v4046 = vunpack.c.l.b16 %v972
    %v4047 = vunpack.c.h.b16 %v972
    %v4048 = vunpack.c.l.b16 %v973
    %v4049 = vunpack.c.h.b16 %v973
    %v4050 = vunpack.c.l.b16 %v974
    %v4051 = vunpack.c.h.b16 %v974
    %v4052 = vunpack.c.l.b16 %v975
    %v4053 = vunpack.c.h.b16 %v975
    %v4054 = vunpack.c.l.b16 %v976
    %v4055 = vunpack.c.h.b16 %v976
    %v4056 = vunpack.c.l.b16 %v977
    %v4057 = vunpack.c.h.b16 %v977
    %v4058 = vunpack.c.l.b16 %v978
    %v4059 = vunpack.c.h.b16 %v978
    %v4060 = vunpack.c.l.b16 %v979
    %v4061 = vunpack.c.h.b16 %v979
    %v4062 = vunpack.c.l.b16 %v980
    %v4063 = vunpack.c.h.b16 %v980
    %v4064 = vunpack.c.l.b16 %v981
    %v4065 = vunpack.c.h.b16 %v981
    %v4066 = vunpack.c.l.b16 %v982
    %v4067 = vunpack.c.h.b16 %v982
    %v4068 = vunpack.c.l.b16 %v983
    %v4069 = vunpack.c.h.b16 %v983
    %v4070 = vunpack.c.l.b16 %v984
    %v4071 = vunpack.c.h.b16 %v984
    %v4072 = vunpack.c.l.b16 %v985
    %v4073 = vunpack.c.h.b16 %v985
    %v4074 = vunpack.c.l.b16 %v986
    %v4075 = vunpack.c.h.b16 %v986
    %v4076 = vunpack.c.l.b16 %v987
    %v4077 = vunpack.c.h.b16 %v987
    %v4078 = vunpack.c.l.b16 %v988
    %v4079 = vunpack.c.h.b16 %v988
    %v4080 = vunpack.c.l.b16 %v989
    %v4081 = vunpack.c.h.b16 %v989
    %v4082 = vunpack.c.l.b16 %v990
    %v4083 = vunpack.c.h.b16 %v990
    %v4084 = vunpack.c.l.b16 %v991
    %v4085 = vunpack.c.h.b16 %v991
    %v4086 = vunpack.c.l.b16 %v992
    %v4087 = vunpack.c.h.b16 %v992
    %v4088 = vunpack.c.l.b16 %v993
    %v4089 = vunpack.c.h.b16 %v993
    %v4090 = vunpack.c.l.b16 %v994
    %v4091 = vunpack.c.h.b16 %v994
    %v4092 = vunpack.c.l.b16 %v995
    %v4093 = vunpack.c.h.b16 %v995
    %v4094 = vunpack.c.l.b16 %v996
    %v4095 = vunpack.c.h.b16 %v996
    %v4096 = vunpack.c.l.b16 %v997
    %v4097 = vunpack.c.h.b16 %v997
    %v4098 = vunpack.c.l.b16 %v998
    %v4099 = vunpack.c.h.b16 %v998
    %v4100 = vunpack.c.l.b16 %v999
    %v4101 = vunpack.c.h.b16 %v999
    %v4102 = vunpack.c.l.b16 %v1000
    %v4103 = vunpack.c.h.b16 %v1000
    %v4104 = vunpack.c.l.b16 %v1001
    %v4105 = vunpack.c.h.b16 %v1001
    %v4106 = vunpack.c.l.b16 %v1002
    %v4107 = vunpack.c.h.b16 %v1002
    %v4108 = vunpack.c.l.b16 %v1003
    %v4109 = vunpack.c.h.b16 %v1003
    %v4110 = vunpack.c.l.b16 %v1004
    %v4111 = vunpack.c.h.b16 %v1004
    %v4112 = vunpack.c.l.b16 %v1005
    %v4113 = vunpack.c.h.b16 %v1005
    %v4114 = vunpack.c.l.b16 %v1006
    %v4115 = vunpack.c.h.b16 %v1006
    %v4116 = vunpack.c.l.b16 %v1007
    %v4117 = vunpack.c.h.b16 %v1007
    %v4118 = vunpack.c.l.b16 %v1008
    %v4119 = vunpack.c.h.b16 %v1008
    %v4120 = vunpack.c.l.b16 %v1009
    %v4121 = vunpack.c.h.b16 %v1009
    %v4122 = vunpack.c.l.b16 %v1010
    %v4123 = vunpack.c.h.b16 %v1010
    %v4124 = vunpack.c.l.b16 %v1011
    %v4125 = vunpack.c.h.b16 %v1011
    %v4126 = vunpack.c.l.b16 %v1012
    %v4127 = vunpack.c.h.b16 %v1012
    %v4128 = vunpack.c.l.b16 %v1013
    %v4129 = vunpack.c.h.b16 %v1013
    %v4130 = vunpack.c.l.b16 %v1014
    %v4131 = vunpack.c.h.b16 %v1014
    %v4132 = vunpack.c.l.b16 %v1015
    %v4133 = vunpack.c.h.b16 %v1015
    %v4134 = vunpack.c.l.b16 %v1016
    %v4135 = vunpack.c.h.b16 %v1016
    %v4136 = vunpack.c.l.b16 %v1017
    %v4137 = vunpack.c.h.b16 %v1017
    %v4138 = vunpack.c.l.b16 %v1018
    %v4139 = vunpack.c.h.b16 %v1018
    %v4140 = vunpack.c.l.b16 %v1019
    %v4141 = vunpack.c.h.b16 %v1019
    %v4142 = vunpack.c.l.b16 %v1020
    %v4143 = vunpack.c.h.b16 %v1020
    %v4144 = vunpack.c.l.b16 %v1021
    %v4145 = vunpack.c.h.b16 %v1021
    %v4146 = vunpack.c.l.b16 %v1022
    %v4147 = vunpack.c.h.b16 %v1022
    %v4148 = vunpack.c.l.b16 %v1023
    %v4149 = vunpack.c.h.b16 %v1023
    %v4150 = vunpack.c.l.b16 %v1024
    %v4151 = vunpack.c.h.b16 %v1024
    %v4152 = vunpack.c.l.b16 %v1025
    %v4153 = vunpack.c.h.b16 %v1025
    %v4154 = vunpack.c.l.b16 %v1026
    %v4155 = vunpack.c.h.b16 %v1026
    %v4156 = vunpack.c.l.b16 %v1027
    %v4157 = vunpack.c.h.b16 %v1027
    %v4158 = vunpack.c.l.b16 %v1028
    %v4159 = vunpack.c.h.b16 %v1028
    %v4160 = vunpack.c.l.b16 %v1029
    %v4161 = vunpack.c.h.b16 %v1029
    %v4162 = vunpack.c.l.b16 %v1030
    %v4163 = vunpack.c.h.b16 %v1030
    %v4164 = vunpack.c.l.b16 %v1031
    %v4165 = vunpack.c.h.b16 %v1031
    %v4166 = vunpack.c.l.b16 %v1032
    %v4167 = vunpack.c.h.b16 %v1032
    %v4168 = vunpack.c.l.b16 %v1033
    %v4169 = vunpack.c.h.b16 %v1033
    %v4170 = vunpack.c.l.b16 %v1034
    %v4171 = vunpack.c.h.b16 %v1034
    %v4172 = vunpack.c.l.b16 %v1035
    %v4173 = vunpack.c.h.b16 %v1035
    %v4174 = vunpack.c.l.b16 %v1036
    %v4175 = vunpack.c.h.b16 %v1036
    %v4176 = vunpack.c.l.b16 %v1037
    %v4177 = vunpack.c.h.b16 %v1037
    %v4178 = vunpack.c.l.b16 %v1038
    %v4179 = vunpack.c.h.b16 %v1038
    %v4180 = vunpack.c.l.b16 %v1039
    %v4181 = vunpack.c.h.b16 %v1039
    %v4182 = vunpack.c.l.b16 %v1040
    %v4183 = vunpack.c.h.b16 %v1040
    %v4184 = vunpack.c.l.b16 %v1041
    %v4185 = vunpack.c.h.b16 %v1041
    %v4186 = vunpack.c.l.b16 %v1042
    %v4187 = vunpack.c.h.b16 %v1042
    %v4188 = vunpack.c.l.b16 %v1043
    %v4189 = vunpack.c.h.b16 %v1043
    %v4190 = vunpack.c.l.b16 %v1044
    %v4191 = vunpack.c.h.b16 %v1044
    %v4192 = vunpack.c.l.b16 %v1045
    %v4193 = vunpack.c.h.b16 %v1045
    %v4194 = vunpack.c.l.b16 %v1046
    %v4195 = vunpack.c.h.b16 %v1046
    %v4196 = vunpack.c.l.b16 %v1047
    %v4197 = vunpack.c.h.b16 %v1047
    %v4198 = vunpack.c.l.b16 %v1048
    %v4199 = vunpack.c.h.b16 %v1048
    %v4200 = vunpack.c.l.b16 %v1049
    %v4201 = vunpack.c.h.b16 %v1049
    %v4202 = vunpack.c.l.b16 %v1050
    %v4203 = vunpack.c.h.b16 %v1050
    %v4204 = vunpack.c.l.b16 %v1051
    %v4205 = vunpack.c.h.b16 %v1051
    %v4206 = vunpack.c.l.b16 %v1052
    %v4207 = vunpack.c.h.b16 %v1052
    %v4208 = vunpack.c.l.b16 %v1053
    %v4209 = vunpack.c.h.b16 %v1053
    %v4210 = vunpack.c.l.b16 %v1054
    %v4211 = vunpack.c.h.b16 %v1054
    %v4212 = vunpack.c.l.b16 %v1055
    %v4213 = vunpack.c.h.b16 %v1055
    %v4214 = vunpack.c.l.b16 %v1056
    %v4215 = vunpack.c.h.b16 %v1056
    %v4216 = vunpack.c.l.b16 %v1057
    %v4217 = vunpack.c.h.b16 %v1057
    %v4218 = vunpack.c.l.b16 %v1058
    %v4219 = vunpack.c.h.b16 %v1058
    %v4220 = vunpack.c.l.b16 %v1059
    %v4221 = vunpack.c.h.b16 %v1059
    %v4222 = vunpack.c.l.b16 %v1060
    %v4223 = vunpack.c.h.b16 %v1060
    %v4224 = vunpack.c.l.b16 %v1061
    %v4225 = vunpack.c.h.b16 %v1061
    %v4226 = vunpack.c.l.b16 %v1062
    %v4227 = vunpack.c.h.b16 %v1062
    %v4228 = vunpack.c.l.b16 %v1063
    %v4229 = vunpack.c.h.b16 %v1063
    %v4230 = vunpack.c.l.b16 %v1064
    %v4231 = vunpack.c.h.b16 %v1064
    %v4232 = vunpack.c.l.b16 %v1065
    %v4233 = vunpack.c.h.b16 %v1065
    %v4234 = vunpack.c.l.b16 %v1066
    %v4235 = vunpack.c.h.b16 %v1066
    %v4236 = vunpack.c.l.b16 %v1067
    %v4237 = vunpack.c.h.b16 %v1067
    %v4238 = vunpack.c.l.b16 %v1068
    %v4239 = vunpack.c.h.b16 %v1068
    %v4240 = vunpack.c.l.b16 %v1069
    %v4241 = vunpack.c.h.b16 %v1069
    %v4242 = vunpack.c.l.b16 %v1070
    %v4243 = vunpack.c.h.b16 %v1070
    %v4244 = vunpack.c.l.b16 %v1071
    %v4245 = vunpack.c.h.b16 %v1071
    %v4246 = vunpack.c.l.b16 %v1072
    %v4247 = vunpack.c.h.b16 %v1072
    %v4248 = vunpack.c.l.b16 %v1073
    %v4249 = vunpack.c.h.b16 %v1073
    %v4250 = vunpack.c.l.b16 %v1074
    %v4251 = vunpack.c.h.b16 %v1074
    %v4252 = vunpack.c.l.b16 %v1075
    %v4253 = vunpack.c.h.b16 %v1075
    %v4254 = vunpack.c.l.b16 %v1076
    %v4255 = vunpack.c.h.b16 %v1076
    %v4256 = vunpack.c.l.b16 %v1077
    %v4257 = vunpack.c.h.b16 %v1077
    %v4258 = vunpack.c.l.b16 %v1078
    %v4259 = vunpack.c.h.b16 %v1078
    %v4260 = vunpack.c.l.b16 %v1079
    %v4261 = vunpack.c.h.b16 %v1079
    %v4262 = vunpack.c.l.b16 %v1080
    %v4263 = vunpack.c.h.b16 %v1080
    %v4264 = vunpack.c.l.b16 %v1081
    %v4265 = vunpack.c.h.b16 %v1081
    %v4266 = vunpack.c.l.b16 %v1082
    %v4267 = vunpack.c.h.b16 %v1082
    %v4268 = vunpack.c.l.b16 %v1083
    %v4269 = vunpack.c.h.b16 %v1083
    %v4270 = vunpack.c.l.b16 %v1084
    %v4271 = vunpack.c.h.b16 %v1084
    %v4272 = vunpack.c.l.b16 %v1085
    %v4273 = vunpack.c.h.b16 %v1085
    %v4274 = vpack.c.b16 %v2234, %v2226
    %v4275 = vpack.c.b16 %v2235, %v2227
    %v4276 = vpack.c.b16 %v2236, %v2228
    %v4277 = vpack.c.b16 %v2237, %v2229
    %v4278 = vpack.c.b16 %v2238, %v2230
    %v4279 = vpack.c.b16 %v2239, %v2231
    %v4280 = vpack.c.b16 %v2240, %v2232
    %v4281 = vpack.c.b16 %v2241, %v2233
    %v4282 = vpack.c.b16 %v2250, %v2242
    %v4283 = vpack.c.b16 %v2251, %v2243
    %v4284 = vpack.c.b16 %v2252, %v2244
    %v4285 = vpack.c.b16 %v2253, %v2245
    %v4286 = vpack.c.b16 %v2254, %v2246
    %v4287 = vpack.c.b16 %v2255, %v2247
    %v4288 = vpack.c.b16 %v2256, %v2248
    %v4289 = vpack.c.b16 %v2257, %v2249
    %v4290 = vpack.c.b16 %v2266, %v2258
    %v4291 = vpack.c.b16 %v2267, %v2259
    %v4292 = vpack.c.b16 %v2268, %v2260
    %v4293 = vpack.c.b16 %v2269, %v2261
    %v4294 = vpack.c.b16 %v2270, %v2262
    %v4295 = vpack.c.b16 %v2271, %v2263
    %v4296 = vpack.c.b16 %v2272, %v2264
    %v4297 = vpack.c.b16 %v2273, %v2265
    %v4298 = vpack.c.b16 %v2282, %v2274
    %v4299 = vpack.c.b16 %v2283, %v2275
    %v4300 = vpack.c.b16 %v2284, %v2276
    %v4301 = vpack.c.b16 %v2285, %v2277
    %v4302 = vpack.c.b16 %v2286, %v2278
    %v4303 = vpack.c.b16 %v2287, %v2279
    %v4304 = vpack.c.b16 %v2288, %v2280
    %v4305 = vpack.c.b16 %v2289, %v2281
    %v4306 = vpack.c.b16 %v2298, %v2290
    %v4307 = vpack.c.b16 %v2299, %v2291
    %v4308 = vpack.c.b16 %v2300, %v2292
    %v4309 = vpack.c.b16 %v2301, %v2293
    %v4310 = vpack.c.b16 %v2302, %v2294
    %v4311 = vpack.c.b16 %v2303, %v2295
    %v4312 = vpack.c.b16 %v2304, %v2296
    %v4313 = vpack.c.b16 %v2305, %v2297
    %v4314 = vpack.c.b16 %v2314, %v2306
    %v4315 = vpack.c.b16 %v2315, %v2307
    %v4316 = vpack.c.b16 %v2316, %v2308
    %v4317 = vpack.c.b16 %v2317, %v2309
    %v4318 = vpack.c.b16 %v2318, %v2310
    %v4319 = vpack.c.b16 %v2319, %v2311
    %v4320 = vpack.c.b16 %v2320, %v2312
    %v4321 = vpack.c.b16 %v2321, %v2313
    %v4322 = vpack.c.b16 %v2330, %v2322
    %v4323 = vpack.c.b16 %v2331, %v2323
    %v4324 = vpack.c.b16 %v2332, %v2324
    %v4325 = vpack.c.b16 %v2333, %v2325
    %v4326 = vpack.c.b16 %v2334, %v2326
    %v4327 = vpack.c.b16 %v2335, %v2327
    %v4328 = vpack.c.b16 %v2336, %v2328
    %v4329 = vpack.c.b16 %v2337, %v2329
    %v4330 = vpack.c.b16 %v2346, %v2338
    %v4331 = vpack.c.b16 %v2347, %v2339
    %v4332 = vpack.c.b16 %v2348, %v2340
    %v4333 = vpack.c.b16 %v2349, %v2341
    %v4334 = vpack.c.b16 %v2350, %v2342
    %v4335 = vpack.c.b16 %v2351, %v2343
    %v4336 = vpack.c.b16 %v2352, %v2344
    %v4337 = vpack.c.b16 %v2353, %v2345
    %v4338 = vpack.c.b16 %v2362, %v2354
    %v4339 = vpack.c.b16 %v2363, %v2355
    %v4340 = vpack.c.b16 %v2364, %v2356
    %v4341 = vpack.c.b16 %v2365, %v2357
    %v4342 = vpack.c.b16 %v2366, %v2358
    %v4343 = vpack.c.b16 %v2367, %v2359
    %v4344 = vpack.c.b16 %v2368, %v2360
    %v4345 = vpack.c.b16 %v2369, %v2361
    %v4346 = vpack.c.b16 %v2378, %v2370
    %v4347 = vpack.c.b16 %v2379, %v2371
    %v4348 = vpack.c.b16 %v2380, %v2372
    %v4349 = vpack.c.b16 %v2381, %v2373
    %v4350 = vpack.c.b16 %v2382, %v2374
    %v4351 = vpack.c.b16 %v2383, %v2375
    %v4352 = vpack.c.b16 %v2384, %v2376
    %v4353 = vpack.c.b16 %v2385, %v2377
    %v4354 = vpack.c.b16 %v2394, %v2386
    %v4355 = vpack.c.b16 %v2395, %v2387
    %v4356 = vpack.c.b16 %v2396, %v2388
    %v4357 = vpack.c.b16 %v2397, %v2389
    %v4358 = vpack.c.b16 %v2398, %v2390
    %v4359 = vpack.c.b16 %v2399, %v2391
    %v4360 = vpack.c.b16 %v2400, %v2392
    %v4361 = vpack.c.b16 %v2401, %v2393
    %v4362 = vpack.c.b16 %v2410, %v2402
    %v4363 = vpack.c.b16 %v2411, %v2403
    %v4364 = vpack.c.b16 %v2412, %v2404
    %v4365 = vpack.c.b16 %v2413, %v2405
    %v4366 = vpack.c.b16 %v2414, %v2406
    %v4367 = vpack.c.b16 %v2415, %v2407
    %v4368 = vpack.c.b16 %v2416, %v2408
    %v4369 = vpack.c.b16 %v2417, %v2409
    %v4370 = vpack.c.b16 %v2426, %v2418
    %v4371 = vpack.c.b16 %v2427, %v2419
    %v4372 = vpack.c.b16 %v2428, %v2420
    %v4373 = vpack.c.b16 %v2429, %v2421
    %v4374 = vpack.c.b16 %v2430, %v2422
    %v4375 = vpack.c.b16 %v2431, %v2423
    %v4376 = vpack.c.b16 %v2432, %v2424
    %v4377 = vpack.c.b16 %v2433, %v2425
    %v4378 = vpack.c.b16 %v2442, %v2434
    %v4379 = vpack.c.b16 %v2443, %v2435
    %v4380 = vpack.c.b16 %v2444, %v2436
    %v4381 = vpack.c.b16 %v2445, %v2437
    %v4382 = vpack.c.b16 %v2446, %v2438
    %v4383 = vpack.c.b16 %v2447, %v2439
    %v4384 = vpack.c.b16 %v2448, %v2440
    %v4385 = vpack.c.b16 %v2449, %v2441
    %v4386 = vpack.c.b16 %v2458, %v2450
    %v4387 = vpack.c.b16 %v2459, %v2451
    %v4388 = vpack.c.b16 %v2460, %v2452
    %v4389 = vpack.c.b16 %v2461, %v2453
    %v4390 = vpack.c.b16 %v2462, %v2454
    %v4391 = vpack.c.b16 %v2463, %v2455
    %v4392 = vpack.c.b16 %v2464, %v2456
    %v4393 = vpack.c.b16 %v2465, %v2457
    %v4394 = vpack.c.b16 %v2474, %v2466
    %v4395 = vpack.c.b16 %v2475, %v2467
    %v4396 = vpack.c.b16 %v2476, %v2468
    %v4397 = vpack.c.b16 %v2477, %v2469
    %v4398 = vpack.c.b16 %v2478, %v2470
    %v4399 = vpack.c.b16 %v2479, %v2471
    %v4400 = vpack.c.b16 %v2480, %v2472
    %v4401 = vpack.c.b16 %v2481, %v2473
    %v4402 = vpack.c.b16 %v2490, %v2482
    %v4403 = vpack.c.b16 %v2491, %v2483
    %v4404 = vpack.c.b16 %v2492, %v2484
    %v4405 = vpack.c.b16 %v2493, %v2485
    %v4406 = vpack.c.b16 %v2494, %v2486
    %v4407 = vpack.c.b16 %v2495, %v2487
    %v4408 = vpack.c.b16 %v2496, %v2488
    %v4409 = vpack.c.b16 %v2497, %v2489
    %v4410 = vpack.c.b16 %v2506, %v2498
    %v4411 = vpack.c.b16 %v2507, %v2499
    %v4412 = vpack.c.b16 %v2508, %v2500
    %v4413 = vpack.c.b16 %v2509, %v2501
    %v4414 = vpack.c.b16 %v2510, %v2502
    %v4415 = vpack.c.b16 %v2511, %v2503
    %v4416 = vpack.c.b16 %v2512, %v2504
    %v4417 = vpack.c.b16 %v2513, %v2505
    %v4418 = vpack.c.b16 %v2522, %v2514
    %v4419 = vpack.c.b16 %v2523, %v2515
    %v4420 = vpack.c.b16 %v2524, %v2516
    %v4421 = vpack.c.b16 %v2525, %v2517
    %v4422 = vpack.c.b16 %v2526, %v2518
    %v4423 = vpack.c.b16 %v2527, %v2519
    %v4424 = vpack.c.b16 %v2528, %v2520
    %v4425 = vpack.c.b16 %v2529, %v2521
    %v4426 = vpack.c.b16 %v2538, %v2530
    %v4427 = vpack.c.b16 %v2539, %v2531
    %v4428 = vpack.c.b16 %v2540, %v2532
    %v4429 = vpack.c.b16 %v2541, %v2533
    %v4430 = vpack.c.b16 %v2542, %v2534
    %v4431 = vpack.c.b16 %v2543, %v2535
    %v4432 = vpack.c.b16 %v2544, %v2536
    %v4433 = vpack.c.b16 %v2545, %v2537
    %v4434 = vpack.c.b16 %v2554, %v2546
    %v4435 = vpack.c.b16 %v2555, %v2547
    %v4436 = vpack.c.b16 %v2556, %v2548
    %v4437 = vpack.c.b16 %v2557, %v2549
    %v4438 = vpack.c.b16 %v2558, %v2550
    %v4439 = vpack.c.b16 %v2559, %v2551
    %v4440 = vpack.c.b16 %v2560, %v2552
    %v4441 = vpack.c.b16 %v2561, %v2553
    %v4442 = vpack.c.b16 %v2570, %v2562
    %v4443 = vpack.c.b16 %v2571, %v2563
    %v4444 = vpack.c.b16 %v2572, %v2564
    %v4445 = vpack.c.b16 %v2573, %v2565
    %v4446 = vpack.c.b16 %v2574, %v2566
    %v4447 = vpack.c.b16 %v2575, %v2567
    %v4448 = vpack.c.b16 %v2576, %v2568
    %v4449 = vpack.c.b16 %v2577, %v2569
    %v4450 = vpack.c.b16 %v2586, %v2578
    %v4451 = vpack.c.b16 %v2587, %v2579
    %v4452 = vpack.c.b16 %v2588, %v2580
    %v4453 = vpack.c.b16 %v2589, %v2581
    %v4454 = vpack.c.b16 %v2590, %v2582
    %v4455 = vpack.c.b16 %v2591, %v2583
    %v4456 = vpack.c.b16 %v2592, %v2584
    %v4457 = vpack.c.b16 %v2593, %v2585
    %v4458 = vpack.c.b16 %v2602, %v2594
    %v4459 = vpack.c.b16 %v2603, %v2595
    %v4460 = vpack.c.b16 %v2604, %v2596
    %v4461 = vpack.c.b16 %v2605, %v2597
    %v4462 = vpack.c.b16 %v2606, %v2598
    %v4463 = vpack.c.b16 %v2607, %v2599
    %v4464 = vpack.c.b16 %v2608, %v2600
    %v4465 = vpack.c.b16 %v2609, %v2601
    %v4466 = vpack.c.b16 %v2618, %v2610
    %v4467 = vpack.c.b16 %v2619, %v2611
    %v4468 = vpack.c.b16 %v2620, %v2612
    %v4469 = vpack.c.b16 %v2621, %v2613
    %v4470 = vpack.c.b16 %v2622, %v2614
    %v4471 = vpack.c.b16 %v2623, %v2615
    %v4472 = vpack.c.b16 %v2624, %v2616
    %v4473 = vpack.c.b16 %v2625, %v2617
    %v4474 = vpack.c.b16 %v2634, %v2626
    %v4475 = vpack.c.b16 %v2635, %v2627
    %v4476 = vpack.c.b16 %v2636, %v2628
    %v4477 = vpack.c.b16 %v2637, %v2629
    %v4478 = vpack.c.b16 %v2638, %v2630
    %v4479 = vpack.c.b16 %v2639, %v2631
    %v4480 = vpack.c.b16 %v2640, %v2632
    %v4481 = vpack.c.b16 %v2641, %v2633
    %v4482 = vpack.c.b16 %v2650, %v2642
    %v4483 = vpack.c.b16 %v2651, %v2643
    %v4484 = vpack.c.b16 %v2652, %v2644
    %v4485 = vpack.c.b16 %v2653, %v2645
    %v4486 = vpack.c.b16 %v2654, %v2646
    %v4487 = vpack.c.b16 %v2655, %v2647
    %v4488 = vpack.c.b16 %v2656, %v2648
    %v4489 = vpack.c.b16 %v2657, %v2649
    %v4490 = vpack.c.b16 %v2666, %v2658
    %v4491 = vpack.c.b16 %v2667, %v2659
    %v4492 = vpack.c.b16 %v2668, %v2660
    %v4493 = vpack.c.b16 %v2669, %v2661
    %v4494 = vpack.c.b16 %v2670, %v2662
    %v4495 = vpack.c.b16 %v2671, %v2663
    %v4496 = vpack.c.b16 %v2672, %v2664
    %v4497 = vpack.c.b16 %v2673, %v2665
    %v4498 = vpack.c.b16 %v2682, %v2674
    %v4499 = vpack.c.b16 %v2683, %v2675
    %v4500 = vpack.c.b16 %v2684, %v2676
    %v4501 = vpack.c.b16 %v2685, %v2677
    %v4502 = vpack.c.b16 %v2686, %v2678
    %v4503 = vpack.c.b16 %v2687, %v2679
    %v4504 = vpack.c.b16 %v2688, %v2680
    %v4505 = vpack.c.b16 %v2689, %v2681
    %v4506 = vpack.c.b16 %v2698, %v2690
    %v4507 = vpack.c.b16 %v2699, %v2691
    %v4508 = vpack.c.b16 %v2700, %v2692
    %v4509 = vpack.c.b16 %v2701, %v2693
    %v4510 = vpack.c.b16 %v2702, %v2694
    %v4511 = vpack.c.b16 %v2703, %v2695
    %v4512 = vpack.c.b16 %v2704, %v2696
    %v4513 = vpack.c.b16 %v2705, %v2697
    %v4514 = vpack.c.b16 %v2714, %v2706
    %v4515 = vpack.c.b16 %v2715, %v2707
    %v4516 = vpack.c.b16 %v2716, %v2708
    %v4517 = vpack.c.b16 %v2717, %v2709
    %v4518 = vpack.c.b16 %v2718, %v2710
    %v4519 = vpack.c.b16 %v2719, %v2711
    %v4520 = vpack.c.b16 %v2720, %v2712
    %v4521 = vpack.c.b16 %v2721, %v2713
    %v4522 = vpack.c.b16 %v2730, %v2722
    %v4523 = vpack.c.b16 %v2731, %v2723
    %v4524 = vpack.c.b16 %v2732, %v2724
    %v4525 = vpack.c.b16 %v2733, %v2725
    %v4526 = vpack.c.b16 %v2734, %v2726
    %v4527 = vpack.c.b16 %v2735, %v2727
    %v4528 = vpack.c.b16 %v2736, %v2728
    %v4529 = vpack.c.b16 %v2737, %v2729
    %v4530 = vpack.c.b16 %v2746, %v2738
    %v4531 = vpack.c.b16 %v2747, %v2739
    %v4532 = vpack.c.b16 %v2748, %v2740
    %v4533 = vpack.c.b16 %v2749, %v2741
    %v4534 = vpack.c.b16 %v2750, %v2742
    %v4535 = vpack.c.b16 %v2751, %v2743
    %v4536 = vpack.c.b16 %v2752, %v2744
    %v4537 = vpack.c.b16 %v2753, %v2745
    %v4538 = vpack.c.b16 %v2762, %v2754
    %v4539 = vpack.c.b16 %v2763, %v2755
    %v4540 = vpack.c.b16 %v2764, %v2756
    %v4541 = vpack.c.b16 %v2765, %v2757
    %v4542 = vpack.c.b16 %v2766, %v2758
    %v4543 = vpack.c.b16 %v2767, %v2759
    %v4544 = vpack.c.b16 %v2768, %v2760
    %v4545 = vpack.c.b16 %v2769, %v2761
    %v4546 = vpack.c.b16 %v2778, %v2770
    %v4547 = vpack.c.b16 %v2779, %v2771
    %v4548 = vpack.c.b16 %v2780, %v2772
    %v4549 = vpack.c.b16 %v2781, %v2773
    %v4550 = vpack.c.b16 %v2782, %v2774
    %v4551 = vpack.c.b16 %v2783, %v2775
    %v4552 = vpack.c.b16 %v2784, %v2776
    %v4553 = vpack.c.b16 %v2785, %v2777
    %v4554 = vpack.c.b16 %v2794, %v2786
    %v4555 = vpack.c.b16 %v2795, %v2787
    %v4556 = vpack.c.b16 %v2796, %v2788
    %v4557 = vpack.c.b16 %v2797, %v2789
    %v4558 = vpack.c.b16 %v2798, %v2790
    %v4559 = vpack.c.b16 %v2799, %v2791
    %v4560 = vpack.c.b16 %v2800, %v2792
    %v4561 = vpack.c.b16 %v2801, %v2793
    %v4562 = vpack.c.b16 %v2810, %v2802
    %v4563 = vpack.c.b16 %v2811, %v2803
    %v4564 = vpack.c.b16 %v2812, %v2804
    %v4565 = vpack.c.b16 %v2813, %v2805
    %v4566 = vpack.c.b16 %v2814, %v2806
    %v4567 = vpack.c.b16 %v2815, %v2807
    %v4568 = vpack.c.b16 %v2816, %v2808
    %v4569 = vpack.c.b16 %v2817, %v2809
    %v4570 = vpack.c.b16 %v2826, %v2818
    %v4571 = vpack.c.b16 %v2827, %v2819
    %v4572 = vpack.c.b16 %v2828, %v2820
    %v4573 = vpack.c.b16 %v2829, %v2821
    %v4574 = vpack.c.b16 %v2830, %v2822
    %v4575 = vpack.c.b16 %v2831, %v2823
    %v4576 = vpack.c.b16 %v2832, %v2824
    %v4577 = vpack.c.b16 %v2833, %v2825
    %v4578 = vpack.c.b16 %v2842, %v2834
    %v4579 = vpack.c.b16 %v2843, %v2835
    %v4580 = vpack.c.b16 %v2844, %v2836
    %v4581 = vpack.c.b16 %v2845, %v2837
    %v4582 = vpack.c.b16 %v2846, %v2838
    %v4583 = vpack.c.b16 %v2847, %v2839
    %v4584 = vpack.c.b16 %v2848, %v2840
    %v4585 = vpack.c.b16 %v2849, %v2841
    %v4586 = vpack.c.b16 %v2858, %v2850
    %v4587 = vpack.c.b16 %v2859, %v2851
    %v4588 = vpack.c.b16 %v2860, %v2852
    %v4589 = vpack.c.b16 %v2861, %v2853
    %v4590 = vpack.c.b16 %v2862, %v2854
    %v4591 = vpack.c.b16 %v2863, %v2855
    %v4592 = vpack.c.b16 %v2864, %v2856
    %v4593 = vpack.c.b16 %v2865, %v2857
    %v4594 = vpack.c.b16 %v2874, %v2866
    %v4595 = vpack.c.b16 %v2875, %v2867
    %v4596 = vpack.c.b16 %v2876, %v2868
    %v4597 = vpack.c.b16 %v2877, %v2869
    %v4598 = vpack.c.b16 %v2878, %v2870
    %v4599 = vpack.c.b16 %v2879, %v2871
    %v4600 = vpack.c.b16 %v2880, %v2872
    %v4601 = vpack.c.b16 %v2881, %v2873
    %v4602 = vpack.c.b16 %v2890, %v2882
    %v4603 = vpack.c.b16 %v2891, %v2883
    %v4604 = vpack.c.b16 %v2892, %v2884
    %v4605 = vpack.c.b16 %v2893, %v2885
    %v4606 = vpack.c.b16 %v2894, %v2886
    %v4607 = vpack.c.b16 %v2895, %v2887
    %v4608 = vpack.c.b16 %v2896, %v2888
    %v4609 = vpack.c.b16 %v2897, %v2889
    %v4610 = vpack.c.b16 %v2906, %v2898
    %v4611 = vpack.c.b16 %v2907, %v2899
    %v4612 = vpack.c.b16 %v2908, %v2900
    %v4613 = vpack.c.b16 %v2909, %v2901
    %v4614 = vpack.c.b16 %v2910, %v2902
    %v4615 = vpack.c.b16 %v2911, %v2903
    %v4616 = vpack.c.b16 %v2912, %v2904
    %v4617 = vpack.c.b16 %v2913, %v2905
    %v4618 = vpack.c.b16 %v2922, %v2914
    %v4619 = vpack.c.b16 %v2923, %v2915
    %v4620 = vpack.c.b16 %v2924, %v2916
    %v4621 = vpack.c.b16 %v2925, %v2917
    %v4622 = vpack.c.b16 %v2926, %v2918
    %v4623 = vpack.c.b16 %v2927, %v2919
    %v4624 = vpack.c.b16 %v2928, %v2920
    %v4625 = vpack.c.b16 %v2929, %v2921
    %v4626 = vpack.c.b16 %v2938, %v2930
    %v4627 = vpack.c.b16 %v2939, %v2931
    %v4628 = vpack.c.b16 %v2940, %v2932
    %v4629 = vpack.c.b16 %v2941, %v2933
    %v4630 = vpack.c.b16 %v2942, %v2934
    %v4631 = vpack.c.b16 %v2943, %v2935
    %v4632 = vpack.c.b16 %v2944, %v2936
    %v4633 = vpack.c.b16 %v2945, %v2937
    %v4634 = vpack.c.b16 %v2954, %v2946
    %v4635 = vpack.c.b16 %v2955, %v2947
    %v4636 = vpack.c.b16 %v2956, %v2948
    %v4637 = vpack.c.b16 %v2957, %v2949
    %v4638 = vpack.c.b16 %v2958, %v2950
    %v4639 = vpack.c.b16 %v2959, %v2951
    %v4640 = vpack.c.b16 %v2960, %v2952
    %v4641 = vpack.c.b16 %v2961, %v2953
    %v4642 = vpack.c.b16 %v2970, %v2962
    %v4643 = vpack.c.b16 %v2971, %v2963
    %v4644 = vpack.c.b16 %v2972, %v2964
    %v4645 = vpack.c.b16 %v2973, %v2965
    %v4646 = vpack.c.b16 %v2974, %v2966
    %v4647 = vpack.c.b16 %v2975, %v2967
    %v4648 = vpack.c.b16 %v2976, %v2968
    %v4649 = vpack.c.b16 %v2977, %v2969
    %v4650 = vpack.c.b16 %v2986, %v2978
    %v4651 = vpack.c.b16 %v2987, %v2979
    %v4652 = vpack.c.b16 %v2988, %v2980
    %v4653 = vpack.c.b16 %v2989, %v2981
    %v4654 = vpack.c.b16 %v2990, %v2982
    %v4655 = vpack.c.b16 %v2991, %v2983
    %v4656 = vpack.c.b16 %v2992, %v2984
    %v4657 = vpack.c.b16 %v2993, %v2985
    %v4658 = vpack.c.b16 %v3002, %v2994
    %v4659 = vpack.c.b16 %v3003, %v2995
    %v4660 = vpack.c.b16 %v3004, %v2996
    %v4661 = vpack.c.b16 %v3005, %v2997
    %v4662 = vpack.c.b16 %v3006, %v2998
    %v4663 = vpack.c.b16 %v3007, %v2999
    %v4664 = vpack.c.b16 %v3008, %v3000
    %v4665 = vpack.c.b16 %v3009, %v3001
    %v4666 = vpack.c.b16 %v3018, %v3010
    %v4667 = vpack.c.b16 %v3019, %v3011
    %v4668 = vpack.c.b16 %v3020, %v3012
    %v4669 = vpack.c.b16 %v3021, %v3013
    %v4670 = vpack.c.b16 %v3022, %v3014
    %v4671 = vpack.c.b16 %v3023, %v3015
    %v4672 = vpack.c.b16 %v3024, %v3016
    %v4673 = vpack.c.b16 %v3025, %v3017
    %v4674 = vpack.c.b16 %v3034, %v3026
    %v4675 = vpack.c.b16 %v3035, %v3027
    %v4676 = vpack.c.b16 %v3036, %v3028
    %v4677 = vpack.c.b16 %v3037, %v3029
    %v4678 = vpack.c.b16 %v3038, %v3030
    %v4679 = vpack.c.b16 %v3039, %v3031
    %v4680 = vpack.c.b16 %v3040, %v3032
    %v4681 = vpack.c.b16 %v3041, %v3033
    %v4682 = vpack.c.b16 %v3050, %v3042
    %v4683 = vpack.c.b16 %v3051, %v3043
    %v4684 = vpack.c.b16 %v3052, %v3044
    %v4685 = vpack.c.b16 %v3053, %v3045
    %v4686 = vpack.c.b16 %v3054, %v3046
    %v4687 = vpack.c.b16 %v3055, %v3047
    %v4688 = vpack.c.b16 %v3056, %v3048
    %v4689 = vpack.c.b16 %v3057, %v3049
    %v4690 = vpack.c.b16 %v3066, %v3058
    %v4691 = vpack.c.b16 %v3067, %v3059
    %v4692 = vpack.c.b16 %v3068, %v3060
    %v4693 = vpack.c.b16 %v3069, %v3061
    %v4694 = vpack.c.b16 %v3070, %v3062
    %v4695 = vpack.c.b16 %v3071, %v3063
    %v4696 = vpack.c.b16 %v3072, %v3064
    %v4697 = vpack.c.b16 %v3073, %v3065
    %v4698 = vpack.c.b16 %v3082, %v3074
    %v4699 = vpack.c.b16 %v3083, %v3075
    %v4700 = vpack.c.b16 %v3084, %v3076
    %v4701 = vpack.c.b16 %v3085, %v3077
    %v4702 = vpack.c.b16 %v3086, %v3078
    %v4703 = vpack.c.b16 %v3087, %v3079
    %v4704 = vpack.c.b16 %v3088, %v3080
    %v4705 = vpack.c.b16 %v3089, %v3081
    %v4706 = vpack.c.b16 %v3098, %v3090
    %v4707 = vpack.c.b16 %v3099, %v3091
    %v4708 = vpack.c.b16 %v3100, %v3092
    %v4709 = vpack.c.b16 %v3101, %v3093
    %v4710 = vpack.c.b16 %v3102, %v3094
    %v4711 = vpack.c.b16 %v3103, %v3095
    %v4712 = vpack.c.b16 %v3104, %v3096
    %v4713 = vpack.c.b16 %v3105, %v3097
    %v4714 = vpack.c.b16 %v3114, %v3106
    %v4715 = vpack.c.b16 %v3115, %v3107
    %v4716 = vpack.c.b16 %v3116, %v3108
    %v4717 = vpack.c.b16 %v3117, %v3109
    %v4718 = vpack.c.b16 %v3118, %v3110
    %v4719 = vpack.c.b16 %v3119, %v3111
    %v4720 = vpack.c.b16 %v3120, %v3112
    %v4721 = vpack.c.b16 %v3121, %v3113
    %v4722 = vpack.c.b16 %v3130, %v3122
    %v4723 = vpack.c.b16 %v3131, %v3123
    %v4724 = vpack.c.b16 %v3132, %v3124
    %v4725 = vpack.c.b16 %v3133, %v3125
    %v4726 = vpack.c.b16 %v3134, %v3126
    %v4727 = vpack.c.b16 %v3135, %v3127
    %v4728 = vpack.c.b16 %v3136, %v3128
    %v4729 = vpack.c.b16 %v3137, %v3129
    %v4730 = vpack.c.b16 %v3146, %v3138
    %v4731 = vpack.c.b16 %v3147, %v3139
    %v4732 = vpack.c.b16 %v3148, %v3140
    %v4733 = vpack.c.b16 %v3149, %v3141
    %v4734 = vpack.c.b16 %v3150, %v3142
    %v4735 = vpack.c.b16 %v3151, %v3143
    %v4736 = vpack.c.b16 %v3152, %v3144
    %v4737 = vpack.c.b16 %v3153, %v3145
    %v4738 = vpack.c.b16 %v3162, %v3154
    %v4739 = vpack.c.b16 %v3163, %v3155
    %v4740 = vpack.c.b16 %v3164, %v3156
    %v4741 = vpack.c.b16 %v3165, %v3157
    %v4742 = vpack.c.b16 %v3166, %v3158
    %v4743 = vpack.c.b16 %v3167, %v3159
    %v4744 = vpack.c.b16 %v3168, %v3160
    %v4745 = vpack.c.b16 %v3169, %v3161
    %v4746 = vpack.c.b16 %v3178, %v3170
    %v4747 = vpack.c.b16 %v3179, %v3171
    %v4748 = vpack.c.b16 %v3180, %v3172
    %v4749 = vpack.c.b16 %v3181, %v3173
    %v4750 = vpack.c.b16 %v3182, %v3174
    %v4751 = vpack.c.b16 %v3183, %v3175
    %v4752 = vpack.c.b16 %v3184, %v3176
    %v4753 = vpack.c.b16 %v3185, %v3177
    %v4754 = vpack.c.b16 %v3194, %v3186
    %v4755 = vpack.c.b16 %v3195, %v3187
    %v4756 = vpack.c.b16 %v3196, %v3188
    %v4757 = vpack.c.b16 %v3197, %v3189
    %v4758 = vpack.c.b16 %v3198, %v3190
    %v4759 = vpack.c.b16 %v3199, %v3191
    %v4760 = vpack.c.b16 %v3200, %v3192
    %v4761 = vpack.c.b16 %v3201, %v3193
    %v4762 = vpack.c.b16 %v3210, %v3202
    %v4763 = vpack.c.b16 %v3211, %v3203
    %v4764 = vpack.c.b16 %v3212, %v3204
    %v4765 = vpack.c.b16 %v3213, %v3205
    %v4766 = vpack.c.b16 %v3214, %v3206
    %v4767 = vpack.c.b16 %v3215, %v3207
    %v4768 = vpack.c.b16 %v3216, %v3208
    %v4769 = vpack.c.b16 %v3217, %v3209
    %v4770 = vpack.c.b16 %v3226, %v3218
    %v4771 = vpack.c.b16 %v3227, %v3219
    %v4772 = vpack.c.b16 %v3228, %v3220
    %v4773 = vpack.c.b16 %v3229, %v3221
    %v4774 = vpack.c.b16 %v3230, %v3222
    %v4775 = vpack.c.b16 %v3231, %v3223
    %v4776 = vpack.c.b16 %v3232, %v3224
    %v4777 = vpack.c.b16 %v3233, %v3225
    %v4778 = vpack.c.b16 %v3242, %v3234
    %v4779 = vpack.c.b16 %v3243, %v3235
    %v4780 = vpack.c.b16 %v3244, %v3236
    %v4781 = vpack.c.b16 %v3245, %v3237
    %v4782 = vpack.c.b16 %v3246, %v3238
    %v4783 = vpack.c.b16 %v3247, %v3239
    %v4784 = vpack.c.b16 %v3248, %v3240
    %v4785 = vpack.c.b16 %v3249, %v3241
    %v4786 = vpack.c.b16 %v3258, %v3250
    %v4787 = vpack.c.b16 %v3259, %v3251
    %v4788 = vpack.c.b16 %v3260, %v3252
    %v4789 = vpack.c.b16 %v3261, %v3253
    %v4790 = vpack.c.b16 %v3262, %v3254
    %v4791 = vpack.c.b16 %v3263, %v3255
    %v4792 = vpack.c.b16 %v3264, %v3256
    %v4793 = vpack.c.b16 %v3265, %v3257
    %v4794 = vpack.c.b16 %v3274, %v3266
    %v4795 = vpack.c.b16 %v3275, %v3267
    %v4796 = vpack.c.b16 %v3276, %v3268
    %v4797 = vpack.c.b16 %v3277, %v3269
    %v4798 = vpack.c.b16 %v3278, %v3270
    %v4799 = vpack.c.b16 %v3279, %v3271
    %v4800 = vpack.c.b16 %v3280, %v3272
    %v4801 = vpack.c.b16 %v3281, %v3273
    %v4802 = vpack.c.b16 %v3290, %v3282
    %v4803 = vpack.c.b16 %v3291, %v3283
    %v4804 = vpack.c.b16 %v3292, %v3284
    %v4805 = vpack.c.b16 %v3293, %v3285
    %v4806 = vpack.c.b16 %v3294, %v3286
    %v4807 = vpack.c.b16 %v3295, %v3287
    %v4808 = vpack.c.b16 %v3296, %v3288
    %v4809 = vpack.c.b16 %v3297, %v3289
    %v4810 = vpack.c.b16 %v3306, %v3298
    %v4811 = vpack.c.b16 %v3307, %v3299
    %v4812 = vpack.c.b16 %v3308, %v3300
    %v4813 = vpack.c.b16 %v3309, %v3301
    %v4814 = vpack.c.b16 %v3310, %v3302
    %v4815 = vpack.c.b16 %v3311, %v3303
    %v4816 = vpack.c.b16 %v3312, %v3304
    %v4817 = vpack.c.b16 %v3313, %v3305
    %v4818 = vpack.c.b16 %v3322, %v3314
    %v4819 = vpack.c.b16 %v3323, %v3315
    %v4820 = vpack.c.b16 %v3324, %v3316
    %v4821 = vpack.c.b16 %v3325, %v3317
    %v4822 = vpack.c.b16 %v3326, %v3318
    %v4823 = vpack.c.b16 %v3327, %v3319
    %v4824 = vpack.c.b16 %v3328, %v3320
    %v4825 = vpack.c.b16 %v3329, %v3321
    %v4826 = vpack.c.b16 %v3338, %v3330
    %v4827 = vpack.c.b16 %v3339, %v3331
    %v4828 = vpack.c.b16 %v3340, %v3332
    %v4829 = vpack.c.b16 %v3341, %v3333
    %v4830 = vpack.c.b16 %v3342, %v3334
    %v4831 = vpack.c.b16 %v3343, %v3335
    %v4832 = vpack.c.b16 %v3344, %v3336
    %v4833 = vpack.c.b16 %v3345, %v3337
    %v4834 = vpack.c.b16 %v3354, %v3346
    %v4835 = vpack.c.b16 %v3355, %v3347
    %v4836 = vpack.c.b16 %v3356, %v3348
    %v4837 = vpack.c.b16 %v3357, %v3349
    %v4838 = vpack.c.b16 %v3358, %v3350
    %v4839 = vpack.c.b16 %v3359, %v3351
    %v4840 = vpack.c.b16 %v3360, %v3352
    %v4841 = vpack.c.b16 %v3361, %v3353
    %v4842 = vpack.c.b16 %v3370, %v3362
    %v4843 = vpack.c.b16 %v3371, %v3363
    %v4844 = vpack.c.b16 %v3372, %v3364
    %v4845 = vpack.c.b16 %v3373, %v3365
    %v4846 = vpack.c.b16 %v3374, %v3366
    %v4847 = vpack.c.b16 %v3375, %v3367
    %v4848 = vpack.c.b16 %v3376, %v3368
    %v4849 = vpack.c.b16 %v3377, %v3369
    %v4850 = vpack.c.b16 %v3386, %v3378
    %v4851 = vpack.c.b16 %v3387, %v3379
    %v4852 = vpack.c.b16 %v3388, %v3380
    %v4853 = vpack.c.b16 %v3389, %v3381
    %v4854 = vpack.c.b16 %v3390, %v3382
    %v4855 = vpack.c.b16 %v3391, %v3383
    %v4856 = vpack.c.b16 %v3392, %v3384
    %v4857 = vpack.c.b16 %v3393, %v3385
    %v4858 = vpack.c.b16 %v3402, %v3394
    %v4859 = vpack.c.b16 %v3403, %v3395
    %v4860 = vpack.c.b16 %v3404, %v3396
    %v4861 = vpack.c.b16 %v3405, %v3397
    %v4862 = vpack.c.b16 %v3406, %v3398
    %v4863 = vpack.c.b16 %v3407, %v3399
    %v4864 = vpack.c.b16 %v3408, %v3400
    %v4865 = vpack.c.b16 %v3409, %v3401
    %v4866 = vpack.c.b16 %v3418, %v3410
    %v4867 = vpack.c.b16 %v3419, %v3411
    %v4868 = vpack.c.b16 %v3420, %v3412
    %v4869 = vpack.c.b16 %v3421, %v3413
    %v4870 = vpack.c.b16 %v3422, %v3414
    %v4871 = vpack.c.b16 %v3423, %v3415
    %v4872 = vpack.c.b16 %v3424, %v3416
    %v4873 = vpack.c.b16 %v3425, %v3417
    %v4874 = vpack.c.b16 %v3434, %v3426
    %v4875 = vpack.c.b16 %v3435, %v3427
    %v4876 = vpack.c.b16 %v3436, %v3428
    %v4877 = vpack.c.b16 %v3437, %v3429
    %v4878 = vpack.c.b16 %v3438, %v3430
    %v4879 = vpack.c.b16 %v3439, %v3431
    %v4880 = vpack.c.b16 %v3440, %v3432
    %v4881 = vpack.c.b16 %v3441, %v3433
    %v4882 = vpack.c.b16 %v3450, %v3442
    %v4883 = vpack.c.b16 %v3451, %v3443
    %v4884 = vpack.c.b16 %v3452, %v3444
    %v4885 = vpack.c.b16 %v3453, %v3445
    %v4886 = vpack.c.b16 %v3454, %v3446
    %v4887 = vpack.c.b16 %v3455, %v3447
    %v4888 = vpack.c.b16 %v3456, %v3448
    %v4889 = vpack.c.b16 %v3457, %v3449
    %v4890 = vpack.c.b16 %v3466, %v3458
    %v4891 = vpack.c.b16 %v3467, %v3459
    %v4892 = vpack.c.b16 %v3468, %v3460
    %v4893 = vpack.c.b16 %v3469, %v3461
    %v4894 = vpack.c.b16 %v3470, %v3462
    %v4895 = vpack.c.b16 %v3471, %v3463
    %v4896 = vpack.c.b16 %v3472, %v3464
    %v4897 = vpack.c.b16 %v3473, %v3465
    %v4898 = vpack.c.b16 %v3482, %v3474
    %v4899 = vpack.c.b16 %v3483, %v3475
    %v4900 = vpack.c.b16 %v3484, %v3476
    %v4901 = vpack.c.b16 %v3485, %v3477
    %v4902 = vpack.c.b16 %v3486, %v3478
    %v4903 = vpack.c.b16 %v3487, %v3479
    %v4904 = vpack.c.b16 %v3488, %v3480
    %v4905 = vpack.c.b16 %v3489, %v3481
    %v4906 = vpack.c.b16 %v3498, %v3490
    %v4907 = vpack.c.b16 %v3499, %v3491
    %v4908 = vpack.c.b16 %v3500, %v3492
    %v4909 = vpack.c.b16 %v3501, %v3493
    %v4910 = vpack.c.b16 %v3502, %v3494
    %v4911 = vpack.c.b16 %v3503, %v3495
    %v4912 = vpack.c.b16 %v3504, %v3496
    %v4913 = vpack.c.b16 %v3505, %v3497
    %v4914 = vpack.c.b16 %v3514, %v3506
    %v4915 = vpack.c.b16 %v3515, %v3507
    %v4916 = vpack.c.b16 %v3516, %v3508
    %v4917 = vpack.c.b16 %v3517, %v3509
    %v4918 = vpack.c.b16 %v3518, %v3510
    %v4919 = vpack.c.b16 %v3519, %v3511
    %v4920 = vpack.c.b16 %v3520, %v3512
    %v4921 = vpack.c.b16 %v3521, %v3513
    %v4922 = vpack.c.b16 %v3530, %v3522
    %v4923 = vpack.c.b16 %v3531, %v3523
    %v4924 = vpack.c.b16 %v3532, %v3524
    %v4925 = vpack.c.b16 %v3533, %v3525
    %v4926 = vpack.c.b16 %v3534, %v3526
    %v4927 = vpack.c.b16 %v3535, %v3527
    %v4928 = vpack.c.b16 %v3536, %v3528
    %v4929 = vpack.c.b16 %v3537, %v3529
    %v4930 = vpack.c.b16 %v3546, %v3538
    %v4931 = vpack.c.b16 %v3547, %v3539
    %v4932 = vpack.c.b16 %v3548, %v3540
    %v4933 = vpack.c.b16 %v3549, %v3541
    %v4934 = vpack.c.b16 %v3550, %v3542
    %v4935 = vpack.c.b16 %v3551, %v3543
    %v4936 = vpack.c.b16 %v3552, %v3544
    %v4937 = vpack.c.b16 %v3553, %v3545
    %v4938 = vpack.c.b16 %v3562, %v3554
    %v4939 = vpack.c.b16 %v3563, %v3555
    %v4940 = vpack.c.b16 %v3564, %v3556
    %v4941 = vpack.c.b16 %v3565, %v3557
    %v4942 = vpack.c.b16 %v3566, %v3558
    %v4943 = vpack.c.b16 %v3567, %v3559
    %v4944 = vpack.c.b16 %v3568, %v3560
    %v4945 = vpack.c.b16 %v3569, %v3561
    %v4946 = vpack.c.b16 %v3578, %v3570
    %v4947 = vpack.c.b16 %v3579, %v3571
    %v4948 = vpack.c.b16 %v3580, %v3572
    %v4949 = vpack.c.b16 %v3581, %v3573
    %v4950 = vpack.c.b16 %v3582, %v3574
    %v4951 = vpack.c.b16 %v3583, %v3575
    %v4952 = vpack.c.b16 %v3584, %v3576
    %v4953 = vpack.c.b16 %v3585, %v3577
    %v4954 = vpack.c.b16 %v3594, %v3586
    %v4955 = vpack.c.b16 %v3595, %v3587
    %v4956 = vpack.c.b16 %v3596, %v3588
    %v4957 = vpack.c.b16 %v3597, %v3589
    %v4958 = vpack.c.b16 %v3598, %v3590
    %v4959 = vpack.c.b16 %v3599, %v3591
    %v4960 = vpack.c.b16 %v3600, %v3592
    %v4961 = vpack.c.b16 %v3601, %v3593
    %v4962 = vpack.c.b16 %v3610, %v3602
    %v4963 = vpack.c.b16 %v3611, %v3603
    %v4964 = vpack.c.b16 %v3612, %v3604
    %v4965 = vpack.c.b16 %v3613, %v3605
    %v4966 = vpack.c.b16 %v3614, %v3606
    %v4967 = vpack.c.b16 %v3615, %v3607
    %v4968 = vpack.c.b16 %v3616, %v3608
    %v4969 = vpack.c.b16 %v3617, %v3609
    %v4970 = vpack.c.b16 %v3626, %v3618
    %v4971 = vpack.c.b16 %v3627, %v3619
    %v4972 = vpack.c.b16 %v3628, %v3620
    %v4973 = vpack.c.b16 %v3629, %v3621
    %v4974 = vpack.c.b16 %v3630, %v3622
    %v4975 = vpack.c.b16 %v3631, %v3623
    %v4976 = vpack.c.b16 %v3632, %v3624
    %v4977 = vpack.c.b16 %v3633, %v3625
    %v4978 = vpack.c.b16 %v3642, %v3634
    %v4979 = vpack.c.b16 %v3643, %v3635
    %v4980 = vpack.c.b16 %v3644, %v3636
    %v4981 = vpack.c.b16 %v3645, %v3637
    %v4982 = vpack.c.b16 %v3646, %v3638
    %v4983 = vpack.c.b16 %v3647, %v3639
    %v4984 = vpack.c.b16 %v3648, %v3640
    %v4985 = vpack.c.b16 %v3649, %v3641
    %v4986 = vpack.c.b16 %v3658, %v3650
    %v4987 = vpack.c.b16 %v3659, %v3651
    %v4988 = vpack.c.b16 %v3660, %v3652
    %v4989 = vpack.c.b16 %v3661, %v3653
    %v4990 = vpack.c.b16 %v3662, %v3654
    %v4991 = vpack.c.b16 %v3663, %v3655
    %v4992 = vpack.c.b16 %v3664, %v3656
    %v4993 = vpack.c.b16 %v3665, %v3657
    %v4994 = vpack.c.b16 %v3674, %v3666
    %v4995 = vpack.c.b16 %v3675, %v3667
    %v4996 = vpack.c.b16 %v3676, %v3668
    %v4997 = vpack.c.b16 %v3677, %v3669
    %v4998 = vpack.c.b16 %v3678, %v3670
    %v4999 = vpack.c.b16 %v3679, %v3671
    %v5000 = vpack.c.b16 %v3680, %v3672
    %v5001 = vpack.c.b16 %v3681, %v3673
    %v5002 = vpack.c.b16 %v3690, %v3682
    %v5003 = vpack.c.b16 %v3691, %v3683
    %v5004 = vpack.c.b16 %v3692, %v3684
    %v5005 = vpack.c.b16 %v3693, %v3685
    %v5006 = vpack.c.b16 %v3694, %v3686
    %v5007 = vpack.c.b16 %v3695, %v3687
    %v5008 = vpack.c.b16 %v3696, %v3688
    %v5009 = vpack.c.b16 %v3697, %v3689
    %v5010 = vpack.c.b16 %v3706, %v3698
    %v5011 = vpack.c.b16 %v3707, %v3699
    %v5012 = vpack.c.b16 %v3708, %v3700
    %v5013 = vpack.c.b16 %v3709, %v3701
    %v5014 = vpack.c.b16 %v3710, %v3702
    %v5015 = vpack.c.b16 %v3711, %v3703
    %v5016 = vpack.c.b16 %v3712, %v3704
    %v5017 = vpack.c.b16 %v3713, %v3705
    %v5018 = vpack.c.b16 %v3722, %v3714
    %v5019 = vpack.c.b16 %v3723, %v3715
    %v5020 = vpack.c.b16 %v3724, %v3716
    %v5021 = vpack.c.b16 %v3725, %v3717
    %v5022 = vpack.c.b16 %v3726, %v3718
    %v5023 = vpack.c.b16 %v3727, %v3719
    %v5024 = vpack.c.b16 %v3728, %v3720
    %v5025 = vpack.c.b16 %v3729, %v3721
    %v5026 = vpack.c.b16 %v3738, %v3730
    %v5027 = vpack.c.b16 %v3739, %v3731
    %v5028 = vpack.c.b16 %v3740, %v3732
    %v5029 = vpack.c.b16 %v3741, %v3733
    %v5030 = vpack.c.b16 %v3742, %v3734
    %v5031 = vpack.c.b16 %v3743, %v3735
    %v5032 = vpack.c.b16 %v3744, %v3736
    %v5033 = vpack.c.b16 %v3745, %v3737
    %v5034 = vpack.c.b16 %v3754, %v3746
    %v5035 = vpack.c.b16 %v3755, %v3747
    %v5036 = vpack.c.b16 %v3756, %v3748
    %v5037 = vpack.c.b16 %v3757, %v3749
    %v5038 = vpack.c.b16 %v3758, %v3750
    %v5039 = vpack.c.b16 %v3759, %v3751
    %v5040 = vpack.c.b16 %v3760, %v3752
    %v5041 = vpack.c.b16 %v3761, %v3753
    %v5042 = vpack.c.b16 %v3770, %v3762
    %v5043 = vpack.c.b16 %v3771, %v3763
    %v5044 = vpack.c.b16 %v3772, %v3764
    %v5045 = vpack.c.b16 %v3773, %v3765
    %v5046 = vpack.c.b16 %v3774, %v3766
    %v5047 = vpack.c.b16 %v3775, %v3767
    %v5048 = vpack.c.b16 %v3776, %v3768
    %v5049 = vpack.c.b16 %v3777, %v3769
    %v5050 = vpack.c.b16 %v3786, %v3778
    %v5051 = vpack.c.b16 %v3787, %v3779
    %v5052 = vpack.c.b16 %v3788, %v3780
    %v5053 = vpack.c.b16 %v3789, %v3781
    %v5054 = vpack.c.b16 %v3790, %v3782
    %v5055 = vpack.c.b16 %v3791, %v3783
    %v5056 = vpack.c.b16 %v3792, %v3784
    %v5057 = vpack.c.b16 %v3793, %v3785
    %v5058 = vpack.c.b16 %v3802, %v3794
    %v5059 = vpack.c.b16 %v3803, %v3795
    %v5060 = vpack.c.b16 %v3804, %v3796
    %v5061 = vpack.c.b16 %v3805, %v3797
    %v5062 = vpack.c.b16 %v3806, %v3798
    %v5063 = vpack.c.b16 %v3807, %v3799
    %v5064 = vpack.c.b16 %v3808, %v3800
    %v5065 = vpack.c.b16 %v3809, %v3801
    %v5066 = vpack.c.b16 %v3818, %v3810
    %v5067 = vpack.c.b16 %v3819, %v3811
    %v5068 = vpack.c.b16 %v3820, %v3812
    %v5069 = vpack.c.b16 %v3821, %v3813
    %v5070 = vpack.c.b16 %v3822, %v3814
    %v5071 = vpack.c.b16 %v3823, %v3815
    %v5072 = vpack.c.b16 %v3824, %v3816
    %v5073 = vpack.c.b16 %v3825, %v3817
    %v5074 = vpack.c.b16 %v3834, %v3826
    %v5075 = vpack.c.b16 %v3835, %v3827
    %v5076 = vpack.c.b16 %v3836, %v3828
    %v5077 = vpack.c.b16 %v3837, %v3829
    %v5078 = vpack.c.b16 %v3838, %v3830
    %v5079 = vpack.c.b16 %v3839, %v3831
    %v5080 = vpack.c.b16 %v3840, %v3832
    %v5081 = vpack.c.b16 %v3841, %v3833
    %v5082 = vpack.c.b16 %v3850, %v3842
    %v5083 = vpack.c.b16 %v3851, %v3843
    %v5084 = vpack.c.b16 %v3852, %v3844
    %v5085 = vpack.c.b16 %v3853, %v3845
    %v5086 = vpack.c.b16 %v3854, %v3846
    %v5087 = vpack.c.b16 %v3855, %v3847
    %v5088 = vpack.c.b16 %v3856, %v3848
    %v5089 = vpack.c.b16 %v3857, %v3849
    %v5090 = vpack.c.b16 %v3866, %v3858
    %v5091 = vpack.c.b16 %v3867, %v3859
    %v5092 = vpack.c.b16 %v3868, %v3860
    %v5093 = vpack.c.b16 %v3869, %v3861
    %v5094 = vpack.c.b16 %v3870, %v3862
    %v5095 = vpack.c.b16 %v3871, %v3863
    %v5096 = vpack.c.b16 %v3872, %v3864
    %v5097 = vpack.c.b16 %v3873, %v3865
    %v5098 = vpack.c.b16 %v3882, %v3874
    %v5099 = vpack.c.b16 %v3883, %v3875
    %v5100 = vpack.c.b16 %v3884, %v3876
    %v5101 = vpack.c.b16 %v3885, %v3877
    %v5102 = vpack.c.b16 %v3886, %v3878
    %v5103 = vpack.c.b16 %v3887, %v3879
    %v5104 = vpack.c.b16 %v3888, %v3880
    %v5105 = vpack.c.b16 %v3889, %v3881
    %v5106 = vpack.c.b16 %v3898, %v3890
    %v5107 = vpack.c.b16 %v3899, %v3891
    %v5108 = vpack.c.b16 %v3900, %v3892
    %v5109 = vpack.c.b16 %v3901, %v3893
    %v5110 = vpack.c.b16 %v3902, %v3894
    %v5111 = vpack.c.b16 %v3903, %v3895
    %v5112 = vpack.c.b16 %v3904, %v3896
    %v5113 = vpack.c.b16 %v3905, %v3897
    %v5114 = vpack.c.b16 %v3914, %v3906
    %v5115 = vpack.c.b16 %v3915, %v3907
    %v5116 = vpack.c.b16 %v3916, %v3908
    %v5117 = vpack.c.b16 %v3917, %v3909
    %v5118 = vpack.c.b16 %v3918, %v3910
    %v5119 = vpack.c.b16 %v3919, %v3911
    %v5120 = vpack.c.b16 %v3920, %v3912
    %v5121 = vpack.c.b16 %v3921, %v3913
    %v5122 = vpack.c.b16 %v3930, %v3922
    %v5123 = vpack.c.b16 %v3931, %v3923
    %v5124 = vpack.c.b16 %v3932, %v3924
    %v5125 = vpack.c.b16 %v3933, %v3925
    %v5126 = vpack.c.b16 %v3934, %v3926
    %v5127 = vpack.c.b16 %v3935, %v3927
    %v5128 = vpack.c.b16 %v3936, %v3928
    %v5129 = vpack.c.b16 %v3937, %v3929
    %v5130 = vpack.c.b16 %v3946, %v3938
    %v5131 = vpack.c.b16 %v3947, %v3939
    %v5132 = vpack.c.b16 %v3948, %v3940
    %v5133 = vpack.c.b16 %v3949, %v3941
    %v5134 = vpack.c.b16 %v3950, %v3942
    %v5135 = vpack.c.b16 %v3951, %v3943
    %v5136 = vpack.c.b16 %v3952, %v3944
    %v5137 = vpack.c.b16 %v3953, %v3945
    %v5138 = vpack.c.b16 %v3962, %v3954
    %v5139 = vpack.c.b16 %v3963, %v3955
    %v5140 = vpack.c.b16 %v3964, %v3956
    %v5141 = vpack.c.b16 %v3965, %v3957
    %v5142 = vpack.c.b16 %v3966, %v3958
    %v5143 = vpack.c.b16 %v3967, %v3959
    %v5144 = vpack.c.b16 %v3968, %v3960
    %v5145 = vpack.c.b16 %v3969, %v3961
    %v5146 = vpack.c.b16 %v3978, %v3970
    %v5147 = vpack.c.b16 %v3979, %v3971
    %v5148 = vpack.c.b16 %v3980, %v3972
    %v5149 = vpack.c.b16 %v3981, %v3973
    %v5150 = vpack.c.b16 %v3982, %v3974
    %v5151 = vpack.c.b16 %v3983, %v3975
    %v5152 = vpack.c.b16 %v3984, %v3976
    %v5153 = vpack.c.b16 %v3985, %v3977
    %v5154 = vpack.c.b16 %v3994, %v3986
    %v5155 = vpack.c.b16 %v3995, %v3987
    %v5156 = vpack.c.b16 %v3996, %v3988
    %v5157 = vpack.c.b16 %v3997, %v3989
    %v5158 = vpack.c.b16 %v3998, %v3990
    %v5159 = vpack.c.b16 %v3999, %v3991
    %v5160 = vpack.c.b16 %v4000, %v3992
    %v5161 = vpack.c.b16 %v4001, %v3993
    %v5162 = vpack.c.b16 %v4010, %v4002
    %v5163 = vpack.c.b16 %v4011, %v4003
    %v5164 = vpack.c.b16 %v4012, %v4004
    %v5165 = vpack.c.b16 %v4013, %v4005
    %v5166 = vpack.c.b16 %v4014, %v4006
    %v5167 = vpack.c.b16 %v4015, %v4007
    %v5168 = vpack.c.b16 %v4016, %v4008
    %v5169 = vpack.c.b16 %v4017, %v4009
    %v5170 = vpack.c.b16 %v4026, %v4018
    %v5171 = vpack.c.b16 %v4027, %v4019
    %v5172 = vpack.c.b16 %v4028, %v4020
    %v5173 = vpack.c.b16 %v4029, %v4021
    %v5174 = vpack.c.b16 %v4030, %v4022
    %v5175 = vpack.c.b16 %v4031, %v4023
    %v5176 = vpack.c.b16 %v4032, %v4024
    %v5177 = vpack.c.b16 %v4033, %v4025
    %v5178 = vpack.c.b16 %v4042, %v4034
    %v5179 = vpack.c.b16 %v4043, %v4035
    %v5180 = vpack.c.b16 %v4044, %v4036
    %v5181 = vpack.c.b16 %v4045, %v4037
    %v5182 = vpack.c.b16 %v4046, %v4038
    %v5183 = vpack.c.b16 %v4047, %v4039
    %v5184 = vpack.c.b16 %v4048, %v4040
    %v5185 = vpack.c.b16 %v4049, %v4041
    %v5186 = vpack.c.b16 %v4058, %v4050
    %v5187 = vpack.c.b16 %v4059, %v4051
    %v5188 = vpack.c.b16 %v4060, %v4052
    %v5189 = vpack.c.b16 %v4061, %v4053
    %v5190 = vpack.c.b16 %v4062, %v4054
    %v5191 = vpack.c.b16 %v4063, %v4055
    %v5192 = vpack.c.b16 %v4064, %v4056
    %v5193 = vpack.c.b16 %v4065, %v4057
    %v5194 = vpack.c.b16 %v4074, %v4066
    %v5195 = vpack.c.b16 %v4075, %v4067
    %v5196 = vpack.c.b16 %v4076, %v4068
    %v5197 = vpack.c.b16 %v4077, %v4069
    %v5198 = vpack.c.b16 %v4078, %v4070
    %v5199 = vpack.c.b16 %v4079, %v4071
    %v5200 = vpack.c.b16 %v4080, %v4072
    %v5201 = vpack.c.b16 %v4081, %v4073
    %v5202 = vpack.c.b16 %v4090, %v4082
    %v5203 = vpack.c.b16 %v4091, %v4083
    %v5204 = vpack.c.b16 %v4092, %v4084
    %v5205 = vpack.c.b16 %v4093, %v4085
    %v5206 = vpack.c.b16 %v4094, %v4086
    %v5207 = vpack.c.b16 %v4095, %v4087
    %v5208 = vpack.c.b16 %v4096, %v4088
    %v5209 = vpack.c.b16 %v4097, %v4089
    %v5210 = vpack.c.b16 %v4106, %v4098
    %v5211 = vpack.c.b16 %v4107, %v4099
    %v5212 = vpack.c.b16 %v4108, %v4100
    %v5213 = vpack.c.b16 %v4109, %v4101
    %v5214 = vpack.c.b16 %v4110, %v4102
    %v5215 = vpack.c.b16 %v4111, %v4103
    %v5216 = vpack.c.b16 %v4112, %v4104
    %v5217 = vpack.c.b16 %v4113, %v4105
    %v5218 = vpack.c.b16 %v4122, %v4114
    %v5219 = vpack.c.b16 %v4123, %v4115
    %v5220 = vpack.c.b16 %v4124, %v4116
    %v5221 = vpack.c.b16 %v4125, %v4117
    %v5222 = vpack.c.b16 %v4126, %v4118
    %v5223 = vpack.c.b16 %v4127, %v4119
    %v5224 = vpack.c.b16 %v4128, %v4120
    %v5225 = vpack.c.b16 %v4129, %v4121
    %v5226 = vpack.c.b16 %v4138, %v4130
    %v5227 = vpack.c.b16 %v4139, %v4131
    %v5228 = vpack.c.b16 %v4140, %v4132
    %v5229 = vpack.c.b16 %v4141, %v4133
    %v5230 = vpack.c.b16 %v4142, %v4134
    %v5231 = vpack.c.b16 %v4143, %v4135
    %v5232 = vpack.c.b16 %v4144, %v4136
    %v5233 = vpack.c.b16 %v4145, %v4137
    %v5234 = vpack.c.b16 %v4154, %v4146
    %v5235 = vpack.c.b16 %v4155, %v4147
    %v5236 = vpack.c.b16 %v4156, %v4148
    %v5237 = vpack.c.b16 %v4157, %v4149
    %v5238 = vpack.c.b16 %v4158, %v4150
    %v5239 = vpack.c.b16 %v4159, %v4151
    %v5240 = vpack.c.b16 %v4160, %v4152
    %v5241 = vpack.c.b16 %v4161, %v4153
    %v5242 = vpack.c.b16 %v4170, %v4162
    %v5243 = vpack.c.b16 %v4171, %v4163
    %v5244 = vpack.c.b16 %v4172, %v4164
    %v5245 = vpack.c.b16 %v4173, %v4165
    %v5246 = vpack.c.b16 %v4174, %v4166
    %v5247 = vpack.c.b16 %v4175, %v4167
    %v5248 = vpack.c.b16 %v4176, %v4168
    %v5249 = vpack.c.b16 %v4177, %v4169
    %v5250 = vpack.c.b16 %v4186, %v4178
    %v5251 = vpack.c.b16 %v4187, %v4179
    %v5252 = vpack.c.b16 %v4188, %v4180
    %v5253 = vpack.c.b16 %v4189, %v4181
    %v5254 = vpack.c.b16 %v4190, %v4182
    %v5255 = vpack.c.b16 %v4191, %v4183
    %v5256 = vpack.c.b16 %v4192, %v4184
    %v5257 = vpack.c.b16 %v4193, %v4185
    %v5258 = vpack.c.b16 %v4202, %v4194
    %v5259 = vpack.c.b16 %v4203, %v4195
    %v5260 = vpack.c.b16 %v4204, %v4196
    %v5261 = vpack.c.b16 %v4205, %v4197
    %v5262 = vpack.c.b16 %v4206, %v4198
    %v5263 = vpack.c.b16 %v4207, %v4199
    %v5264 = vpack.c.b16 %v4208, %v4200
    %v5265 = vpack.c.b16 %v4209, %v4201
    %v5266 = vpack.c.b16 %v4218, %v4210
    %v5267 = vpack.c.b16 %v4219, %v4211
    %v5268 = vpack.c.b16 %v4220, %v4212
    %v5269 = vpack.c.b16 %v4221, %v4213
    %v5270 = vpack.c.b16 %v4222, %v4214
    %v5271 = vpack.c.b16 %v4223, %v4215
    %v5272 = vpack.c.b16 %v4224, %v4216
    %v5273 = vpack.c.b16 %v4225, %v4217
    %v5274 = vpack.c.b16 %v4234, %v4226
    %v5275 = vpack.c.b16 %v4235, %v4227
    %v5276 = vpack.c.b16 %v4236, %v4228
    %v5277 = vpack.c.b16 %v4237, %v4229
    %v5278 = vpack.c.b16 %v4238, %v4230
    %v5279 = vpack.c.b16 %v4239, %v4231
    %v5280 = vpack.c.b16 %v4240, %v4232
    %v5281 = vpack.c.b16 %v4241, %v4233
    %v5282 = vpack.c.b16 %v4250, %v4242
    %v5283 = vpack.c.b16 %v4251, %v4243
    %v5284 = vpack.c.b16 %v4252, %v4244
    %v5285 = vpack.c.b16 %v4253, %v4245
    %v5286 = vpack.c.b16 %v4254, %v4246
    %v5287 = vpack.c.b16 %v4255, %v4247
    %v5288 = vpack.c.b16 %v4256, %v4248
    %v5289 = vpack.c.b16 %v4257, %v4249
    %v5290 = vpack.c.b16 %v4266, %v4258
    %v5291 = vpack.c.b16 %v4267, %v4259
    %v5292 = vpack.c.b16 %v4268, %v4260
    %v5293 = vpack.c.b16 %v4269, %v4261
    %v5294 = vpack.c.b16 %v4270, %v4262
    %v5295 = vpack.c.b16 %v4271, %v4263
    %v5296 = vpack.c.b16 %v4272, %v4264
    %v5297 = vpack.c.b16 %v4273, %v4265
    %6322 = vmatprep.subr.bf16.mxu0 %v4275
    %6323 = vmatpush1.bf16.msra.mxu0 %v4274
    %6324 = vmatprep.subr.bf16.mxu0 %v4283
    %6325 = vmatpush1.bf16.msra.mxu0 %v4282
    %6326 = vmatprep.subr.bf16.mxu0 %v4291
    %6327 = vmatpush1.bf16.msra.mxu0 %v4290
    %6328 = vmatprep.subr.bf16.mxu0 %v4299
    %6329 = vmatpush1.bf16.msra.mxu0 %v4298
    %6330 = vmatprep.subr.bf16.mxu0 %v4307
    %6331 = vmatpush1.bf16.msra.mxu0 %v4306
    %6332 = vmatprep.subr.bf16.mxu0 %v4315
    %6333 = vmatpush1.bf16.msra.mxu0 %v4314
    %6334 = vmatprep.subr.bf16.mxu0 %v4323
    %6335 = vmatpush1.bf16.msra.mxu0 %v4322
    %6336 = vmatprep.subr.bf16.mxu0 %v4331
    %6337 = vmatpush1.bf16.msra.mxu0 %v4330
    %6338 = vmatprep.subr.bf16.mxu0 %v4339
    %6339 = vmatpush1.bf16.msra.mxu0 %v4338
    %6340 = vmatprep.subr.bf16.mxu0 %v4347
    %6341 = vmatpush1.bf16.msra.mxu0 %v4346
    %6342 = vmatprep.subr.bf16.mxu0 %v4355
    %6343 = vmatpush1.bf16.msra.mxu0 %v4354
    %6344 = vmatprep.subr.bf16.mxu0 %v4363
    %6345 = vmatpush1.bf16.msra.mxu0 %v4362
    %6346 = vmatprep.subr.bf16.mxu0 %v4371
    %6347 = vmatpush1.bf16.msra.mxu0 %v4370
    %6348 = vmatprep.subr.bf16.mxu0 %v4379
    %6349 = vmatpush1.bf16.msra.mxu0 %v4378
    %6350 = vmatprep.subr.bf16.mxu0 %v4387
    %6351 = vmatpush1.bf16.msra.mxu0 %v4386
    %6352 = vmatprep.subr.bf16.mxu0 %v4395
    %6353 = vmatpush1.bf16.msra.mxu0 %v4394
    %6354 = vmatprep.mubr.bf16.mxu0 %v1125
    %6355 = vmatmul.mubr.bf16.gmra.mrb[0].mxu0 %v1111
    %v6356 = vpop.f32.mrb[0].mxu0
    %v6357 = vadd.f32 0.0, %v6356
    %v6358 = vpop.f32.mrb[0].mxu0
    %v6359 = vadd.f32 0.0, %v6358
    %v6360 = vpop.f32.mrb[0].mxu0
    %v6361 = vpop.f32.mrb[0].mxu0
    %6362 = vdwg.mxu0
    %6363 = vmatprep.subr.bf16.mxu0 %v4403
    %6364 = vmatpush1.bf16.msra.mxu0 %v4402
    %6365 = vmatprep.subr.bf16.mxu0 %v4411
    %6366 = vmatpush1.bf16.msra.mxu0 %v4410
    %6367 = vmatprep.subr.bf16.mxu0 %v4419
    %6368 = vmatpush1.bf16.msra.mxu0 %v4418
    %6369 = vmatprep.subr.bf16.mxu0 %v4427
    %6370 = vmatpush1.bf16.msra.mxu0 %v4426
    %6371 = vmatprep.subr.bf16.mxu0 %v4435
    %6372 = vmatpush1.bf16.msra.mxu0 %v4434
    %6373 = vmatprep.subr.bf16.mxu0 %v4443
    %6374 = vmatpush1.bf16.msra.mxu0 %v4442
    %6375 = vmatprep.subr.bf16.mxu0 %v4451
    %6376 = vmatpush1.bf16.msra.mxu0 %v4450
    %6377 = vmatprep.subr.bf16.mxu0 %v4459
    %6378 = vmatpush1.bf16.msra.mxu0 %v4458
    %6379 = vmatprep.subr.bf16.mxu0 %v4467
    %6380 = vmatpush1.bf16.msra.mxu0 %v4466
    %6381 = vmatprep.subr.bf16.mxu0 %v4475
    %6382 = vmatpush1.bf16.msra.mxu0 %v4474
    %6383 = vmatprep.subr.bf16.mxu0 %v4483
    %6384 = vmatpush1.bf16.msra.mxu0 %v4482
    %6385 = vmatprep.subr.bf16.mxu0 %v4491
    %6386 = vmatpush1.bf16.msra.mxu0 %v4490
    %6387 = vmatprep.subr.bf16.mxu0 %v4499
    %6388 = vmatpush1.bf16.msra.mxu0 %v4498
    %6389 = vmatprep.subr.bf16.mxu0 %v4507
    %6390 = vmatpush1.bf16.msra.mxu0 %v4506
    %6391 = vmatprep.subr.bf16.mxu0 %v4515
    %6392 = vmatpush1.bf16.msra.mxu0 %v4514
    %6393 = vmatprep.subr.bf16.mxu0 %v4523
    %6394 = vmatpush1.bf16.msra.mxu0 %v4522
    %6395 = vmatprep.mubr.bf16.mxu0 %v1135
    %6396 = vmatmul.mubr.bf16.gmra.mrb[0].mxu0 %v1133
    %v6397 = vpop.f32.mrb[0].mxu0
    %v6398 = vadd.f32 %v6357, %v6397
    %v6399 = vpop.f32.mrb[0].mxu0
    %v6400 = vadd.f32 %v6359, %v6399
    %v6401 = vpop.f32.mrb[0].mxu0
    %v6402 = vpop.f32.mrb[0].mxu0
    %6403 = vdwg.mxu0
    %6404 = vmatprep.subr.bf16.mxu0 %v4531
    %6405 = vmatpush1.bf16.msra.mxu0 %v4530
    %6406 = vmatprep.subr.bf16.mxu0 %v4539
    %6407 = vmatpush1.bf16.msra.mxu0 %v4538
    %6408 = vmatprep.subr.bf16.mxu0 %v4547
    %6409 = vmatpush1.bf16.msra.mxu0 %v4546
    %6410 = vmatprep.subr.bf16.mxu0 %v4555
    %6411 = vmatpush1.bf16.msra.mxu0 %v4554
    %6412 = vmatprep.subr.bf16.mxu0 %v4563
    %6413 = vmatpush1.bf16.msra.mxu0 %v4562
    %6414 = vmatprep.subr.bf16.mxu0 %v4571
    %6415 = vmatpush1.bf16.msra.mxu0 %v4570
    %6416 = vmatprep.subr.bf16.mxu0 %v4579
    %6417 = vmatpush1.bf16.msra.mxu0 %v4578
    %6418 = vmatprep.subr.bf16.mxu0 %v4587
    %6419 = vmatpush1.bf16.msra.mxu0 %v4586
    %6420 = vmatprep.subr.bf16.mxu0 %v4595
    %6421 = vmatpush1.bf16.msra.mxu0 %v4594
    %6422 = vmatprep.subr.bf16.mxu0 %v4603
    %6423 = vmatpush1.bf16.msra.mxu0 %v4602
    %6424 = vmatprep.subr.bf16.mxu0 %v4611
    %6425 = vmatpush1.bf16.msra.mxu0 %v4610
    %6426 = vmatprep.subr.bf16.mxu0 %v4619
    %6427 = vmatpush1.bf16.msra.mxu0 %v4618
    %6428 = vmatprep.subr.bf16.mxu0 %v4627
    %6429 = vmatpush1.bf16.msra.mxu0 %v4626
    %6430 = vmatprep.subr.bf16.mxu0 %v4635
    %6431 = vmatpush1.bf16.msra.mxu0 %v4634
    %6432 = vmatprep.subr.bf16.mxu0 %v4643
    %6433 = vmatpush1.bf16.msra.mxu0 %v4642
    %6434 = vmatprep.subr.bf16.mxu0 %v4651
    %6435 = vmatpush1.bf16.msra.mxu0 %v4650
    %6436 = vmatprep.mubr.bf16.mxu0 %v1132
    %6437 = vmatmul.mubr.bf16.gmra.mrb[0].mxu0 %v1118
    %v6438 = vpop.f32.mrb[0].mxu0
    %v6439 = vadd.f32 %v6398, %v6438
    %v6440 = vpop.f32.mrb[0].mxu0
    %v6441 = vadd.f32 %v6400, %v6440
    %v6442 = vpop.f32.mrb[0].mxu0
    %v6443 = vpop.f32.mrb[0].mxu0
    %6444 = vdwg.mxu0
    %6445 = vmatprep.subr.bf16.mxu0 %v4659
    %6446 = vmatpush1.bf16.msra.mxu0 %v4658
    %6447 = vmatprep.subr.bf16.mxu0 %v4667
    %6448 = vmatpush1.bf16.msra.mxu0 %v4666
    %6449 = vmatprep.subr.bf16.mxu0 %v4675
    %6450 = vmatpush1.bf16.msra.mxu0 %v4674
    %6451 = vmatprep.subr.bf16.mxu0 %v4683
    %6452 = vmatpush1.bf16.msra.mxu0 %v4682
    %6453 = vmatprep.subr.bf16.mxu0 %v4691
    %6454 = vmatpush1.bf16.msra.mxu0 %v4690
    %6455 = vmatprep.subr.bf16.mxu0 %v4699
    %6456 = vmatpush1.bf16.msra.mxu0 %v4698
    %6457 = vmatprep.subr.bf16.mxu0 %v4707
    %6458 = vmatpush1.bf16.msra.mxu0 %v4706
    %6459 = vmatprep.subr.bf16.mxu0 %v4715
    %6460 = vmatpush1.bf16.msra.mxu0 %v4714
    %6461 = vmatprep.subr.bf16.mxu0 %v4723
    %6462 = vmatpush1.bf16.msra.mxu0 %v4722
    %6463 = vmatprep.subr.bf16.mxu0 %v4731
    %6464 = vmatpush1.bf16.msra.mxu0 %v4730
    %6465 = vmatprep.subr.bf16.mxu0 %v4739
    %6466 = vmatpush1.bf16.msra.mxu0 %v4738
    %6467 = vmatprep.subr.bf16.mxu0 %v4747
    %6468 = vmatpush1.bf16.msra.mxu0 %v4746
    %6469 = vmatprep.subr.bf16.mxu0 %v4755
    %6470 = vmatpush1.bf16.msra.mxu0 %v4754
    %6471 = vmatprep.subr.bf16.mxu0 %v4763
    %6472 = vmatpush1.bf16.msra.mxu0 %v4762
    %6473 = vmatprep.subr.bf16.mxu0 %v4771
    %6474 = vmatpush1.bf16.msra.mxu0 %v4770
    %6475 = vmatprep.subr.bf16.mxu0 %v4779
    %6476 = vmatpush1.bf16.msra.mxu0 %v4778
    %6477 = vmatprep.mubr.bf16.mxu0 %v1136
    %6478 = vmatmul.mubr.bf16.gmra.mrb[0].mxu0 %v1134
    %v6479 = vpop.f32.mrb[0].mxu0
    %v6480 = vadd.f32 %v6439, %v6479
    %v6481 = vpop.f32.mrb[0].mxu0
    %v6482 = vadd.f32 %v6441, %v6481
    %v6483 = vpop.f32.mrb[0].mxu0
    %v6484 = vpop.f32.mrb[0].mxu0
    %6485 = vdwg.mxu0
    %6486 = vmatprep.subr.bf16.mxu0 %v4787
    %6487 = vmatpush1.bf16.msra.mxu0 %v4786
    %6488 = vmatprep.subr.bf16.mxu0 %v4795
    %6489 = vmatpush1.bf16.msra.mxu0 %v4794
    %6490 = vmatprep.subr.bf16.mxu0 %v4803
    %6491 = vmatpush1.bf16.msra.mxu0 %v4802
    %6492 = vmatprep.subr.bf16.mxu0 %v4811
    %6493 = vmatpush1.bf16.msra.mxu0 %v4810
    %6494 = vmatprep.subr.bf16.mxu0 %v4819
    %6495 = vmatpush1.bf16.msra.mxu0 %v4818
    %6496 = vmatprep.subr.bf16.mxu0 %v4827
    %6497 = vmatpush1.bf16.msra.mxu0 %v4826
    %6498 = vmatprep.subr.bf16.mxu0 %v4835
    %6499 = vmatpush1.bf16.msra.mxu0 %v4834
    %6500 = vmatprep.subr.bf16.mxu0 %v4843
    %6501 = vmatpush1.bf16.msra.mxu0 %v4842
    %6502 = vmatprep.subr.bf16.mxu0 %v4851
    %6503 = vmatpush1.bf16.msra.mxu0 %v4850
    %6504 = vmatprep.subr.bf16.mxu0 %v4859
    %6505 = vmatpush1.bf16.msra.mxu0 %v4858
    %6506 = vmatprep.subr.bf16.mxu0 %v4867
    %6507 = vmatpush1.bf16.msra.mxu0 %v4866
    %6508 = vmatprep.subr.bf16.mxu0 %v4875
    %6509 = vmatpush1.bf16.msra.mxu0 %v4874
    %6510 = vmatprep.subr.bf16.mxu0 %v4883
    %6511 = vmatpush1.bf16.msra.mxu0 %v4882
    %6512 = vmatprep.subr.bf16.mxu0 %v4891
    %6513 = vmatpush1.bf16.msra.mxu0 %v4890
    %6514 = vmatprep.subr.bf16.mxu0 %v4899
    %6515 = vmatpush1.bf16.msra.mxu0 %v4898
    %6516 = vmatprep.subr.bf16.mxu0 %v4907
    %6517 = vmatpush1.bf16.msra.mxu0 %v4906
    %6518 = vmatprep.mubr.bf16.mxu0 %v1174
    %6519 = vmatmul.mubr.bf16.gmra.mrb[0].mxu0 %v1160
    %v6520 = vpop.f32.mrb[0].mxu0
    %v6521 = vadd.f32 %v6480, %v6520
    %v6522 = vpop.f32.mrb[0].mxu0
    %v6523 = vadd.f32 %v6482, %v6522
    %v6524 = vpop.f32.mrb[0].mxu0
    %v6525 = vpop.f32.mrb[0].mxu0
    %6526 = vdwg.mxu0
    %6527 = vmatprep.subr.bf16.mxu0 %v4915
    %6528 = vmatpush1.bf16.msra.mxu0 %v4914
    %6529 = vmatprep.subr.bf16.mxu0 %v4923
    %6530 = vmatpush1.bf16.msra.mxu0 %v4922
    %6531 = vmatprep.subr.bf16.mxu0 %v4931
    %6532 = vmatpush1.bf16.msra.mxu0 %v4930
    %6533 = vmatprep.subr.bf16.mxu0 %v4939
    %6534 = vmatpush1.bf16.msra.mxu0 %v4938
    %6535 = vmatprep.subr.bf16.mxu0 %v4947
    %6536 = vmatpush1.bf16.msra.mxu0 %v4946
    %6537 = vmatprep.subr.bf16.mxu0 %v4955
    %6538 = vmatpush1.bf16.msra.mxu0 %v4954
    %6539 = vmatprep.subr.bf16.mxu0 %v4963
    %6540 = vmatpush1.bf16.msra.mxu0 %v4962
    %6541 = vmatprep.subr.bf16.mxu0 %v4971
    %6542 = vmatpush1.bf16.msra.mxu0 %v4970
    %6543 = vmatprep.subr.bf16.mxu0 %v4979
    %6544 = vmatpush1.bf16.msra.mxu0 %v4978
    %6545 = vmatprep.subr.bf16.mxu0 %v4987
    %6546 = vmatpush1.bf16.msra.mxu0 %v4986
    %6547 = vmatprep.subr.bf16.mxu0 %v4995
    %6548 = vmatpush1.bf16.msra.mxu0 %v4994
    %6549 = vmatprep.subr.bf16.mxu0 %v5003
    %6550 = vmatpush1.bf16.msra.mxu0 %v5002
    %6551 = vmatprep.subr.bf16.mxu0 %v5011
    %6552 = vmatpush1.bf16.msra.mxu0 %v5010
    %6553 = vmatprep.subr.bf16.mxu0 %v5019
    %6554 = vmatpush1.bf16.msra.mxu0 %v5018
    %6555 = vmatprep.subr.bf16.mxu0 %v5027
    %6556 = vmatpush1.bf16.msra.mxu0 %v5026
    %6557 = vmatprep.subr.bf16.mxu0 %v5035
    %6558 = vmatpush1.bf16.msra.mxu0 %v5034
    %6559 = vmatprep.mubr.bf16.mxu0 %v1184
    %6560 = vmatmul.mubr.bf16.gmra.mrb[0].mxu0 %v1182
    %v6561 = vpop.f32.mrb[0].mxu0
    %v6562 = vadd.f32 %v6521, %v6561
    %v6563 = vpop.f32.mrb[0].mxu0
    %v6564 = vadd.f32 %v6523, %v6563
    %v6565 = vpop.f32.mrb[0].mxu0
    %v6566 = vpop.f32.mrb[0].mxu0
    %6567 = vdwg.mxu0
    %6568 = vmatprep.subr.bf16.mxu0 %v5043
    %6569 = vmatpush1.bf16.msra.mxu0 %v5042
    %6570 = vmatprep.subr.bf16.mxu0 %v5051
    %6571 = vmatpush1.bf16.msra.mxu0 %v5050
    %6572 = vmatprep.subr.bf16.mxu0 %v5059
    %6573 = vmatpush1.bf16.msra.mxu0 %v5058
    %6574 = vmatprep.subr.bf16.mxu0 %v5067
    %6575 = vmatpush1.bf16.msra.mxu0 %v5066
    %6576 = vmatprep.subr.bf16.mxu0 %v5075
    %6577 = vmatpush1.bf16.msra.mxu0 %v5074
    %6578 = vmatprep.subr.bf16.mxu0 %v5083
    %6579 = vmatpush1.bf16.msra.mxu0 %v5082
    %6580 = vmatprep.subr.bf16.mxu0 %v5091
    %6581 = vmatpush1.bf16.msra.mxu0 %v5090
    %6582 = vmatprep.subr.bf16.mxu0 %v5099
    %6583 = vmatpush1.bf16.msra.mxu0 %v5098
    %6584 = vmatprep.subr.bf16.mxu0 %v5107
    %6585 = vmatpush1.bf16.msra.mxu0 %v5106
    %6586 = vmatprep.subr.bf16.mxu0 %v5115
    %6587 = vmatpush1.bf16.msra.mxu0 %v5114
    %6588 = vmatprep.subr.bf16.mxu0 %v5123
    %6589 = vmatpush1.bf16.msra.mxu0 %v5122
    %6590 = vmatprep.subr.bf16.mxu0 %v5131
    %6591 = vmatpush1.bf16.msra.mxu0 %v5130
    %6592 = vmatprep.subr.bf16.mxu0 %v5139
    %6593 = vmatpush1.bf16.msra.mxu0 %v5138
    %6594 = vmatprep.subr.bf16.mxu0 %v5147
    %6595 = vmatpush1.bf16.msra.mxu0 %v5146
    %6596 = vmatprep.subr.bf16.mxu0 %v5155
    %6597 = vmatpush1.bf16.msra.mxu0 %v5154
    %6598 = vmatprep.subr.bf16.mxu0 %v5163
    %6599 = vmatpush1.bf16.msra.mxu0 %v5162
    %6600 = vmatprep.mubr.bf16.mxu0 %v1181
    %6601 = vmatmul.mubr.bf16.gmra.mrb[0].mxu0 %v1167
    %v6602 = vpop.f32.mrb[0].mxu0
    %v6603 = vadd.f32 %v6562, %v6602
    %v6604 = vpop.f32.mrb[0].mxu0
    %v6605 = vadd.f32 %v6564, %v6604
    %v6606 = vpop.f32.mrb[0].mxu0
    %v6607 = vpop.f32.mrb[0].mxu0
    %6608 = vdwg.mxu0
    %6609 = vmatprep.subr.bf16.mxu0 %v5171
    %6610 = vmatpush1.bf16.msra.mxu0 %v5170
    %6611 = vmatprep.subr.bf16.mxu0 %v5179
    %6612 = vmatpush1.bf16.msra.mxu0 %v5178
    %6613 = vmatprep.subr.bf16.mxu0 %v5187
    %6614 = vmatpush1.bf16.msra.mxu0 %v5186
    %6615 = vmatprep.subr.bf16.mxu0 %v5195
    %6616 = vmatpush1.bf16.msra.mxu0 %v5194
    %6617 = vmatprep.subr.bf16.mxu0 %v5203
    %6618 = vmatpush1.bf16.msra.mxu0 %v5202
    %6619 = vmatprep.subr.bf16.mxu0 %v5211
    %6620 = vmatpush1.bf16.msra.mxu0 %v5210
    %6621 = vmatprep.subr.bf16.mxu0 %v5219
    %6622 = vmatpush1.bf16.msra.mxu0 %v5218
    %6623 = vmatprep.subr.bf16.mxu0 %v5227
    %6624 = vmatpush1.bf16.msra.mxu0 %v5226
    %6625 = vmatprep.subr.bf16.mxu0 %v5235
    %6626 = vmatpush1.bf16.msra.mxu0 %v5234
    %6627 = vmatprep.subr.bf16.mxu0 %v5243
    %6628 = vmatpush1.bf16.msra.mxu0 %v5242
    %6629 = vmatprep.subr.bf16.mxu0 %v5251
    %6630 = vmatpush1.bf16.msra.mxu0 %v5250
    %6631 = vmatprep.subr.bf16.mxu0 %v5259
    %6632 = vmatpush1.bf16.msra.mxu0 %v5258
    %6633 = vmatprep.subr.bf16.mxu0 %v5267
    %6634 = vmatpush1.bf16.msra.mxu0 %v5266
    %6635 = vmatprep.subr.bf16.mxu0 %v5275
    %6636 = vmatpush1.bf16.msra.mxu0 %v5274
    %6637 = vmatprep.subr.bf16.mxu0 %v5283
    %6638 = vmatpush1.bf16.msra.mxu0 %v5282
    %6639 = vmatprep.subr.bf16.mxu0 %v5291
    %6640 = vmatpush1.bf16.msra.mxu0 %v5290
    %6641 = vmatprep.mubr.bf16.mxu0 %v1185
    %6642 = vmatmul.mubr.bf16.gmra.mrb[0].mxu0 %v1183
    %v6643 = vpop.f32.mrb[0].mxu0
    %v6644 = vadd.f32 %v6603, %v6643
    %v6645 = vpop.f32.mrb[0].mxu0
    %v6646 = vadd.f32 %v6605, %v6645
    %v6647 = vpop.f32.mrb[0].mxu0
    %v6648 = vpop.f32.mrb[0].mxu0
    %6649 = vdwg.mxu0
    %6650 = vmatprep.subr.bf16.mxu0 %v4277
    %6651 = vmatpush1.bf16.msra.mxu0 %v4276
    %6652 = vmatprep.subr.bf16.mxu0 %v4285
    %6653 = vmatpush1.bf16.msra.mxu0 %v4284
    %6654 = vmatprep.subr.bf16.mxu0 %v4293
    %6655 = vmatpush1.bf16.msra.mxu0 %v4292
    %6656 = vmatprep.subr.bf16.mxu0 %v4301
    %6657 = vmatpush1.bf16.msra.mxu0 %v4300
    %6658 = vmatprep.subr.bf16.mxu0 %v4309
    %6659 = vmatpush1.bf16.msra.mxu0 %v4308
    %6660 = vmatprep.subr.bf16.mxu0 %v4317
    %6661 = vmatpush1.bf16.msra.mxu0 %v4316
    %6662 = vmatprep.subr.bf16.mxu0 %v4325
    %6663 = vmatpush1.bf16.msra.mxu0 %v4324
    %6664 = vmatprep.subr.bf16.mxu0 %v4333
    %6665 = vmatpush1.bf16.msra.mxu0 %v4332
    %6666 = vmatprep.subr.bf16.mxu0 %v4341
    %6667 = vmatpush1.bf16.msra.mxu0 %v4340
    %6668 = vmatprep.subr.bf16.mxu0 %v4349
    %6669 = vmatpush1.bf16.msra.mxu0 %v4348
    %6670 = vmatprep.subr.bf16.mxu0 %v4357
    %6671 = vmatpush1.bf16.msra.mxu0 %v4356
    %6672 = vmatprep.subr.bf16.mxu0 %v4365
    %6673 = vmatpush1.bf16.msra.mxu0 %v4364
    %6674 = vmatprep.subr.bf16.mxu0 %v4373
    %6675 = vmatpush1.bf16.msra.mxu0 %v4372
    %6676 = vmatprep.subr.bf16.mxu0 %v4381
    %6677 = vmatpush1.bf16.msra.mxu0 %v4380
    %6678 = vmatprep.subr.bf16.mxu0 %v4389
    %6679 = vmatpush1.bf16.msra.mxu0 %v4388
    %6680 = vmatprep.subr.bf16.mxu0 %v4397
    %6681 = vmatpush1.bf16.msra.mxu0 %v4396
    %6682 = vmatprep.mubr.bf16.mxu0 %v1125
    %6683 = vmatmul.mubr.bf16.gmra.mrb[0].mxu0 %v1111
    %v6684 = vpop.f32.mrb[0].mxu0
    %v6685 = vadd.f32 0.0, %v6684
    %v6686 = vpop.f32.mrb[0].mxu0
    %v6687 = vadd.f32 0.0, %v6686
    %v6688 = vpop.f32.mrb[0].mxu0
    %v6689 = vpop.f32.mrb[0].mxu0
    %6690 = vdwg.mxu0
    %6691 = vmatprep.subr.bf16.mxu0 %v4405
    %6692 = vmatpush1.bf16.msra.mxu0 %v4404
    %6693 = vmatprep.subr.bf16.mxu0 %v4413
    %6694 = vmatpush1.bf16.msra.mxu0 %v4412
    %6695 = vmatprep.subr.bf16.mxu0 %v4421
    %6696 = vmatpush1.bf16.msra.mxu0 %v4420
    %6697 = vmatprep.subr.bf16.mxu0 %v4429
    %6698 = vmatpush1.bf16.msra.mxu0 %v4428
    %6699 = vmatprep.subr.bf16.mxu0 %v4437
    %6700 = vmatpush1.bf16.msra.mxu0 %v4436
    %6701 = vmatprep.subr.bf16.mxu0 %v4445
    %6702 = vmatpush1.bf16.msra.mxu0 %v4444
    %6703 = vmatprep.subr.bf16.mxu0 %v4453
    %6704 = vmatpush1.bf16.msra.mxu0 %v4452
    %6705 = vmatprep.subr.bf16.mxu0 %v4461
    %6706 = vmatpush1.bf16.msra.mxu0 %v4460
    %6707 = vmatprep.subr.bf16.mxu0 %v4469
    %6708 = vmatpush1.bf16.msra.mxu0 %v4468
    %6709 = vmatprep.subr.bf16.mxu0 %v4477
    %6710 = vmatpush1.bf16.msra.mxu0 %v4476
    %6711 = vmatprep.subr.bf16.mxu0 %v4485
    %6712 = vmatpush1.bf16.msra.mxu0 %v4484
    %6713 = vmatprep.subr.bf16.mxu0 %v4493
    %6714 = vmatpush1.bf16.msra.mxu0 %v4492
    %6715 = vmatprep.subr.bf16.mxu0 %v4501
    %6716 = vmatpush1.bf16.msra.mxu0 %v4500
    %6717 = vmatprep.subr.bf16.mxu0 %v4509
    %6718 = vmatpush1.bf16.msra.mxu0 %v4508
    %6719 = vmatprep.subr.bf16.mxu0 %v4517
    %6720 = vmatpush1.bf16.msra.mxu0 %v4516
    %6721 = vmatprep.subr.bf16.mxu0 %v4525
    %6722 = vmatpush1.bf16.msra.mxu0 %v4524
    %6723 = vmatprep.mubr.bf16.mxu0 %v1135
    %6724 = vmatmul.mubr.bf16.gmra.mrb[0].mxu0 %v1133
    %v6725 = vpop.f32.mrb[0].mxu0
    %v6726 = vadd.f32 %v6685, %v6725
    %v6727 = vpop.f32.mrb[0].mxu0
    %v6728 = vadd.f32 %v6687, %v6727
    %v6729 = vpop.f32.mrb[0].mxu0
    %v6730 = vpop.f32.mrb[0].mxu0
    %6731 = vdwg.mxu0
    %6732 = vmatprep.subr.bf16.mxu0 %v4533
    %6733 = vmatpush1.bf16.msra.mxu0 %v4532
    %6734 = vmatprep.subr.bf16.mxu0 %v4541
    %6735 = vmatpush1.bf16.msra.mxu0 %v4540
    %6736 = vmatprep.subr.bf16.mxu0 %v4549
    %6737 = vmatpush1.bf16.msra.mxu0 %v4548
    %6738 = vmatprep.subr.bf16.mxu0 %v4557
    %6739 = vmatpush1.bf16.msra.mxu0 %v4556
    %6740 = vmatprep.subr.bf16.mxu0 %v4565
    %6741 = vmatpush1.bf16.msra.mxu0 %v4564
    %6742 = vmatprep.subr.bf16.mxu0 %v4573
    %6743 = vmatpush1.bf16.msra.mxu0 %v4572
    %6744 = vmatprep.subr.bf16.mxu0 %v4581
    %6745 = vmatpush1.bf16.msra.mxu0 %v4580
    %6746 = vmatprep.subr.bf16.mxu0 %v4589
    %6747 = vmatpush1.bf16.msra.mxu0 %v4588
    %6748 = vmatprep.subr.bf16.mxu0 %v4597
    %6749 = vmatpush1.bf16.msra.mxu0 %v4596
    %6750 = vmatprep.subr.bf16.mxu0 %v4605
    %6751 = vmatpush1.bf16.msra.mxu0 %v4604
    %6752 = vmatprep.subr.bf16.mxu0 %v4613
    %6753 = vmatpush1.bf16.msra.mxu0 %v4612
    %6754 = vmatprep.subr.bf16.mxu0 %v4621
    %6755 = vmatpush1.bf16.msra.mxu0 %v4620
    %6756 = vmatprep.subr.bf16.mxu0 %v4629
    %6757 = vmatpush1.bf16.msra.mxu0 %v4628
    %6758 = vmatprep.subr.bf16.mxu0 %v4637
    %6759 = vmatpush1.bf16.msra.mxu0 %v4636
    %6760 = vmatprep.subr.bf16.mxu0 %v4645
    %6761 = vmatpush1.bf16.msra.mxu0 %v4644
    %6762 = vmatprep.subr.bf16.mxu0 %v4653
    %6763 = vmatpush1.bf16.msra.mxu0 %v4652
    %6764 = vmatprep.mubr.bf16.mxu0 %v1132
    %6765 = vmatmul.mubr.bf16.gmra.mrb[0].mxu0 %v1118
    %v6766 = vpop.f32.mrb[0].mxu0
    %v6767 = vadd.f32 %v6726, %v6766
    %v6768 = vpop.f32.mrb[0].mxu0
    %v6769 = vadd.f32 %v6728, %v6768
    %v6770 = vpop.f32.mrb[0].mxu0
    %v6771 = vpop.f32.mrb[0].mxu0
    %6772 = vdwg.mxu0
    %6773 = vmatprep.subr.bf16.mxu0 %v4661
    %6774 = vmatpush1.bf16.msra.mxu0 %v4660
    %6775 = vmatprep.subr.bf16.mxu0 %v4669
    %6776 = vmatpush1.bf16.msra.mxu0 %v4668
    %6777 = vmatprep.subr.bf16.mxu0 %v4677
    %6778 = vmatpush1.bf16.msra.mxu0 %v4676
    %6779 = vmatprep.subr.bf16.mxu0 %v4685
    %6780 = vmatpush1.bf16.msra.mxu0 %v4684
    %6781 = vmatprep.subr.bf16.mxu0 %v4693
    %6782 = vmatpush1.bf16.msra.mxu0 %v4692
    %6783 = vmatprep.subr.bf16.mxu0 %v4701
    %6784 = vmatpush1.bf16.msra.mxu0 %v4700
    %6785 = vmatprep.subr.bf16.mxu0 %v4709
    %6786 = vmatpush1.bf16.msra.mxu0 %v4708
    %6787 = vmatprep.subr.bf16.mxu0 %v4717
    %6788 = vmatpush1.bf16.msra.mxu0 %v4716
    %6789 = vmatprep.subr.bf16.mxu0 %v4725
    %6790 = vmatpush1.bf16.msra.mxu0 %v4724
    %6791 = vmatprep.subr.bf16.mxu0 %v4733
    %6792 = vmatpush1.bf16.msra.mxu0 %v4732
    %6793 = vmatprep.subr.bf16.mxu0 %v4741
    %6794 = vmatpush1.bf16.msra.mxu0 %v4740
    %6795 = vmatprep.subr.bf16.mxu0 %v4749
    %6796 = vmatpush1.bf16.msra.mxu0 %v4748
    %6797 = vmatprep.subr.bf16.mxu0 %v4757
    %6798 = vmatpush1.bf16.msra.mxu0 %v4756
    %6799 = vmatprep.subr.bf16.mxu0 %v4765
    %6800 = vmatpush1.bf16.msra.mxu0 %v4764
    %6801 = vmatprep.subr.bf16.mxu0 %v4773
    %6802 = vmatpush1.bf16.msra.mxu0 %v4772
    %6803 = vmatprep.subr.bf16.mxu0 %v4781
    %6804 = vmatpush1.bf16.msra.mxu0 %v4780
    %6805 = vmatprep.mubr.bf16.mxu0 %v1136
    %6806 = vmatmul.mubr.bf16.gmra.mrb[0].mxu0 %v1134
    %v6807 = vpop.f32.mrb[0].mxu0
    %v6808 = vadd.f32 %v6767, %v6807
    %v6809 = vpop.f32.mrb[0].mxu0
    %v6810 = vadd.f32 %v6769, %v6809
    %v6811 = vpop.f32.mrb[0].mxu0
    %v6812 = vpop.f32.mrb[0].mxu0
    %6813 = vdwg.mxu0
    %6814 = vmatprep.subr.bf16.mxu0 %v4789
    %6815 = vmatpush1.bf16.msra.mxu0 %v4788
    %6816 = vmatprep.subr.bf16.mxu0 %v4797
    %6817 = vmatpush1.bf16.msra.mxu0 %v4796
    %6818 = vmatprep.subr.bf16.mxu0 %v4805
    %6819 = vmatpush1.bf16.msra.mxu0 %v4804
    %6820 = vmatprep.subr.bf16.mxu0 %v4813
    %6821 = vmatpush1.bf16.msra.mxu0 %v4812
    %6822 = vmatprep.subr.bf16.mxu0 %v4821
    %6823 = vmatpush1.bf16.msra.mxu0 %v4820
    %6824 = vmatprep.subr.bf16.mxu0 %v4829
    %6825 = vmatpush1.bf16.msra.mxu0 %v4828
    %6826 = vmatprep.subr.bf16.mxu0 %v4837
    %6827 = vmatpush1.bf16.msra.mxu0 %v4836
    %6828 = vmatprep.subr.bf16.mxu0 %v4845
    %6829 = vmatpush1.bf16.msra.mxu0 %v4844
    %6830 = vmatprep.subr.bf16.mxu0 %v4853
    %6831 = vmatpush1.bf16.msra.mxu0 %v4852
    %6832 = vmatprep.subr.bf16.mxu0 %v4861
    %6833 = vmatpush1.bf16.msra.mxu0 %v4860
    %6834 = vmatprep.subr.bf16.mxu0 %v4869
    %6835 = vmatpush1.bf16.msra.mxu0 %v4868
    %6836 = vmatprep.subr.bf16.mxu0 %v4877
    %6837 = vmatpush1.bf16.msra.mxu0 %v4876
    %6838 = vmatprep.subr.bf16.mxu0 %v4885
    %6839 = vmatpush1.bf16.msra.mxu0 %v4884
    %6840 = vmatprep.subr.bf16.mxu0 %v4893
    %6841 = vmatpush1.bf16.msra.mxu0 %v4892
    %6842 = vmatprep.subr.bf16.mxu0 %v4901
    %6843 = vmatpush1.bf16.msra.mxu0 %v4900
    %6844 = vmatprep.subr.bf16.mxu0 %v4909
    %6845 = vmatpush1.bf16.msra.mxu0 %v4908
    %6846 = vmatprep.mubr.bf16.mxu0 %v1174
    %6847 = vmatmul.mubr.bf16.gmra.mrb[0].mxu0 %v1160
    %v6848 = vpop.f32.mrb[0].mxu0
    %v6849 = vadd.f32 %v6808, %v6848
    %v6850 = vpop.f32.mrb[0].mxu0
    %v6851 = vadd.f32 %v6810, %v6850
    %v6852 = vpop.f32.mrb[0].mxu0
    %v6853 = vpop.f32.mrb[0].mxu0
    %6854 = vdwg.mxu0
    %6855 = vmatprep.subr.bf16.mxu0 %v4917
    %6856 = vmatpush1.bf16.msra.mxu0 %v4916
    %6857 = vmatprep.subr.bf16.mxu0 %v4925
    %6858 = vmatpush1.bf16.msra.mxu0 %v4924
    %6859 = vmatprep.subr.bf16.mxu0 %v4933
    %6860 = vmatpush1.bf16.msra.mxu0 %v4932
    %6861 = vmatprep.subr.bf16.mxu0 %v4941
    %6862 = vmatpush1.bf16.msra.mxu0 %v4940
    %6863 = vmatprep.subr.bf16.mxu0 %v4949
    %6864 = vmatpush1.bf16.msra.mxu0 %v4948
    %6865 = vmatprep.subr.bf16.mxu0 %v4957
    %6866 = vmatpush1.bf16.msra.mxu0 %v4956
    %6867 = vmatprep.subr.bf16.mxu0 %v4965
    %6868 = vmatpush1.bf16.msra.mxu0 %v4964
    %6869 = vmatprep.subr.bf16.mxu0 %v4973
    %6870 = vmatpush1.bf16.msra.mxu0 %v4972
    %6871 = vmatprep.subr.bf16.mxu0 %v4981
    %6872 = vmatpush1.bf16.msra.mxu0 %v4980
    %6873 = vmatprep.subr.bf16.mxu0 %v4989
    %6874 = vmatpush1.bf16.msra.mxu0 %v4988
    %6875 = vmatprep.subr.bf16.mxu0 %v4997
    %6876 = vmatpush1.bf16.msra.mxu0 %v4996
    %6877 = vmatprep.subr.bf16.mxu0 %v5005
    %6878 = vmatpush1.bf16.msra.mxu0 %v5004
    %6879 = vmatprep.subr.bf16.mxu0 %v5013
    %6880 = vmatpush1.bf16.msra.mxu0 %v5012
    %6881 = vmatprep.subr.bf16.mxu0 %v5021
    %6882 = vmatpush1.bf16.msra.mxu0 %v5020
    %6883 = vmatprep.subr.bf16.mxu0 %v5029
    %6884 = vmatpush1.bf16.msra.mxu0 %v5028
    %6885 = vmatprep.subr.bf16.mxu0 %v5037
    %6886 = vmatpush1.bf16.msra.mxu0 %v5036
    %6887 = vmatprep.mubr.bf16.mxu0 %v1184
    %6888 = vmatmul.mubr.bf16.gmra.mrb[0].mxu0 %v1182
    %v6889 = vpop.f32.mrb[0].mxu0
    %v6890 = vadd.f32 %v6849, %v6889
    %v6891 = vpop.f32.mrb[0].mxu0
    %v6892 = vadd.f32 %v6851, %v6891
    %v6893 = vpop.f32.mrb[0].mxu0
    %v6894 = vpop.f32.mrb[0].mxu0
    %6895 = vdwg.mxu0
    %6896 = vmatprep.subr.bf16.mxu0 %v5045
    %6897 = vmatpush1.bf16.msra.mxu0 %v5044
    %6898 = vmatprep.subr.bf16.mxu0 %v5053
    %6899 = vmatpush1.bf16.msra.mxu0 %v5052
    %6900 = vmatprep.subr.bf16.mxu0 %v5061
    %6901 = vmatpush1.bf16.msra.mxu0 %v5060
    %6902 = vmatprep.subr.bf16.mxu0 %v5069
    %6903 = vmatpush1.bf16.msra.mxu0 %v5068
    %6904 = vmatprep.subr.bf16.mxu0 %v5077
    %6905 = vmatpush1.bf16.msra.mxu0 %v5076
    %6906 = vmatprep.subr.bf16.mxu0 %v5085
    %6907 = vmatpush1.bf16.msra.mxu0 %v5084
    %6908 = vmatprep.subr.bf16.mxu0 %v5093
    %6909 = vmatpush1.bf16.msra.mxu0 %v5092
    %6910 = vmatprep.subr.bf16.mxu0 %v5101
    %6911 = vmatpush1.bf16.msra.mxu0 %v5100
    %6912 = vmatprep.subr.bf16.mxu0 %v5109
    %6913 = vmatpush1.bf16.msra.mxu0 %v5108
    %6914 = vmatprep.subr.bf16.mxu0 %v5117
    %6915 = vmatpush1.bf16.msra.mxu0 %v5116
    %6916 = vmatprep.subr.bf16.mxu0 %v5125
    %6917 = vmatpush1.bf16.msra.mxu0 %v5124
    %6918 = vmatprep.subr.bf16.mxu0 %v5133
    %6919 = vmatpush1.bf16.msra.mxu0 %v5132
    %6920 = vmatprep.subr.bf16.mxu0 %v5141
    %6921 = vmatpush1.bf16.msra.mxu0 %v5140
    %6922 = vmatprep.subr.bf16.mxu0 %v5149
    %6923 = vmatpush1.bf16.msra.mxu0 %v5148
    %6924 = vmatprep.subr.bf16.mxu0 %v5157
    %6925 = vmatpush1.bf16.msra.mxu0 %v5156
    %6926 = vmatprep.subr.bf16.mxu0 %v5165
    %6927 = vmatpush1.bf16.msra.mxu0 %v5164
    %6928 = vmatprep.mubr.bf16.mxu0 %v1181
    %6929 = vmatmul.mubr.bf16.gmra.mrb[0].mxu0 %v1167
    %v6930 = vpop.f32.mrb[0].mxu0
    %v6931 = vadd.f32 %v6890, %v6930
    %v6932 = vpop.f32.mrb[0].mxu0
    %v6933 = vadd.f32 %v6892, %v6932
    %v6934 = vpop.f32.mrb[0].mxu0
    %v6935 = vpop.f32.mrb[0].mxu0
    %6936 = vdwg.mxu0
    %6937 = vmatprep.subr.bf16.mxu0 %v5173
    %6938 = vmatpush1.bf16.msra.mxu0 %v5172
    %6939 = vmatprep.subr.bf16.mxu0 %v5181
    %6940 = vmatpush1.bf16.msra.mxu0 %v5180
    %6941 = vmatprep.subr.bf16.mxu0 %v5189
    %6942 = vmatpush1.bf16.msra.mxu0 %v5188
    %6943 = vmatprep.subr.bf16.mxu0 %v5197
    %6944 = vmatpush1.bf16.msra.mxu0 %v5196
    %6945 = vmatprep.subr.bf16.mxu0 %v5205
    %6946 = vmatpush1.bf16.msra.mxu0 %v5204
    %6947 = vmatprep.subr.bf16.mxu0 %v5213
    %6948 = vmatpush1.bf16.msra.mxu0 %v5212
    %6949 = vmatprep.subr.bf16.mxu0 %v5221
    %6950 = vmatpush1.bf16.msra.mxu0 %v5220
    %6951 = vmatprep.subr.bf16.mxu0 %v5229
    %6952 = vmatpush1.bf16.msra.mxu0 %v5228
    %6953 = vmatprep.subr.bf16.mxu0 %v5237
    %6954 = vmatpush1.bf16.msra.mxu0 %v5236
    %6955 = vmatprep.subr.bf16.mxu0 %v5245
    %6956 = vmatpush1.bf16.msra.mxu0 %v5244
    %6957 = vmatprep.subr.bf16.mxu0 %v5253
    %6958 = vmatpush1.bf16.msra.mxu0 %v5252
    %6959 = vmatprep.subr.bf16.mxu0 %v5261
    %6960 = vmatpush1.bf16.msra.mxu0 %v5260
    %6961 = vmatprep.subr.bf16.mxu0 %v5269
    %6962 = vmatpush1.bf16.msra.mxu0 %v5268
    %6963 = vmatprep.subr.bf16.mxu0 %v5277
    %6964 = vmatpush1.bf16.msra.mxu0 %v5276
    %6965 = vmatprep.subr.bf16.mxu0 %v5285
    %6966 = vmatpush1.bf16.msra.mxu0 %v5284
    %6967 = vmatprep.subr.bf16.mxu0 %v5293
    %6968 = vmatpush1.bf16.msra.mxu0 %v5292
    %6969 = vmatprep.mubr.bf16.mxu0 %v1185
    %6970 = vmatmul.mubr.bf16.gmra.mrb[0].mxu0 %v1183
    %v6971 = vpop.f32.mrb[0].mxu0
    %v6972 = vadd.f32 %v6931, %v6971
    %v6973 = vpop.f32.mrb[0].mxu0
    %v6974 = vadd.f32 %v6933, %v6973
    %v6975 = vpop.f32.mrb[0].mxu0
    %v6976 = vpop.f32.mrb[0].mxu0
    %6977 = vdwg.mxu0
    %6978 = vmatprep.subr.bf16.mxu0 %v4279
    %6979 = vmatpush1.bf16.msra.mxu0 %v4278
    %6980 = vmatprep.subr.bf16.mxu0 %v4287
    %6981 = vmatpush1.bf16.msra.mxu0 %v4286
    %6982 = vmatprep.subr.bf16.mxu0 %v4295
    %6983 = vmatpush1.bf16.msra.mxu0 %v4294
    %6984 = vmatprep.subr.bf16.mxu0 %v4303
    %6985 = vmatpush1.bf16.msra.mxu0 %v4302
    %6986 = vmatprep.subr.bf16.mxu0 %v4311
    %6987 = vmatpush1.bf16.msra.mxu0 %v4310
    %6988 = vmatprep.subr.bf16.mxu0 %v4319
    %6989 = vmatpush1.bf16.msra.mxu0 %v4318
    %6990 = vmatprep.subr.bf16.mxu0 %v4327
    %6991 = vmatpush1.bf16.msra.mxu0 %v4326
    %6992 = vmatprep.subr.bf16.mxu0 %v4335
    %6993 = vmatpush1.bf16.msra.mxu0 %v4334
    %6994 = vmatprep.subr.bf16.mxu0 %v4343
    %6995 = vmatpush1.bf16.msra.mxu0 %v4342
    %6996 = vmatprep.subr.bf16.mxu0 %v4351
    %6997 = vmatpush1.bf16.msra.mxu0 %v4350
    %6998 = vmatprep.subr.bf16.mxu0 %v4359
    %6999 = vmatpush1.bf16.msra.mxu0 %v4358
    %7000 = vmatprep.subr.bf16.mxu0 %v4367
    %7001 = vmatpush1.bf16.msra.mxu0 %v4366
    %7002 = vmatprep.subr.bf16.mxu0 %v4375
    %7003 = vmatpush1.bf16.msra.mxu0 %v4374
    %7004 = vmatprep.subr.bf16.mxu0 %v4383
    %7005 = vmatpush1.bf16.msra.mxu0 %v4382
    %7006 = vmatprep.subr.bf16.mxu0 %v4391
    %7007 = vmatpush1.bf16.msra.mxu0 %v4390
    %7008 = vmatprep.subr.bf16.mxu0 %v4399
    %7009 = vmatpush1.bf16.msra.mxu0 %v4398
    %7010 = vmatprep.mubr.bf16.mxu0 %v1125
    %7011 = vmatmul.mubr.bf16.gmra.mrb[0].mxu0 %v1111
    %v7012 = vpop.f32.mrb[0].mxu0
    %v7013 = vadd.f32 0.0, %v7012
    %v7014 = vpop.f32.mrb[0].mxu0
    %v7015 = vadd.f32 0.0, %v7014
    %v7016 = vpop.f32.mrb[0].mxu0
    %v7017 = vpop.f32.mrb[0].mxu0
    %7018 = vdwg.mxu0
    %7019 = vmatprep.subr.bf16.mxu0 %v4407
    %7020 = vmatpush1.bf16.msra.mxu0 %v4406
    %7021 = vmatprep.subr.bf16.mxu0 %v4415
    %7022 = vmatpush1.bf16.msra.mxu0 %v4414
    %7023 = vmatprep.subr.bf16.mxu0 %v4423
    %7024 = vmatpush1.bf16.msra.mxu0 %v4422
    %7025 = vmatprep.subr.bf16.mxu0 %v4431
    %7026 = vmatpush1.bf16.msra.mxu0 %v4430
    %7027 = vmatprep.subr.bf16.mxu0 %v4439
    %7028 = vmatpush1.bf16.msra.mxu0 %v4438
    %7029 = vmatprep.subr.bf16.mxu0 %v4447
    %7030 = vmatpush1.bf16.msra.mxu0 %v4446
    %7031 = vmatprep.subr.bf16.mxu0 %v4455
    %7032 = vmatpush1.bf16.msra.mxu0 %v4454
    %7033 = vmatprep.subr.bf16.mxu0 %v4463
    %7034 = vmatpush1.bf16.msra.mxu0 %v4462
    %7035 = vmatprep.subr.bf16.mxu0 %v4471
    %7036 = vmatpush1.bf16.msra.mxu0 %v4470
    %7037 = vmatprep.subr.bf16.mxu0 %v4479
    %7038 = vmatpush1.bf16.msra.mxu0 %v4478
    %7039 = vmatprep.subr.bf16.mxu0 %v4487
    %7040 = vmatpush1.bf16.msra.mxu0 %v4486
    %7041 = vmatprep.subr.bf16.mxu0 %v4495
    %7042 = vmatpush1.bf16.msra.mxu0 %v4494
    %7043 = vmatprep.subr.bf16.mxu0 %v4503
    %7044 = vmatpush1.bf16.msra.mxu0 %v4502
    %7045 = vmatprep.subr.bf16.mxu0 %v4511
    %7046 = vmatpush1.bf16.msra.mxu0 %v4510
    %7047 = vmatprep.subr.bf16.mxu0 %v4519
    %7048 = vmatpush1.bf16.msra.mxu0 %v4518
    %7049 = vmatprep.subr.bf16.mxu0 %v4527
    %7050 = vmatpush1.bf16.msra.mxu0 %v4526
    %7051 = vmatprep.mubr.bf16.mxu0 %v1135
    %7052 = vmatmul.mubr.bf16.gmra.mrb[0].mxu0 %v1133
    %v7053 = vpop.f32.mrb[0].mxu0
    %v7054 = vadd.f32 %v7013, %v7053
    %v7055 = vpop.f32.mrb[0].mxu0
    %v7056 = vadd.f32 %v7015, %v7055
    %v7057 = vpop.f32.mrb[0].mxu0
    %v7058 = vpop.f32.mrb[0].mxu0
    %7059 = vdwg.mxu0
    %7060 = vmatprep.subr.bf16.mxu0 %v4535
    %7061 = vmatpush1.bf16.msra.mxu0 %v4534
    %7062 = vmatprep.subr.bf16.mxu0 %v4543
    %7063 = vmatpush1.bf16.msra.mxu0 %v4542
    %7064 = vmatprep.subr.bf16.mxu0 %v4551
    %7065 = vmatpush1.bf16.msra.mxu0 %v4550
    %7066 = vmatprep.subr.bf16.mxu0 %v4559
    %7067 = vmatpush1.bf16.msra.mxu0 %v4558
    %7068 = vmatprep.subr.bf16.mxu0 %v4567
    %7069 = vmatpush1.bf16.msra.mxu0 %v4566
    %7070 = vmatprep.subr.bf16.mxu0 %v4575
    %7071 = vmatpush1.bf16.msra.mxu0 %v4574
    %7072 = vmatprep.subr.bf16.mxu0 %v4583
    %7073 = vmatpush1.bf16.msra.mxu0 %v4582
    %7074 = vmatprep.subr.bf16.mxu0 %v4591
    %7075 = vmatpush1.bf16.msra.mxu0 %v4590
    %7076 = vmatprep.subr.bf16.mxu0 %v4599
    %7077 = vmatpush1.bf16.msra.mxu0 %v4598
    %7078 = vmatprep.subr.bf16.mxu0 %v4607
    %7079 = vmatpush1.bf16.msra.mxu0 %v4606
    %7080 = vmatprep.subr.bf16.mxu0 %v4615
    %7081 = vmatpush1.bf16.msra.mxu0 %v4614
    %7082 = vmatprep.subr.bf16.mxu0 %v4623
    %7083 = vmatpush1.bf16.msra.mxu0 %v4622
    %7084 = vmatprep.subr.bf16.mxu0 %v4631
    %7085 = vmatpush1.bf16.msra.mxu0 %v4630
    %7086 = vmatprep.subr.bf16.mxu0 %v4639
    %7087 = vmatpush1.bf16.msra.mxu0 %v4638
    %7088 = vmatprep.subr.bf16.mxu0 %v4647
    %7089 = vmatpush1.bf16.msra.mxu0 %v4646
    %7090 = vmatprep.subr.bf16.mxu0 %v4655
    %7091 = vmatpush1.bf16.msra.mxu0 %v4654
    %7092 = vmatprep.mubr.bf16.mxu0 %v1132
    %7093 = vmatmul.mubr.bf16.gmra.mrb[0].mxu0 %v1118
    %v7094 = vpop.f32.mrb[0].mxu0
    %v7095 = vadd.f32 %v7054, %v7094
    %v7096 = vpop.f32.mrb[0].mxu0
    %v7097 = vadd.f32 %v7056, %v7096
    %v7098 = vpop.f32.mrb[0].mxu0
    %v7099 = vpop.f32.mrb[0].mxu0
    %7100 = vdwg.mxu0
    %7101 = vmatprep.subr.bf16.mxu0 %v4663
    %7102 = vmatpush1.bf16.msra.mxu0 %v4662
    %7103 = vmatprep.subr.bf16.mxu0 %v4671
    %7104 = vmatpush1.bf16.msra.mxu0 %v4670
    %7105 = vmatprep.subr.bf16.mxu0 %v4679
    %7106 = vmatpush1.bf16.msra.mxu0 %v4678
    %7107 = vmatprep.subr.bf16.mxu0 %v4687
    %7108 = vmatpush1.bf16.msra.mxu0 %v4686
    %7109 = vmatprep.subr.bf16.mxu0 %v4695
    %7110 = vmatpush1.bf16.msra.mxu0 %v4694
    %7111 = vmatprep.subr.bf16.mxu0 %v4703
    %7112 = vmatpush1.bf16.msra.mxu0 %v4702
    %7113 = vmatprep.subr.bf16.mxu0 %v4711
    %7114 = vmatpush1.bf16.msra.mxu0 %v4710
    %7115 = vmatprep.subr.bf16.mxu0 %v4719
    %7116 = vmatpush1.bf16.msra.mxu0 %v4718
    %7117 = vmatprep.subr.bf16.mxu0 %v4727
    %7118 = vmatpush1.bf16.msra.mxu0 %v4726
    %7119 = vmatprep.subr.bf16.mxu0 %v4735
    %7120 = vmatpush1.bf16.msra.mxu0 %v4734
    %7121 = vmatprep.subr.bf16.mxu0 %v4743
    %7122 = vmatpush1.bf16.msra.mxu0 %v4742
    %7123 = vmatprep.subr.bf16.mxu0 %v4751
    %7124 = vmatpush1.bf16.msra.mxu0 %v4750
    %7125 = vmatprep.subr.bf16.mxu0 %v4759
    %7126 = vmatpush1.bf16.msra.mxu0 %v4758
    %7127 = vmatprep.subr.bf16.mxu0 %v4767
    %7128 = vmatpush1.bf16.msra.mxu0 %v4766
    %7129 = vmatprep.subr.bf16.mxu0 %v4775
    %7130 = vmatpush1.bf16.msra.mxu0 %v4774
    %7131 = vmatprep.subr.bf16.mxu0 %v4783
    %7132 = vmatpush1.bf16.msra.mxu0 %v4782
    %7133 = vmatprep.mubr.bf16.mxu0 %v1136
    %7134 = vmatmul.mubr.bf16.gmra.mrb[0].mxu0 %v1134
    %v7135 = vpop.f32.mrb[0].mxu0
    %v7136 = vadd.f32 %v7095, %v7135
    %v7137 = vpop.f32.mrb[0].mxu0
    %v7138 = vadd.f32 %v7097, %v7137
    %v7139 = vpop.f32.mrb[0].mxu0
    %v7140 = vpop.f32.mrb[0].mxu0
    %7141 = vdwg.mxu0
    %7142 = vmatprep.subr.bf16.mxu0 %v4791
    %7143 = vmatpush1.bf16.msra.mxu0 %v4790
    %7144 = vmatprep.subr.bf16.mxu0 %v4799
    %7145 = vmatpush1.bf16.msra.mxu0 %v4798
    %7146 = vmatprep.subr.bf16.mxu0 %v4807
    %7147 = vmatpush1.bf16.msra.mxu0 %v4806
    %7148 = vmatprep.subr.bf16.mxu0 %v4815
    %7149 = vmatpush1.bf16.msra.mxu0 %v4814
    %7150 = vmatprep.subr.bf16.mxu0 %v4823
    %7151 = vmatpush1.bf16.msra.mxu0 %v4822
    %7152 = vmatprep.subr.bf16.mxu0 %v4831
    %7153 = vmatpush1.bf16.msra.mxu0 %v4830
    %7154 = vmatprep.subr.bf16.mxu0 %v4839
    %7155 = vmatpush1.bf16.msra.mxu0 %v4838
    %7156 = vmatprep.subr.bf16.mxu0 %v4847
    %7157 = vmatpush1.bf16.msra.mxu0 %v4846
    %7158 = vmatprep.subr.bf16.mxu0 %v4855
    %7159 = vmatpush1.bf16.msra.mxu0 %v4854
    %7160 = vmatprep.subr.bf16.mxu0 %v4863
    %7161 = vmatpush1.bf16.msra.mxu0 %v4862
    %7162 = vmatprep.subr.bf16.mxu0 %v4871
    %7163 = vmatpush1.bf16.msra.mxu0 %v4870
    %7164 = vmatprep.subr.bf16.mxu0 %v4879
    %7165 = vmatpush1.bf16.msra.mxu0 %v4878
    %7166 = vmatprep.subr.bf16.mxu0 %v4887
    %7167 = vmatpush1.bf16.msra.mxu0 %v4886
    %7168 = vmatprep.subr.bf16.mxu0 %v4895
    %7169 = vmatpush1.bf16.msra.mxu0 %v4894
    %7170 = vmatprep.subr.bf16.mxu0 %v4903
    %7171 = vmatpush1.bf16.msra.mxu0 %v4902
    %7172 = vmatprep.subr.bf16.mxu0 %v4911
    %7173 = vmatpush1.bf16.msra.mxu0 %v4910
    %7174 = vmatprep.mubr.bf16.mxu0 %v1174
    %7175 = vmatmul.mubr.bf16.gmra.mrb[0].mxu0 %v1160
    %v7176 = vpop.f32.mrb[0].mxu0
    %v7177 = vadd.f32 %v7136, %v7176
    %v7178 = vpop.f32.mrb[0].mxu0
    %v7179 = vadd.f32 %v7138, %v7178
    %v7180 = vpop.f32.mrb[0].mxu0
    %v7181 = vpop.f32.mrb[0].mxu0
    %7182 = vdwg.mxu0
    %7183 = vmatprep.subr.bf16.mxu0 %v4919
    %7184 = vmatpush1.bf16.msra.mxu0 %v4918
    %7185 = vmatprep.subr.bf16.mxu0 %v4927
    %7186 = vmatpush1.bf16.msra.mxu0 %v4926
    %7187 = vmatprep.subr.bf16.mxu0 %v4935
    %7188 = vmatpush1.bf16.msra.mxu0 %v4934
    %7189 = vmatprep.subr.bf16.mxu0 %v4943
    %7190 = vmatpush1.bf16.msra.mxu0 %v4942
    %7191 = vmatprep.subr.bf16.mxu0 %v4951
    %7192 = vmatpush1.bf16.msra.mxu0 %v4950
    %7193 = vmatprep.subr.bf16.mxu0 %v4959
    %7194 = vmatpush1.bf16.msra.mxu0 %v4958
    %7195 = vmatprep.subr.bf16.mxu0 %v4967
    %7196 = vmatpush1.bf16.msra.mxu0 %v4966
    %7197 = vmatprep.subr.bf16.mxu0 %v4975
    %7198 = vmatpush1.bf16.msra.mxu0 %v4974
    %7199 = vmatprep.subr.bf16.mxu0 %v4983
    %7200 = vmatpush1.bf16.msra.mxu0 %v4982
    %7201 = vmatprep.subr.bf16.mxu0 %v4991
    %7202 = vmatpush1.bf16.msra.mxu0 %v4990
    %7203 = vmatprep.subr.bf16.mxu0 %v4999
    %7204 = vmatpush1.bf16.msra.mxu0 %v4998
    %7205 = vmatprep.subr.bf16.mxu0 %v5007
    %7206 = vmatpush1.bf16.msra.mxu0 %v5006
    %7207 = vmatprep.subr.bf16.mxu0 %v5015
    %7208 = vmatpush1.bf16.msra.mxu0 %v5014
    %7209 = vmatprep.subr.bf16.mxu0 %v5023
    %7210 = vmatpush1.bf16.msra.mxu0 %v5022
    %7211 = vmatprep.subr.bf16.mxu0 %v5031
    %7212 = vmatpush1.bf16.msra.mxu0 %v5030
    %7213 = vmatprep.subr.bf16.mxu0 %v5039
    %7214 = vmatpush1.bf16.msra.mxu0 %v5038
    %7215 = vmatprep.mubr.bf16.mxu0 %v1184
    %7216 = vmatmul.mubr.bf16.gmra.mrb[0].mxu0 %v1182
    %v7217 = vpop.f32.mrb[0].mxu0
    %v7218 = vadd.f32 %v7177, %v7217
    %v7219 = vpop.f32.mrb[0].mxu0
    %v7220 = vadd.f32 %v7179, %v7219
    %v7221 = vpop.f32.mrb[0].mxu0
    %v7222 = vpop.f32.mrb[0].mxu0
    %7223 = vdwg.mxu0
    %7224 = vmatprep.subr.bf16.mxu0 %v5047
    %7225 = vmatpush1.bf16.msra.mxu0 %v5046
    %7226 = vmatprep.subr.bf16.mxu0 %v5055
    %7227 = vmatpush1.bf16.msra.mxu0 %v5054
    %7228 = vmatprep.subr.bf16.mxu0 %v5063
    %7229 = vmatpush1.bf16.msra.mxu0 %v5062
    %7230 = vmatprep.subr.bf16.mxu0 %v5071
    %7231 = vmatpush1.bf16.msra.mxu0 %v5070
    %7232 = vmatprep.subr.bf16.mxu0 %v5079
    %7233 = vmatpush1.bf16.msra.mxu0 %v5078
    %7234 = vmatprep.subr.bf16.mxu0 %v5087
    %7235 = vmatpush1.bf16.msra.mxu0 %v5086
    %7236 = vmatprep.subr.bf16.mxu0 %v5095
    %7237 = vmatpush1.bf16.msra.mxu0 %v5094
    %7238 = vmatprep.subr.bf16.mxu0 %v5103
    %7239 = vmatpush1.bf16.msra.mxu0 %v5102
    %7240 = vmatprep.subr.bf16.mxu0 %v5111
    %7241 = vmatpush1.bf16.msra.mxu0 %v5110
    %7242 = vmatprep.subr.bf16.mxu0 %v5119
    %7243 = vmatpush1.bf16.msra.mxu0 %v5118
    %7244 = vmatprep.subr.bf16.mxu0 %v5127
    %7245 = vmatpush1.bf16.msra.mxu0 %v5126
    %7246 = vmatprep.subr.bf16.mxu0 %v5135
    %7247 = vmatpush1.bf16.msra.mxu0 %v5134
    %7248 = vmatprep.subr.bf16.mxu0 %v5143
    %7249 = vmatpush1.bf16.msra.mxu0 %v5142
    %7250 = vmatprep.subr.bf16.mxu0 %v5151
    %7251 = vmatpush1.bf16.msra.mxu0 %v5150
    %7252 = vmatprep.subr.bf16.mxu0 %v5159
    %7253 = vmatpush1.bf16.msra.mxu0 %v5158
    %7254 = vmatprep.subr.bf16.mxu0 %v5167
    %7255 = vmatpush1.bf16.msra.mxu0 %v5166
    %7256 = vmatprep.mubr.bf16.mxu0 %v1181
    %7257 = vmatmul.mubr.bf16.gmra.mrb[0].mxu0 %v1167
    %v7258 = vpop.f32.mrb[0].mxu0
    %v7259 = vadd.f32 %v7218, %v7258
    %v7260 = vpop.f32.mrb[0].mxu0
    %v7261 = vadd.f32 %v7220, %v7260
    %v7262 = vpop.f32.mrb[0].mxu0
    %v7263 = vpop.f32.mrb[0].mxu0
    %7264 = vdwg.mxu0
    %7265 = vmatprep.subr.bf16.mxu0 %v5175
    %7266 = vmatpush1.bf16.msra.mxu0 %v5174
    %7267 = vmatprep.subr.bf16.mxu0 %v5183
    %7268 = vmatpush1.bf16.msra.mxu0 %v5182
    %7269 = vmatprep.subr.bf16.mxu0 %v5191
    %7270 = vmatpush1.bf16.msra.mxu0 %v5190
    %7271 = vmatprep.subr.bf16.mxu0 %v5199
    %7272 = vmatpush1.bf16.msra.mxu0 %v5198
    %7273 = vmatprep.subr.bf16.mxu0 %v5207
    %7274 = vmatpush1.bf16.msra.mxu0 %v5206
    %7275 = vmatprep.subr.bf16.mxu0 %v5215
    %7276 = vmatpush1.bf16.msra.mxu0 %v5214
    %7277 = vmatprep.subr.bf16.mxu0 %v5223
    %7278 = vmatpush1.bf16.msra.mxu0 %v5222
    %7279 = vmatprep.subr.bf16.mxu0 %v5231
    %7280 = vmatpush1.bf16.msra.mxu0 %v5230
    %7281 = vmatprep.subr.bf16.mxu0 %v5239
    %7282 = vmatpush1.bf16.msra.mxu0 %v5238
    %7283 = vmatprep.subr.bf16.mxu0 %v5247
    %7284 = vmatpush1.bf16.msra.mxu0 %v5246
    %7285 = vmatprep.subr.bf16.mxu0 %v5255
    %7286 = vmatpush1.bf16.msra.mxu0 %v5254
    %7287 = vmatprep.subr.bf16.mxu0 %v5263
    %7288 = vmatpush1.bf16.msra.mxu0 %v5262
    %7289 = vmatprep.subr.bf16.mxu0 %v5271
    %7290 = vmatpush1.bf16.msra.mxu0 %v5270
    %7291 = vmatprep.subr.bf16.mxu0 %v5279
    %7292 = vmatpush1.bf16.msra.mxu0 %v5278
    %7293 = vmatprep.subr.bf16.mxu0 %v5287
    %7294 = vmatpush1.bf16.msra.mxu0 %v5286
    %7295 = vmatprep.subr.bf16.mxu0 %v5295
    %7296 = vmatpush1.bf16.msra.mxu0 %v5294
    %7297 = vmatprep.mubr.bf16.mxu0 %v1185
    %7298 = vmatmul.mubr.bf16.gmra.mrb[0].mxu0 %v1183
    %v7299 = vpop.f32.mrb[0].mxu0
    %v7300 = vadd.f32 %v7259, %v7299
    %v7301 = vpop.f32.mrb[0].mxu0
    %v7302 = vadd.f32 %v7261, %v7301
    %v7303 = vpop.f32.mrb[0].mxu0
    %v7304 = vpop.f32.mrb[0].mxu0
    %7305 = vdwg.mxu0
    %7306 = vmatprep.subr.bf16.mxu0 %v4281
    %7307 = vmatpush1.bf16.msra.mxu0 %v4280
    %7308 = vmatprep.subr.bf16.mxu0 %v4289
    %7309 = vmatpush1.bf16.msra.mxu0 %v4288
    %7310 = vmatprep.subr.bf16.mxu0 %v4297
    %7311 = vmatpush1.bf16.msra.mxu0 %v4296
    %7312 = vmatprep.subr.bf16.mxu0 %v4305
    %7313 = vmatpush1.bf16.msra.mxu0 %v4304
    %7314 = vmatprep.subr.bf16.mxu0 %v4313
    %7315 = vmatpush1.bf16.msra.mxu0 %v4312
    %7316 = vmatprep.subr.bf16.mxu0 %v4321
    %7317 = vmatpush1.bf16.msra.mxu0 %v4320
    %7318 = vmatprep.subr.bf16.mxu0 %v4329
    %7319 = vmatpush1.bf16.msra.mxu0 %v4328
    %7320 = vmatprep.subr.bf16.mxu0 %v4337
    %7321 = vmatpush1.bf16.msra.mxu0 %v4336
    %7322 = vmatprep.subr.bf16.mxu0 %v4345
    %7323 = vmatpush1.bf16.msra.mxu0 %v4344
    %7324 = vmatprep.subr.bf16.mxu0 %v4353
    %7325 = vmatpush1.bf16.msra.mxu0 %v4352
    %7326 = vmatprep.subr.bf16.mxu0 %v4361
    %7327 = vmatpush1.bf16.msra.mxu0 %v4360
    %7328 = vmatprep.subr.bf16.mxu0 %v4369
    %7329 = vmatpush1.bf16.msra.mxu0 %v4368
    %7330 = vmatprep.subr.bf16.mxu0 %v4377
    %7331 = vmatpush1.bf16.msra.mxu0 %v4376
    %7332 = vmatprep.subr.bf16.mxu0 %v4385
    %7333 = vmatpush1.bf16.msra.mxu0 %v4384
    %7334 = vmatprep.subr.bf16.mxu0 %v4393
    %7335 = vmatpush1.bf16.msra.mxu0 %v4392
    %7336 = vmatprep.subr.bf16.mxu0 %v4401
    %7337 = vmatpush1.bf16.msra.mxu0 %v4400
    %7338 = vmatprep.mubr.bf16.mxu0 %v1125
    %7339 = vmatmul.mubr.bf16.gmra.mrb[0].mxu0 %v1111
    %v7340 = vpop.f32.mrb[0].mxu0
    %v7341 = vadd.f32 0.0, %v7340
    %v7342 = vpop.f32.mrb[0].mxu0
    %v7343 = vadd.f32 0.0, %v7342
    %v7344 = vpop.f32.mrb[0].mxu0
    %v7345 = vpop.f32.mrb[0].mxu0
    %7346 = vdwg.mxu0
    %7347 = vmatprep.subr.bf16.mxu0 %v4409
    %7348 = vmatpush1.bf16.msra.mxu0 %v4408
    %7349 = vmatprep.subr.bf16.mxu0 %v4417
    %7350 = vmatpush1.bf16.msra.mxu0 %v4416
    %7351 = vmatprep.subr.bf16.mxu0 %v4425
    %7352 = vmatpush1.bf16.msra.mxu0 %v4424
    %7353 = vmatprep.subr.bf16.mxu0 %v4433
    %7354 = vmatpush1.bf16.msra.mxu0 %v4432
    %7355 = vmatprep.subr.bf16.mxu0 %v4441
    %7356 = vmatpush1.bf16.msra.mxu0 %v4440
    %7357 = vmatprep.subr.bf16.mxu0 %v4449
    %7358 = vmatpush1.bf16.msra.mxu0 %v4448
    %7359 = vmatprep.subr.bf16.mxu0 %v4457
    %7360 = vmatpush1.bf16.msra.mxu0 %v4456
    %7361 = vmatprep.subr.bf16.mxu0 %v4465
    %7362 = vmatpush1.bf16.msra.mxu0 %v4464
    %7363 = vmatprep.subr.bf16.mxu0 %v4473
    %7364 = vmatpush1.bf16.msra.mxu0 %v4472
    %7365 = vmatprep.subr.bf16.mxu0 %v4481
    %7366 = vmatpush1.bf16.msra.mxu0 %v4480
    %7367 = vmatprep.subr.bf16.mxu0 %v4489
    %7368 = vmatpush1.bf16.msra.mxu0 %v4488
    %7369 = vmatprep.subr.bf16.mxu0 %v4497
    %7370 = vmatpush1.bf16.msra.mxu0 %v4496
    %7371 = vmatprep.subr.bf16.mxu0 %v4505
    %7372 = vmatpush1.bf16.msra.mxu0 %v4504
    %7373 = vmatprep.subr.bf16.mxu0 %v4513
    %7374 = vmatpush1.bf16.msra.mxu0 %v4512
    %7375 = vmatprep.subr.bf16.mxu0 %v4521
    %7376 = vmatpush1.bf16.msra.mxu0 %v4520
    %7377 = vmatprep.subr.bf16.mxu0 %v4529
    %7378 = vmatpush1.bf16.msra.mxu0 %v4528
    %7379 = vmatprep.mubr.bf16.mxu0 %v1135
    %7380 = vmatmul.mubr.bf16.gmra.mrb[0].mxu0 %v1133
    %v7381 = vpop.f32.mrb[0].mxu0
    %v7382 = vadd.f32 %v7341, %v7381
    %v7383 = vpop.f32.mrb[0].mxu0
    %v7384 = vadd.f32 %v7343, %v7383
    %v7385 = vpop.f32.mrb[0].mxu0
    %v7386 = vpop.f32.mrb[0].mxu0
    %7387 = vdwg.mxu0
    %7388 = vmatprep.subr.bf16.mxu0 %v4537
    %7389 = vmatpush1.bf16.msra.mxu0 %v4536
    %7390 = vmatprep.subr.bf16.mxu0 %v4545
    %7391 = vmatpush1.bf16.msra.mxu0 %v4544
    %7392 = vmatprep.subr.bf16.mxu0 %v4553
    %7393 = vmatpush1.bf16.msra.mxu0 %v4552
    %7394 = vmatprep.subr.bf16.mxu0 %v4561
    %7395 = vmatpush1.bf16.msra.mxu0 %v4560
    %7396 = vmatprep.subr.bf16.mxu0 %v4569
    %7397 = vmatpush1.bf16.msra.mxu0 %v4568
    %7398 = vmatprep.subr.bf16.mxu0 %v4577
    %7399 = vmatpush1.bf16.msra.mxu0 %v4576
    %7400 = vmatprep.subr.bf16.mxu0 %v4585
    %7401 = vmatpush1.bf16.msra.mxu0 %v4584
    %7402 = vmatprep.subr.bf16.mxu0 %v4593
    %7403 = vmatpush1.bf16.msra.mxu0 %v4592
    %7404 = vmatprep.subr.bf16.mxu0 %v4601
    %7405 = vmatpush1.bf16.msra.mxu0 %v4600
    %7406 = vmatprep.subr.bf16.mxu0 %v4609
    %7407 = vmatpush1.bf16.msra.mxu0 %v4608
    %7408 = vmatprep.subr.bf16.mxu0 %v4617
    %7409 = vmatpush1.bf16.msra.mxu0 %v4616
    %7410 = vmatprep.subr.bf16.mxu0 %v4625
    %7411 = vmatpush1.bf16.msra.mxu0 %v4624
    %7412 = vmatprep.subr.bf16.mxu0 %v4633
    %7413 = vmatpush1.bf16.msra.mxu0 %v4632
    %7414 = vmatprep.subr.bf16.mxu0 %v4641
    %7415 = vmatpush1.bf16.msra.mxu0 %v4640
    %7416 = vmatprep.subr.bf16.mxu0 %v4649
    %7417 = vmatpush1.bf16.msra.mxu0 %v4648
    %7418 = vmatprep.subr.bf16.mxu0 %v4657
    %7419 = vmatpush1.bf16.msra.mxu0 %v4656
    %7420 = vmatprep.mubr.bf16.mxu0 %v1132
    %7421 = vmatmul.mubr.bf16.gmra.mrb[0].mxu0 %v1118
    %v7422 = vpop.f32.mrb[0].mxu0
    %v7423 = vadd.f32 %v7382, %v7422
    %v7424 = vpop.f32.mrb[0].mxu0
    %v7425 = vadd.f32 %v7384, %v7424
    %v7426 = vpop.f32.mrb[0].mxu0
    %v7427 = vpop.f32.mrb[0].mxu0
    %7428 = vdwg.mxu0
    %7429 = vmatprep.subr.bf16.mxu0 %v4665
    %7430 = vmatpush1.bf16.msra.mxu0 %v4664
    %7431 = vmatprep.subr.bf16.mxu0 %v4673
    %7432 = vmatpush1.bf16.msra.mxu0 %v4672
    %7433 = vmatprep.subr.bf16.mxu0 %v4681
    %7434 = vmatpush1.bf16.msra.mxu0 %v4680
    %7435 = vmatprep.subr.bf16.mxu0 %v4689
    %7436 = vmatpush1.bf16.msra.mxu0 %v4688
    %7437 = vmatprep.subr.bf16.mxu0 %v4697
    %7438 = vmatpush1.bf16.msra.mxu0 %v4696
    %7439 = vmatprep.subr.bf16.mxu0 %v4705
    %7440 = vmatpush1.bf16.msra.mxu0 %v4704
    %7441 = vmatprep.subr.bf16.mxu0 %v4713
    %7442 = vmatpush1.bf16.msra.mxu0 %v4712
    %7443 = vmatprep.subr.bf16.mxu0 %v4721
    %7444 = vmatpush1.bf16.msra.mxu0 %v4720
    %7445 = vmatprep.subr.bf16.mxu0 %v4729
    %7446 = vmatpush1.bf16.msra.mxu0 %v4728
    %7447 = vmatprep.subr.bf16.mxu0 %v4737
    %7448 = vmatpush1.bf16.msra.mxu0 %v4736
    %7449 = vmatprep.subr.bf16.mxu0 %v4745
    %7450 = vmatpush1.bf16.msra.mxu0 %v4744
    %7451 = vmatprep.subr.bf16.mxu0 %v4753
    %7452 = vmatpush1.bf16.msra.mxu0 %v4752
    %7453 = vmatprep.subr.bf16.mxu0 %v4761
    %7454 = vmatpush1.bf16.msra.mxu0 %v4760
    %7455 = vmatprep.subr.bf16.mxu0 %v4769
    %7456 = vmatpush1.bf16.msra.mxu0 %v4768
    %7457 = vmatprep.subr.bf16.mxu0 %v4777
    %7458 = vmatpush1.bf16.msra.mxu0 %v4776
    %7459 = vmatprep.subr.bf16.mxu0 %v4785
    %7460 = vmatpush1.bf16.msra.mxu0 %v4784
    %7461 = vmatprep.mubr.bf16.mxu0 %v1136
    %7462 = vmatmul.mubr.bf16.gmra.mrb[0].mxu0 %v1134
    %v7463 = vpop.f32.mrb[0].mxu0
    %v7464 = vadd.f32 %v7423, %v7463
    %v7465 = vpop.f32.mrb[0].mxu0
    %v7466 = vadd.f32 %v7425, %v7465
    %v7467 = vpop.f32.mrb[0].mxu0
    %v7468 = vpop.f32.mrb[0].mxu0
    %7469 = vdwg.mxu0
    %7470 = vmatprep.subr.bf16.mxu0 %v4793
    %7471 = vmatpush1.bf16.msra.mxu0 %v4792
    %7472 = vmatprep.subr.bf16.mxu0 %v4801
    %7473 = vmatpush1.bf16.msra.mxu0 %v4800
    %7474 = vmatprep.subr.bf16.mxu0 %v4809
    %7475 = vmatpush1.bf16.msra.mxu0 %v4808
    %7476 = vmatprep.subr.bf16.mxu0 %v4817
    %7477 = vmatpush1.bf16.msra.mxu0 %v4816
    %7478 = vmatprep.subr.bf16.mxu0 %v4825
    %7479 = vmatpush1.bf16.msra.mxu0 %v4824
    %7480 = vmatprep.subr.bf16.mxu0 %v4833
    %7481 = vmatpush1.bf16.msra.mxu0 %v4832
    %7482 = vmatprep.subr.bf16.mxu0 %v4841
    %7483 = vmatpush1.bf16.msra.mxu0 %v4840
    %7484 = vmatprep.subr.bf16.mxu0 %v4849
    %7485 = vmatpush1.bf16.msra.mxu0 %v4848
    %7486 = vmatprep.subr.bf16.mxu0 %v4857
    %7487 = vmatpush1.bf16.msra.mxu0 %v4856
    %7488 = vmatprep.subr.bf16.mxu0 %v4865
    %7489 = vmatpush1.bf16.msra.mxu0 %v4864
    %7490 = vmatprep.subr.bf16.mxu0 %v4873
    %7491 = vmatpush1.bf16.msra.mxu0 %v4872
    %7492 = vmatprep.subr.bf16.mxu0 %v4881
    %7493 = vmatpush1.bf16.msra.mxu0 %v4880
    %7494 = vmatprep.subr.bf16.mxu0 %v4889
    %7495 = vmatpush1.bf16.msra.mxu0 %v4888
    %7496 = vmatprep.subr.bf16.mxu0 %v4897
    %7497 = vmatpush1.bf16.msra.mxu0 %v4896
    %7498 = vmatprep.subr.bf16.mxu0 %v4905
    %7499 = vmatpush1.bf16.msra.mxu0 %v4904
    %7500 = vmatprep.subr.bf16.mxu0 %v4913
    %7501 = vmatpush1.bf16.msra.mxu0 %v4912
    %7502 = vmatprep.mubr.bf16.mxu0 %v1174
    %7503 = vmatmul.mubr.bf16.gmra.mrb[0].mxu0 %v1160
    %v7504 = vpop.f32.mrb[0].mxu0
    %v7505 = vadd.f32 %v7464, %v7504
    %v7506 = vpop.f32.mrb[0].mxu0
    %v7507 = vadd.f32 %v7466, %v7506
    %v7508 = vpop.f32.mrb[0].mxu0
    %v7509 = vpop.f32.mrb[0].mxu0
    %7510 = vdwg.mxu0
    %7511 = vmatprep.subr.bf16.mxu0 %v4921
    %7512 = vmatpush1.bf16.msra.mxu0 %v4920
    %7513 = vmatprep.subr.bf16.mxu0 %v4929
    %7514 = vmatpush1.bf16.msra.mxu0 %v4928
    %7515 = vmatprep.subr.bf16.mxu0 %v4937
    %7516 = vmatpush1.bf16.msra.mxu0 %v4936
    %7517 = vmatprep.subr.bf16.mxu0 %v4945
    %7518 = vmatpush1.bf16.msra.mxu0 %v4944
    %7519 = vmatprep.subr.bf16.mxu0 %v4953
    %7520 = vmatpush1.bf16.msra.mxu0 %v4952
    %7521 = vmatprep.subr.bf16.mxu0 %v4961
    %7522 = vmatpush1.bf16.msra.mxu0 %v4960
    %7523 = vmatprep.subr.bf16.mxu0 %v4969
    %7524 = vmatpush1.bf16.msra.mxu0 %v4968
    %7525 = vmatprep.subr.bf16.mxu0 %v4977
    %7526 = vmatpush1.bf16.msra.mxu0 %v4976
    %7527 = vmatprep.subr.bf16.mxu0 %v4985
    %7528 = vmatpush1.bf16.msra.mxu0 %v4984
    %7529 = vmatprep.subr.bf16.mxu0 %v4993
    %7530 = vmatpush1.bf16.msra.mxu0 %v4992
    %7531 = vmatprep.subr.bf16.mxu0 %v5001
    %7532 = vmatpush1.bf16.msra.mxu0 %v5000
    %7533 = vmatprep.subr.bf16.mxu0 %v5009
    %7534 = vmatpush1.bf16.msra.mxu0 %v5008
    %7535 = vmatprep.subr.bf16.mxu0 %v5017
    %7536 = vmatpush1.bf16.msra.mxu0 %v5016
    %7537 = vmatprep.subr.bf16.mxu0 %v5025
    %7538 = vmatpush1.bf16.msra.mxu0 %v5024
    %7539 = vmatprep.subr.bf16.mxu0 %v5033
    %7540 = vmatpush1.bf16.msra.mxu0 %v5032
    %7541 = vmatprep.subr.bf16.mxu0 %v5041
    %7542 = vmatpush1.bf16.msra.mxu0 %v5040
    %7543 = vmatprep.mubr.bf16.mxu0 %v1184
    %7544 = vmatmul.mubr.bf16.gmra.mrb[0].mxu0 %v1182
    %v7545 = vpop.f32.mrb[0].mxu0
    %v7546 = vadd.f32 %v7505, %v7545
    %v7547 = vpop.f32.mrb[0].mxu0
    %v7548 = vadd.f32 %v7507, %v7547
    %v7549 = vpop.f32.mrb[0].mxu0
    %v7550 = vpop.f32.mrb[0].mxu0
    %7551 = vdwg.mxu0
    %7552 = vmatprep.subr.bf16.mxu0 %v5049
    %7553 = vmatpush1.bf16.msra.mxu0 %v5048
    %7554 = vmatprep.subr.bf16.mxu0 %v5057
    %7555 = vmatpush1.bf16.msra.mxu0 %v5056
    %7556 = vmatprep.subr.bf16.mxu0 %v5065
    %7557 = vmatpush1.bf16.msra.mxu0 %v5064
    %7558 = vmatprep.subr.bf16.mxu0 %v5073
    %7559 = vmatpush1.bf16.msra.mxu0 %v5072
    %7560 = vmatprep.subr.bf16.mxu0 %v5081
    %7561 = vmatpush1.bf16.msra.mxu0 %v5080
    %7562 = vmatprep.subr.bf16.mxu0 %v5089
    %7563 = vmatpush1.bf16.msra.mxu0 %v5088
    %7564 = vmatprep.subr.bf16.mxu0 %v5097
    %7565 = vmatpush1.bf16.msra.mxu0 %v5096
    %7566 = vmatprep.subr.bf16.mxu0 %v5105
    %7567 = vmatpush1.bf16.msra.mxu0 %v5104
    %7568 = vmatprep.subr.bf16.mxu0 %v5113
    %7569 = vmatpush1.bf16.msra.mxu0 %v5112
    %7570 = vmatprep.subr.bf16.mxu0 %v5121
    %7571 = vmatpush1.bf16.msra.mxu0 %v5120
    %7572 = vmatprep.subr.bf16.mxu0 %v5129
    %7573 = vmatpush1.bf16.msra.mxu0 %v5128
    %7574 = vmatprep.subr.bf16.mxu0 %v5137
    %7575 = vmatpush1.bf16.msra.mxu0 %v5136
    %7576 = vmatprep.subr.bf16.mxu0 %v5145
    %7577 = vmatpush1.bf16.msra.mxu0 %v5144
    %7578 = vmatprep.subr.bf16.mxu0 %v5153
    %7579 = vmatpush1.bf16.msra.mxu0 %v5152
    %7580 = vmatprep.subr.bf16.mxu0 %v5161
    %7581 = vmatpush1.bf16.msra.mxu0 %v5160
    %7582 = vmatprep.subr.bf16.mxu0 %v5169
    %7583 = vmatpush1.bf16.msra.mxu0 %v5168
    %7584 = vmatprep.mubr.bf16.mxu0 %v1181
    %7585 = vmatmul.mubr.bf16.gmra.mrb[0].mxu0 %v1167
    %v7586 = vpop.f32.mrb[0].mxu0
    %v7587 = vadd.f32 %v7546, %v7586
    %v7588 = vpop.f32.mrb[0].mxu0
    %v7589 = vadd.f32 %v7548, %v7588
    %v7590 = vpop.f32.mrb[0].mxu0
    %v7591 = vpop.f32.mrb[0].mxu0
    %7592 = vdwg.mxu0
    %7593 = vmatprep.subr.bf16.mxu0 %v5177
    %7594 = vmatpush1.bf16.msra.mxu0 %v5176
    %7595 = vmatprep.subr.bf16.mxu0 %v5185
    %7596 = vmatpush1.bf16.msra.mxu0 %v5184
    %7597 = vmatprep.subr.bf16.mxu0 %v5193
    %7598 = vmatpush1.bf16.msra.mxu0 %v5192
    %7599 = vmatprep.subr.bf16.mxu0 %v5201
    %7600 = vmatpush1.bf16.msra.mxu0 %v5200
    %7601 = vmatprep.subr.bf16.mxu0 %v5209
    %7602 = vmatpush1.bf16.msra.mxu0 %v5208
    %7603 = vmatprep.subr.bf16.mxu0 %v5217
    %7604 = vmatpush1.bf16.msra.mxu0 %v5216
    %7605 = vmatprep.subr.bf16.mxu0 %v5225
    %7606 = vmatpush1.bf16.msra.mxu0 %v5224
    %7607 = vmatprep.subr.bf16.mxu0 %v5233
    %7608 = vmatpush1.bf16.msra.mxu0 %v5232
    %7609 = vmatprep.subr.bf16.mxu0 %v5241
    %7610 = vmatpush1.bf16.msra.mxu0 %v5240
    %7611 = vmatprep.subr.bf16.mxu0 %v5249
    %7612 = vmatpush1.bf16.msra.mxu0 %v5248
    %7613 = vmatprep.subr.bf16.mxu0 %v5257
    %7614 = vmatpush1.bf16.msra.mxu0 %v5256
    %7615 = vmatprep.subr.bf16.mxu0 %v5265
    %7616 = vmatpush1.bf16.msra.mxu0 %v5264
    %7617 = vmatprep.subr.bf16.mxu0 %v5273
    %7618 = vmatpush1.bf16.msra.mxu0 %v5272
    %7619 = vmatprep.subr.bf16.mxu0 %v5281
    %7620 = vmatpush1.bf16.msra.mxu0 %v5280
    %7621 = vmatprep.subr.bf16.mxu0 %v5289
    %7622 = vmatpush1.bf16.msra.mxu0 %v5288
    %7623 = vmatprep.subr.bf16.mxu0 %v5297
    %7624 = vmatpush1.bf16.msra.mxu0 %v5296
    %7625 = vmatprep.mubr.bf16.mxu0 %v1185
    %7626 = vmatmul.mubr.bf16.gmra.mrb[0].mxu0 %v1183
    %v7627 = vpop.f32.mrb[0].mxu0
    %v7628 = vadd.f32 %v7587, %v7627
    %v7629 = vpop.f32.mrb[0].mxu0
    %v7630 = vadd.f32 %v7589, %v7629
    %v7631 = vpop.f32.mrb[0].mxu0
    %v7632 = vpop.f32.mrb[0].mxu0
    %7633 = vdwg.mxu0
    %v7642 = vcombine.low %v6644, %v6646
    %v7643 = vcombine.low %v6972, %v6974
    %v7645 = vunpack.c.l.s4 1983009808
    %v7646 = vunpack.c.0.s8 %v7645
    %v7647 = vlaneseq
    %v7648 = vshrl.u32 %v7647, 7
    %v7649 = vsub.s32 %v7646, %v7648
    %v7650 = vrot.slane %v7642, %v7649
    %v7652 = vunpack.c.l.s4 1983009808
    %v7653 = vunpack.c.0.s8 %v7652
    %v7654 = vlaneseq
    %v7655 = vshrl.u32 %v7654, 7
    %v7656 = vsub.s32 %v7653, %v7655
    %v7657 = vrot.slane %v7643, %v7656
    %v7658 = vcombine.low %v7650, %v7657
    %v7659 = vcombine.low %v7300, %v7302
    %v7660 = vcombine.low %v7628, %v7630
    %v7662 = vunpack.c.l.s4 1983009808
    %v7663 = vunpack.c.0.s8 %v7662
    %v7664 = vlaneseq
    %v7665 = vshrl.u32 %v7664, 7
    %v7666 = vsub.s32 %v7663, %v7665
    %v7667 = vrot.slane %v7659, %v7666
    %v7669 = vunpack.c.l.s4 1983009808
    %v7670 = vunpack.c.0.s8 %v7669
    %v7671 = vlaneseq
    %v7672 = vshrl.u32 %v7671, 7
    %v7673 = vsub.s32 %v7670, %v7672
    %v7674 = vrot.slane %v7660, %v7673
    %v7675 = vcombine.low %v7667, %v7674
    %v7678 = vadd.f32 %v58, %v7658
    %v7679 = vadd.f32 %v59, %v7675
    %7680 = vst [vmem:[#allocation2] sm:$0xff] %v7678
    %7681 = vst [vmem:[#allocation2 + $0x8] sm:$0xff] %v7679
    // Predicated region
    $region30: #{tpu_custom_call.1} parent=1 // pred_check
      %p7682 = pneg %p52
    $region31: #{tpu_custom_call.1} parent=1 // pred_check_branch
      %7684 = sbr.rel (%p7682) target = $region33
    $region32: #{tpu_custom_call.1} parent=1 // pred_region
      %v7685 = vld [vmem:[#allocation2] sm:$0xff]
      %v7686 = vld [vmem:[#allocation2 + $0x8] sm:$0xff]
      %v7687 = vld [vmem:[#allocation8] sm:$0xff]
      %v7689 = vlaneseq
      %v7690 = vshrl.u32 %v7689, 7
      %v7691 = vsub.s32 0, %v7690
      %v7692 = vrot.slane %v7687, %v7691
      %v7693 = vlaneseq
      %v7694 = vshrl.u32 %v7693, 7
      %v7695 = vsub.s32 1, %v7694
      %v7696 = vrot.slane %v7687, %v7695
      %v7697 = vlaneseq
      %v7698 = vshrl.u32 %v7697, 7
      %v7699 = vsub.s32 2, %v7698
      %v7700 = vrot.slane %v7687, %v7699
      %v7701 = vlaneseq
      %v7702 = vshrl.u32 %v7701, 7
      %v7703 = vsub.s32 3, %v7702
      %v7704 = vrot.slane %v7687, %v7703
      %v7705 = vlaneseq
      %v7706 = vshrl.u32 %v7705, 7
      %v7707 = vsub.s32 4, %v7706
      %v7708 = vrot.slane %v7687, %v7707
      %v7709 = vlaneseq
      %v7710 = vshrl.u32 %v7709, 7
      %v7711 = vsub.s32 5, %v7710
      %v7712 = vrot.slane %v7687, %v7711
      %v7713 = vlaneseq
      %v7714 = vshrl.u32 %v7713, 7
      %v7715 = vsub.s32 6, %v7714
      %v7716 = vrot.slane %v7687, %v7715
      %v7717 = vlaneseq
      %v7718 = vshrl.u32 %v7717, 7
      %v7719 = vsub.s32 7, %v7718
      %v7720 = vrot.slane %v7687, %v7719
      %v7721 = vcombine.low %v7692, %v7696
      %v7722 = vcombine.low %v7700, %v7704
      %v7724 = vunpack.c.l.s4 1983009808
      %v7725 = vunpack.c.0.s8 %v7724
      %v7726 = vlaneseq
      %v7727 = vshrl.u32 %v7726, 7
      %v7728 = vsub.s32 %v7725, %v7727
      %v7729 = vrot.slane %v7721, %v7728
      %v7731 = vunpack.c.l.s4 1983009808
      %v7732 = vunpack.c.0.s8 %v7731
      %v7733 = vlaneseq
      %v7734 = vshrl.u32 %v7733, 7
      %v7735 = vsub.s32 %v7732, %v7734
      %v7736 = vrot.slane %v7722, %v7735
      %v7737 = vcombine.low %v7729, %v7736
      %v7738 = vcombine.low %v7708, %v7712
      %v7739 = vcombine.low %v7716, %v7720
      %v7741 = vunpack.c.l.s4 1983009808
      %v7742 = vunpack.c.0.s8 %v7741
      %v7743 = vlaneseq
      %v7744 = vshrl.u32 %v7743, 7
      %v7745 = vsub.s32 %v7742, %v7744
      %v7746 = vrot.slane %v7738, %v7745
      %v7748 = vunpack.c.l.s4 1983009808
      %v7749 = vunpack.c.0.s8 %v7748
      %v7750 = vlaneseq
      %v7751 = vshrl.u32 %v7750, 7
      %v7752 = vsub.s32 %v7749, %v7751
      %v7753 = vrot.slane %v7739, %v7752
      %v7754 = vcombine.low %v7746, %v7753
      %v7757 = vadd.f32 %v7685, %v7737
      %v7758 = vadd.f32 %v7686, %v7754
      %v7759 = vmax.f32 %v7757, 0.0
      %v7760 = vmax.f32 %v7758, 0.0
      %v7763 = vcombine.high %v7759, %v7759
      %v7765 = vunpack.c.l.s4 1983009808
      %v7766 = vunpack.c.0.s8 %v7765
      %v7767 = vlaneseq
      %v7768 = vshrl.u32 %v7767, 7
      %v7769 = vsub.s32 %v7766, %v7768
      %v7770 = vrot.slane %v7759, %v7769
      %v7772 = vunpack.c.l.s4 1983009808
      %v7773 = vunpack.c.0.s8 %v7772
      %v7774 = vlaneseq
      %v7775 = vshrl.u32 %v7774, 7
      %v7776 = vsub.s32 %v7773, %v7775
      %v7777 = vrot.slane %v7763, %v7776
      %v7778 = vcombine.high %v7770, %v7770
      %v7779 = vcombine.high %v7777, %v7777
      %v7780 = vcombine.high %v7760, %v7760
      %v7782 = vunpack.c.l.s4 1983009808
      %v7783 = vunpack.c.0.s8 %v7782
      %v7784 = vlaneseq
      %v7785 = vshrl.u32 %v7784, 7
      %v7786 = vsub.s32 %v7783, %v7785
      %v7787 = vrot.slane %v7760, %v7786
      %v7789 = vunpack.c.l.s4 1983009808
      %v7790 = vunpack.c.0.s8 %v7789
      %v7791 = vlaneseq
      %v7792 = vshrl.u32 %v7791, 7
      %v7793 = vsub.s32 %v7790, %v7792
      %v7794 = vrot.slane %v7780, %v7793
      %v7795 = vcombine.high %v7787, %v7787
      %v7796 = vcombine.high %v7794, %v7794
      %v7805 = vpack.c.bf16 %v7770, %v7770
      %v7806 = vpack.c.bf16 %v7778, %v7778
      %v7807 = vpack.c.bf16 %v7777, %v7777
      %v7808 = vpack.c.bf16 %v7779, %v7779
      %v7809 = vpack.c.bf16 %v7787, %v7787
      %v7810 = vpack.c.bf16 %v7795, %v7795
      %v7811 = vpack.c.bf16 %v7794, %v7794
      %v7812 = vpack.c.bf16 %v7796, %v7796
      %v7821 = vcombine.low %v7805, %v7806
      %v7822 = vcombine.low %v7807, %v7808
      %v7823 = vcombine.low %v7809, %v7810
      %v7824 = vcombine.low %v7811, %v7812
      %v7826 = vunpack.c.l.s4 1966171168
      %v7827 = vunpack.c.0.s8 %v7826
      %v7828 = vlaneseq
      %v7829 = vshrl.u32 %v7828, 7
      %v7830 = vsub.s32 %v7827, %v7829
      %v7831 = vrot.slane %v7821, %v7830
      %v7833 = vunpack.c.l.s4 1966171168
      %v7834 = vunpack.c.0.s8 %v7833
      %v7835 = vlaneseq
      %v7836 = vshrl.u32 %v7835, 7
      %v7837 = vsub.s32 %v7834, %v7836
      %v7838 = vrot.slane %v7822, %v7837
      %v7840 = vunpack.c.l.s4 1966171168
      %v7841 = vunpack.c.0.s8 %v7840
      %v7842 = vlaneseq
      %v7843 = vshrl.u32 %v7842, 7
      %v7844 = vsub.s32 %v7841, %v7843
      %v7845 = vrot.slane %v7823, %v7844
      %v7847 = vunpack.c.l.s4 1966171168
      %v7848 = vunpack.c.0.s8 %v7847
      %v7849 = vlaneseq
      %v7850 = vshrl.u32 %v7849, 7
      %v7851 = vsub.s32 %v7848, %v7850
      %v7852 = vrot.slane %v7824, %v7851
      %v7853 = vcombine.low %v7831, %v7838
      %v7854 = vcombine.low %v7845, %v7852
      %v7856 = vunpack.c.l.s4 1966171168
      %v7857 = vunpack.c.0.s8 %v7856
      %v7858 = vlaneseq
      %v7859 = vshrl.u32 %v7858, 7
      %v7860 = vsub.s32 %v7857, %v7859
      %v7861 = vrot.slane %v7853, %v7860
      %v7863 = vunpack.c.l.s4 1966171168
      %v7864 = vunpack.c.0.s8 %v7863
      %v7865 = vlaneseq
      %v7866 = vshrl.u32 %v7865, 7
      %v7867 = vsub.s32 %v7864, %v7866
      %v7868 = vrot.slane %v7854, %v7867
      %v7869 = vcombine.low %v7861, %v7868
      %7871 = vst [vmem:[#allocation9] sm:$0xff] %v7869
    $region33: #{tpu_custom_call.1} parent=1 // pred_fallthru
      _
    // Predicated region
    $region34: #{tpu_custom_call.1} parent=1 // pred_check
      _
    $region35: #{tpu_custom_call.1} parent=1 // pred_check_branch
      %7873 = sbr.rel (0) target = $region37
    $region36: #{tpu_custom_call.1} parent=1 // pred_region
      %s7875 = ssub.s32 128, 128
      %7876 = vsyncadd [#allocation5], %s7875
      %s7878 = sshll.u32 [#allocation9], 4
      %s7879 = int_to_ptr.vmem [resolvable:$true] %s7878
      %7881 = dma.vmem_to_hbm [thread:$0]  %s7879, 128, %s3, [#allocation5]
    $region37: #{tpu_custom_call.1} parent=1 // pred_fallthru
      _
    // Predicated region
    $region38: #{tpu_custom_call.1} parent=1 // pred_check
      _
    $region39: #{tpu_custom_call.1} parent=1 // pred_check_branch
      %7883 = sbr.rel (0) target = $region41
    $region40: #{tpu_custom_call.1} parent=1 // pred_region
      %7884 = dma.done [#allocation5], 128
    $region41: #{tpu_custom_call.1} parent=1 // pred_fallthru
      _
    %7885 = vsyncpa [#allocation4], 1
    %7886 = vsyncpa [#allocation7], 1
    %7887 = vsyncpa [#allocation5], 1

</llo_original>
